<compile_context>
chip_gen: v7x
topology: tpu7x:2x2x1
jax: 0.10.0
libtpu: 0.0.40
codegen_flags: <defaults>
</compile_context>

<pallas_src>
import jax
import jax.numpy as jnp
from jax.experimental import pallas as pl
from jax.experimental.pallas import tpu as pltpu

# ---- synthetic "pm" config (small shapes) ----------------------------------
NTYPES = 1          # pm.ntypes
MAX_NEIGH = 8       # pm.maxNeighborNum
M2 = 4              # pm.dp_M2
BATCH = 2           # pm.batch_size
NATOMS = 8          # atoms of the single type
RI_LAST = 4         # (S_Rij, dx, dy, dz)
EMBED_SIZES = (16, 32)   # net_cfg['embeding_net']['network_size']
FIT_SIZES = (32, 32)     # fitting net hidden sizes (final layer -> 1)
E_SHIFT = -3.37          # stat[2][0]: per-type atomic energy shift


def dp_kernel(s_ref, ri_ref,
              we1_ref, be1_ref, we2_ref, be2_ref,
              wf1_ref, bf1_ref, wf2_ref, bf2_ref, wf3_ref, bf3_ref,
              ei_ref, etot_ref):
    A, NN, _ = ri_ref.shape          # (B*N, NN, 4)
    B, N = ei_ref.shape

    # ---- embedding net on S_Rij --------------------------------------------
    # TODO(synk): original EmbedingNet/FittingNet internals (ResNet skips,
    # resnet_dt) are not in the prompt; a plain tanh MLP is used here.
    s = s_ref[...]                                         # [B*N*NN, 1]
    # layer 1: K=1 matmul replaced by VPU broadcast outer product.
    h = jnp.tanh(s * we1_ref[...] + be1_ref[...])          # [R, E1]
    # layer 2: single lane-dense MXU GEMM over all rows.
    g = jnp.tanh(jnp.dot(h, we2_ref[...],
                         preferred_element_type=jnp.float32)
                 + be2_ref[...])                           # [R, E2]
    E2 = g.shape[-1]
    g3 = g.reshape(A, NN, E2)                              # [A, NN, E2]

    # ---- xyz_scater_a = Ri^T @ G per atom (VPU broadcast-mul + neighbor sum)
    ri = ri_ref[...]                                       # [A, NN, 4]
    xa = jnp.sum(ri[:, :, :, None] * g3[:, :, None, :], axis=1)   # [A, 4, E2]
    xb = xa[:, :, :M2]                                     # [A, 4, M2]

    # ---- DR = scater_a^T @ scater_b, computed transposed ([A, M2, E2]) so E2
    #      stays in lanes; the m-major flatten order and the 1/(NN*ntypes)^2
    #      scale are folded into wf1 in the wrapper.
    drt = jnp.sum(xb[:, :, :, None] * xa[:, :, None, :], axis=1)  # [A, M2, E2]
    dr = drt.reshape(A, M2 * E2)                           # [A, M2*E2]

    # ---- fitting net -> Ei ---------------------------------------------------
    f = jnp.tanh(jnp.dot(dr, wf1_ref[...],
                         preferred_element_type=jnp.float32) + bf1_ref[...])
    f = jnp.tanh(jnp.dot(f, wf2_ref[...],
                         preferred_element_type=jnp.float32) + bf2_ref[...])
    f3 = f.reshape(B, N, -1)                               # [B, N, F2]
    # final width-1 layer as a lane reduction instead of an N=1 MXU matmul.
    ei = jnp.sum(f3 * wf3_ref[...], axis=-1) + bf3_ref[...]        # [B, N]

    ei_ref[...] = ei
    # Etot accumulated in-kernel (no separate XLA reduction op).
    etot_ref[...] = jnp.sum(ei, axis=-1, keepdims=True)            # [B, 1]


def dp_forward(ri, params):
    B, N, NN, D = ri.shape
    A = B * N
    we1, be1, we2, be2, wf1, bf1, wf2, bf2, wf3, bf3 = params

    E2 = we2.shape[1]
    F1 = wf1.shape[1]
    # One-time wrapper-side weight folds (hoisted out of the kernel):
    #  * DR scale c^2 where c = 1/(maxNeighborNum*ntypes)
    #  * permute wf1 rows from (e*M2 + m) to (m*E2 + e) to match the kernel's
    #    transposed-DR flatten order.
    c = 1.0 / (MAX_NEIGH * NTYPES)
    wf1_k = (c * c) * wf1.reshape(E2, M2, F1).transpose(1, 0, 2).reshape(M2 * E2, F1)
    wf3_k = wf3.reshape(1, 1, -1)                          # row form for lane reduce

    # Lane/sublane-friendly input slabs (cheap views done once in the wrapper).
    s_col = ri[..., 0].reshape(A * NN, 1)                  # S_Rij column
    ri3 = ri.reshape(A, NN, D)                             # flattened atoms

    vmem = pl.BlockSpec(memory_space=pltpu.MemorySpace.VMEM)
    kernel_args = (s_col, ri3, we1, be1, we2, be2,
                   wf1_k, bf1, wf2, bf2, wf3_k, bf3)

    ei_bn, etot = pl.pallas_call(
        dp_kernel,
        out_shape=(jax.ShapeDtypeStruct((B, N), jnp.float32),
                   jax.ShapeDtypeStruct((B, 1), jnp.float32)),
        in_specs=[vmem] * len(kernel_args),
        out_specs=(vmem, vmem),
    )(*kernel_args)

    ei = ei_bn[:, :, None]                                 # [B, N, 1]
    # is_calc_f == False path of the PyTorch module: forces are zeros.
    # TODO(synk): autograd dE/dRi + CalculateForce custom op have no clean
    # Pallas equivalent here; only the is_calc_f=False path is implemented.
    force = jnp.zeros((B, N, 3), jnp.float32)
    return etot, ei, force


def dp_reference(ri, params):
    """Pure-JAX reference for correctness checking (original formulation)."""
    we1, be1, we2, be2, wf1, bf1, wf2, bf2, wf3, bf3 = params
    s = ri[..., 0:1]
    h = jnp.tanh(s @ we1 + be1)
    g = jnp.tanh(h @ we2 + be2)
    tmp_b = jnp.swapaxes(ri, -2, -1) @ g
    xa = tmp_b * (4.0 / (MAX_NEIGH * NTYPES * 4.0))
    xb = xa[..., :M2]
    dr = jnp.swapaxes(xa, -2, -1) @ xb
    dr = dr.reshape(ri.shape[0], ri.shape[1], -1)
    f = jnp.tanh(dr @ wf1 + bf1)
    f = jnp.tanh(f @ wf2 + bf2)
    ei = f @ wf3 + bf3
    return jnp.sum(ei, axis=1), ei


def init_params(key):
    ks = jax.random.split(key, 10)

    def w(k, shape):
        return (0.1 * jax.random.normal(k, shape)).astype(jnp.float32)

    we1 = w(ks[0], (1, EMBED_SIZES[0]))
    be1 = w(ks[1], (1, EMBED_SIZES[0]))
    we2 = w(ks[2], (EMBED_SIZES[0], EMBED_SIZES[1]))
    be2 = w(ks[3], (1, EMBED_SIZES[1]))
    fit_in = M2 * EMBED_SIZES[1]
    wf1 = w(ks[4], (fit_in, FIT_SIZES[0]))
    bf1 = w(ks[5], (1, FIT_SIZES[0]))
    wf2 = w(ks[6], (FIT_SIZES[0], FIT_SIZES[1]))
    bf2 = w(ks[7], (1, FIT_SIZES[1]))
    wf3 = w(ks[8], (FIT_SIZES[1], 1))
    bf3 = w(ks[9], (1, 1)) + jnp.float32(E_SHIFT)   # fold energy shift into final bias
    return (we1, be1, we2, be2, wf1, bf1, wf2, bf2, wf3, bf3)


if __name__ == "__main__":
    key = jax.random.PRNGKey(0)
    k_ri, k_p = jax.random.split(key)

    # Ri: [B, Natoms, ntypes*maxNeighborNum, 4]
    ri = jax.random.normal(
        k_ri, (BATCH, NATOMS, NTYPES * MAX_NEIGH, RI_LAST), dtype=jnp.float32)
    params = init_params(k_p)

    # Unused-in-this-path inputs from the PyTorch signature (kept for shape parity).
    natoms_img = jnp.array([[NATOMS, NATOMS]] * BATCH, dtype=jnp.int32)
    list_neigh = jnp.zeros((BATCH, NATOMS, NTYPES * MAX_NEIGH), dtype=jnp.int32)

    fwd = jax.jit(dp_forward)
    etot, ei, force = fwd(ri, params)
    jax.block_until_ready((etot, ei, force))

    etot_ref, ei_ref = dp_reference(ri, params)
    assert jnp.allclose(ei, ei_ref, atol=1e-4, rtol=1e-4), "Ei mismatch vs reference"
    assert jnp.allclose(etot, etot_ref, atol=1e-4, rtol=1e-4), "Etot mismatch vs reference"
    assert etot.shape == (BATCH, 1)
    assert ei.shape == (BATCH, NATOMS, 1)
    assert force.shape == (BATCH, NATOMS, 3)

    print("KERNEL_OK")
</pallas_src>

<mosaic_0001>
module attributes {stable_mosaic.version = 11 : i64} {
  func.func @dp_kernel(%arg0: memref<128x1xf32, #tpu.memory_space<vmem>>, %arg1: memref<16x8x4xf32, #tpu.memory_space<vmem>>, %arg2: memref<1x16xf32, #tpu.memory_space<vmem>>, %arg3: memref<1x16xf32, #tpu.memory_space<vmem>>, %arg4: memref<16x32xf32, #tpu.memory_space<vmem>>, %arg5: memref<1x32xf32, #tpu.memory_space<vmem>>, %arg6: memref<128x32xf32, #tpu.memory_space<vmem>>, %arg7: memref<1x32xf32, #tpu.memory_space<vmem>>, %arg8: memref<32x32xf32, #tpu.memory_space<vmem>>, %arg9: memref<1x32xf32, #tpu.memory_space<vmem>>, %arg10: memref<1x1x32xf32, #tpu.memory_space<vmem>>, %arg11: memref<1x1xf32, #tpu.memory_space<vmem>>, %arg12: memref<2x8xf32, #tpu.memory_space<vmem>>, %arg13: memref<2x1xf32, #tpu.memory_space<vmem>>) attributes {dimension_semantics = [], scalar_prefetch = 0 : i64, scratch_operands = 0 : i64, tpu.core_type = #tpu.core_type<tc>} {
    %c0 = arith.constant 0 : index
    %c0_0 = arith.constant 0 : index
    %0 = vector.load %arg0[%c0, %c0_0] : memref<128x1xf32, #tpu.memory_space<vmem>>, vector<128x1xf32>
    %c0_1 = arith.constant 0 : index
    %c0_2 = arith.constant 0 : index
    %1 = vector.load %arg2[%c0_1, %c0_2] : memref<1x16xf32, #tpu.memory_space<vmem>>, vector<1x16xf32>
    %2 = vector.broadcast %0 : vector<128x1xf32> to vector<128x16xf32>
    %3 = vector.broadcast %1 : vector<1x16xf32> to vector<128x16xf32>
    %4 = arith.mulf %2, %3 : vector<128x16xf32>
    %c0_3 = arith.constant 0 : index
    %c0_4 = arith.constant 0 : index
    %5 = vector.load %arg3[%c0_3, %c0_4] : memref<1x16xf32, #tpu.memory_space<vmem>>, vector<1x16xf32>
    %6 = vector.broadcast %5 : vector<1x16xf32> to vector<128x16xf32>
    %7 = arith.addf %4, %6 : vector<128x16xf32>
    %8 = math.tanh %7 : vector<128x16xf32>
    %c0_5 = arith.constant 0 : index
    %c0_6 = arith.constant 0 : index
    %9 = vector.load %arg4[%c0_5, %c0_6] : memref<16x32xf32, #tpu.memory_space<vmem>>, vector<16x32xf32>
    %cst = arith.constant dense<0.000000e+00> : vector<128x32xf32>
    %10 = tpu.matmul %8, %9, %cst {dimension_numbers = #tpu.dot_dimension_numbers<[1], [0], [0], [1], [0, 0, 1, 1], [], []>} : vector<128x16xf32>, vector<16x32xf32>, vector<128x32xf32> -> vector<128x32xf32>
    %c0_7 = arith.constant 0 : index
    %c0_8 = arith.constant 0 : index
    %11 = vector.load %arg5[%c0_7, %c0_8] : memref<1x32xf32, #tpu.memory_space<vmem>>, vector<1x32xf32>
    %12 = vector.broadcast %11 : vector<1x32xf32> to vector<128x32xf32>
    %13 = arith.addf %10, %12 : vector<128x32xf32>
    %14 = math.tanh %13 : vector<128x32xf32>
    %15 = vector.shape_cast %14 : vector<128x32xf32> to vector<16x8x32xf32>
    %c0_9 = arith.constant 0 : index
    %c0_10 = arith.constant 0 : index
    %c0_11 = arith.constant 0 : index
    %16 = vector.load %arg1[%c0_9, %c0_10, %c0_11] : memref<16x8x4xf32, #tpu.memory_space<vmem>>, vector<16x8x4xf32>
    %17 = vector.shape_cast %16 : vector<16x8x4xf32> to vector<16x8x4x1xf32>
    %18 = vector.shape_cast %15 : vector<16x8x32xf32> to vector<16x8x1x32xf32>
    %19 = vector.broadcast %17 : vector<16x8x4x1xf32> to vector<16x8x4x32xf32>
    %20 = vector.broadcast %18 : vector<16x8x1x32xf32> to vector<16x8x4x32xf32>
    %21 = arith.mulf %19, %20 : vector<16x8x4x32xf32>
    %cst_12 = arith.constant dense<0.000000e+00> : vector<16x4x32xf32>
    %22 = vector.multi_reduction <add>, %21, %cst_12 [1] : vector<16x8x4x32xf32> to vector<16x4x32xf32>
    %23 = vector.extract_strided_slice %22 {offsets = [0, 0, 0], sizes = [16, 4, 4], strides = [1, 1, 1]} : vector<16x4x32xf32> to vector<16x4x4xf32>
    %24 = vector.shape_cast %23 : vector<16x4x4xf32> to vector<16x4x4x1xf32>
    %25 = vector.shape_cast %22 : vector<16x4x32xf32> to vector<16x4x1x32xf32>
    %26 = vector.broadcast %24 : vector<16x4x4x1xf32> to vector<16x4x4x32xf32>
    %27 = vector.broadcast %25 : vector<16x4x1x32xf32> to vector<16x4x4x32xf32>
    %28 = arith.mulf %26, %27 : vector<16x4x4x32xf32>
    %cst_13 = arith.constant dense<0.000000e+00> : vector<16x4x32xf32>
    %29 = vector.multi_reduction <add>, %28, %cst_13 [1] : vector<16x4x4x32xf32> to vector<16x4x32xf32>
    %30 = vector.shape_cast %29 : vector<16x4x32xf32> to vector<16x128xf32>
    %c0_14 = arith.constant 0 : index
    %c0_15 = arith.constant 0 : index
    %31 = vector.load %arg6[%c0_14, %c0_15] : memref<128x32xf32, #tpu.memory_space<vmem>>, vector<128x32xf32>
    %cst_16 = arith.constant dense<0.000000e+00> : vector<16x32xf32>
    %32 = tpu.matmul %30, %31, %cst_16 {dimension_numbers = #tpu.dot_dimension_numbers<[1], [0], [0], [1], [0, 0, 1, 1], [], []>} : vector<16x128xf32>, vector<128x32xf32>, vector<16x32xf32> -> vector<16x32xf32>
    %c0_17 = arith.constant 0 : index
    %c0_18 = arith.constant 0 : index
    %33 = vector.load %arg7[%c0_17, %c0_18] : memref<1x32xf32, #tpu.memory_space<vmem>>, vector<1x32xf32>
    %34 = vector.broadcast %33 : vector<1x32xf32> to vector<16x32xf32>
    %35 = arith.addf %32, %34 : vector<16x32xf32>
    %36 = math.tanh %35 : vector<16x32xf32>
    %c0_19 = arith.constant 0 : index
    %c0_20 = arith.constant 0 : index
    %37 = vector.load %arg8[%c0_19, %c0_20] : memref<32x32xf32, #tpu.memory_space<vmem>>, vector<32x32xf32>
    %cst_21 = arith.constant dense<0.000000e+00> : vector<16x32xf32>
    %38 = tpu.matmul %36, %37, %cst_21 {dimension_numbers = #tpu.dot_dimension_numbers<[1], [0], [0], [1], [0, 0, 1, 1], [], []>} : vector<16x32xf32>, vector<32x32xf32>, vector<16x32xf32> -> vector<16x32xf32>
    %c0_22 = arith.constant 0 : index
    %c0_23 = arith.constant 0 : index
    %39 = vector.load %arg9[%c0_22, %c0_23] : memref<1x32xf32, #tpu.memory_space<vmem>>, vector<1x32xf32>
    %40 = vector.broadcast %39 : vector<1x32xf32> to vector<16x32xf32>
    %41 = arith.addf %38, %40 : vector<16x32xf32>
    %42 = math.tanh %41 : vector<16x32xf32>
    %43 = vector.shape_cast %42 : vector<16x32xf32> to vector<2x8x32xf32>
    %c0_24 = arith.constant 0 : index
    %c0_25 = arith.constant 0 : index
    %c0_26 = arith.constant 0 : index
    %44 = vector.load %arg10[%c0_24, %c0_25, %c0_26] : memref<1x1x32xf32, #tpu.memory_space<vmem>>, vector<1x1x32xf32>
    %45 = vector.broadcast %44 : vector<1x1x32xf32> to vector<2x8x32xf32>
    %46 = arith.mulf %43, %45 : vector<2x8x32xf32>
    %cst_27 = arith.constant dense<0.000000e+00> : vector<2x8xf32>
    %47 = vector.multi_reduction <add>, %46, %cst_27 [2] : vector<2x8x32xf32> to vector<2x8xf32>
    %c0_28 = arith.constant 0 : index
    %c0_29 = arith.constant 0 : index
    %48 = vector.load %arg11[%c0_28, %c0_29] : memref<1x1xf32, #tpu.memory_space<vmem>>, vector<1x1xf32>
    %49 = vector.broadcast %48 : vector<1x1xf32> to vector<2x8xf32>
    %50 = arith.addf %47, %49 : vector<2x8xf32>
    %c0_30 = arith.constant 0 : index
    %c0_31 = arith.constant 0 : index
    %51 = vector.load %arg12[%c0_30, %c0_31] : memref<2x8xf32, #tpu.memory_space<vmem>>, vector<2x8xf32>
    tpu.vector_store %arg12[%c0_30, %c0_31], %50 {strides = array<i32>} : memref<2x8xf32, #tpu.memory_space<vmem>>, vector<2x8xf32>,
    %cst_32 = arith.constant dense<0.000000e+00> : vector<2xf32>
    %52 = vector.multi_reduction <add>, %50, %cst_32 [1] : vector<2x8xf32> to vector<2xf32>
    %53 = vector.shape_cast %52 : vector<2xf32> to vector<2x1xf32>
    %c0_33 = arith.constant 0 : index
    %c0_34 = arith.constant 0 : index
    %54 = vector.load %arg13[%c0_33, %c0_34] : memref<2x1xf32, #tpu.memory_space<vmem>>, vector<2x1xf32>
    tpu.vector_store %arg13[%c0_33, %c0_34], %53 {strides = array<i32>} : memref<2x1xf32, #tpu.memory_space<vmem>>, vector<2x1xf32>,
    return
  }
}

</mosaic_0001>

<llo_original>
// kernel: squeeze.0
$region0: #{squeeze.0}
  %s0 = inlined_call_operand.vmem [shape: f32[2,8,8], index: 0, kind: input, shape index: {}]
  %s1 = inlined_call_operand.vmem [shape: f32[128,1], index: 1, kind: output, shape index: {}]
  %v2 = vld [vmem:[%s0] sm:$0xff]
  %vm3 = vcmask 7168
  %4 = vst.msk [vmem:[%s1] ss:$8 sm:$0xf] %vm3, %v2
  %5 = vst.msk [vmem:[%s1] ss:$8 sm:$0xf0] %vm3, %v2
  %s6 = scalar_lea.vmem %s0, 8
  %v7 = vld [vmem:[%s6] sm:$0xff]
  %vm8 = vcmask 7168
  %s9 = scalar_lea.vmem %s1, 64
  %10 = vst.msk [vmem:[%s9] ss:$8 sm:$0xf] %vm8, %v7
  %s11 = scalar_lea.vmem %s1, 64
  %12 = vst.msk [vmem:[%s11] ss:$8 sm:$0xf0] %vm8, %v7
  %v13 = vld [vmem:[%s0] sm:$0xff]
  %14 = vrot.lane.b32.xlu0 %v13, 127
  %v15 = vpop.permute.xlu0 %14
  %vm16 = vcmask 7168
  %s17 = scalar_lea.vmem %s1, 1
  %18 = vst.msk [vmem:[%s17] ss:$8 sm:$0xf] %vm16, %v15
  %s19 = scalar_lea.vmem %s1, 1
  %20 = vst.msk [vmem:[%s19] ss:$8 sm:$0xf0] %vm16, %v15
  %s21 = scalar_lea.vmem %s0, 8
  %v22 = vld [vmem:[%s21] sm:$0xff]
  %23 = vrot.lane.b32.xlu0 %v22, 127
  %v24 = vpop.permute.xlu0 %23
  %vm25 = vcmask 7168
  %s26 = scalar_lea.vmem %s1, 65
  %27 = vst.msk [vmem:[%s26] ss:$8 sm:$0xf] %vm25, %v24
  %s28 = scalar_lea.vmem %s1, 65
  %29 = vst.msk [vmem:[%s28] ss:$8 sm:$0xf0] %vm25, %v24
  %v30 = vld [vmem:[%s0] sm:$0xff]
  %31 = vrot.lane.b32.xlu0 %v30, 126
  %v32 = vpop.permute.xlu0 %31
  %vm33 = vcmask 7168
  %s34 = scalar_lea.vmem %s1, 2
  %35 = vst.msk [vmem:[%s34] ss:$8 sm:$0xf] %vm33, %v32
  %s36 = scalar_lea.vmem %s1, 2
  %37 = vst.msk [vmem:[%s36] ss:$8 sm:$0xf0] %vm33, %v32
  %s38 = scalar_lea.vmem %s0, 8
  %v39 = vld [vmem:[%s38] sm:$0xff]
  %40 = vrot.lane.b32.xlu0 %v39, 126
  %v41 = vpop.permute.xlu0 %40
  %vm42 = vcmask 7168
  %s43 = scalar_lea.vmem %s1, 66
  %44 = vst.msk [vmem:[%s43] ss:$8 sm:$0xf] %vm42, %v41
  %s45 = scalar_lea.vmem %s1, 66
  %46 = vst.msk [vmem:[%s45] ss:$8 sm:$0xf0] %vm42, %v41
  %v47 = vld [vmem:[%s0] sm:$0xff]
  %48 = vrot.lane.b32.xlu0 %v47, 125
  %v49 = vpop.permute.xlu0 %48
  %vm50 = vcmask 7168
  %s51 = scalar_lea.vmem %s1, 3
  %52 = vst.msk [vmem:[%s51] ss:$8 sm:$0xf] %vm50, %v49
  %s53 = scalar_lea.vmem %s1, 3
  %54 = vst.msk [vmem:[%s53] ss:$8 sm:$0xf0] %vm50, %v49
  %s55 = scalar_lea.vmem %s0, 8
  %v56 = vld [vmem:[%s55] sm:$0xff]
  %57 = vrot.lane.b32.xlu0 %v56, 125
  %v58 = vpop.permute.xlu0 %57
  %vm59 = vcmask 7168
  %s60 = scalar_lea.vmem %s1, 67
  %61 = vst.msk [vmem:[%s60] ss:$8 sm:$0xf] %vm59, %v58
  %s62 = scalar_lea.vmem %s1, 67
  %63 = vst.msk [vmem:[%s62] ss:$8 sm:$0xf0] %vm59, %v58
  %v64 = vld [vmem:[%s0] sm:$0xff]
  %65 = vrot.lane.b32.xlu0 %v64, 124
  %v66 = vpop.permute.xlu0 %65
  %vm67 = vcmask 7168
  %s68 = scalar_lea.vmem %s1, 4
  %69 = vst.msk [vmem:[%s68] ss:$8 sm:$0xf] %vm67, %v66
  %s70 = scalar_lea.vmem %s1, 4
  %71 = vst.msk [vmem:[%s70] ss:$8 sm:$0xf0] %vm67, %v66
  %s72 = scalar_lea.vmem %s0, 8
  %v73 = vld [vmem:[%s72] sm:$0xff]
  %74 = vrot.lane.b32.xlu0 %v73, 124
  %v75 = vpop.permute.xlu0 %74
  %vm76 = vcmask 7168
  %s77 = scalar_lea.vmem %s1, 68
  %78 = vst.msk [vmem:[%s77] ss:$8 sm:$0xf] %vm76, %v75
  %s79 = scalar_lea.vmem %s1, 68
  %80 = vst.msk [vmem:[%s79] ss:$8 sm:$0xf0] %vm76, %v75
  %v81 = vld [vmem:[%s0] sm:$0xff]
  %82 = vrot.lane.b32.xlu0 %v81, 123
  %v83 = vpop.permute.xlu0 %82
  %vm84 = vcmask 7168
  %s85 = scalar_lea.vmem %s1, 5
  %86 = vst.msk [vmem:[%s85] ss:$8 sm:$0xf] %vm84, %v83
  %s87 = scalar_lea.vmem %s1, 5
  %88 = vst.msk [vmem:[%s87] ss:$8 sm:$0xf0] %vm84, %v83
  %s89 = scalar_lea.vmem %s0, 8
  %v90 = vld [vmem:[%s89] sm:$0xff]
  %91 = vrot.lane.b32.xlu0 %v90, 123
  %v92 = vpop.permute.xlu0 %91
  %vm93 = vcmask 7168
  %s94 = scalar_lea.vmem %s1, 69
  %95 = vst.msk [vmem:[%s94] ss:$8 sm:$0xf] %vm93, %v92
  %s96 = scalar_lea.vmem %s1, 69
  %97 = vst.msk [vmem:[%s96] ss:$8 sm:$0xf0] %vm93, %v92
  %v98 = vld [vmem:[%s0] sm:$0xff]
  %99 = vrot.lane.b32.xlu0 %v98, 122
  %v100 = vpop.permute.xlu0 %99
  %vm101 = vcmask 7168
  %s102 = scalar_lea.vmem %s1, 6
  %103 = vst.msk [vmem:[%s102] ss:$8 sm:$0xf] %vm101, %v100
  %s104 = scalar_lea.vmem %s1, 6
  %105 = vst.msk [vmem:[%s104] ss:$8 sm:$0xf0] %vm101, %v100
  %s106 = scalar_lea.vmem %s0, 8
  %v107 = vld [vmem:[%s106] sm:$0xff]
  %108 = vrot.lane.b32.xlu0 %v107, 122
  %v109 = vpop.permute.xlu0 %108
  %vm110 = vcmask 7168
  %s111 = scalar_lea.vmem %s1, 70
  %112 = vst.msk [vmem:[%s111] ss:$8 sm:$0xf] %vm110, %v109
  %s113 = scalar_lea.vmem %s1, 70
  %114 = vst.msk [vmem:[%s113] ss:$8 sm:$0xf0] %vm110, %v109
  %v115 = vld [vmem:[%s0] sm:$0xff]
  %116 = vrot.lane.b32.xlu0 %v115, 121
  %v117 = vpop.permute.xlu0 %116
  %vm118 = vcmask 7168
  %s119 = scalar_lea.vmem %s1, 7
  %120 = vst.msk [vmem:[%s119] ss:$8 sm:$0xf] %vm118, %v117
  %s121 = scalar_lea.vmem %s1, 7
  %122 = vst.msk [vmem:[%s121] ss:$8 sm:$0xf0] %vm118, %v117
  %s123 = scalar_lea.vmem %s0, 8
  %v124 = vld [vmem:[%s123] sm:$0xff]
  %125 = vrot.lane.b32.xlu0 %v124, 121
  %v126 = vpop.permute.xlu0 %125
  %vm127 = vcmask 7168
  %s128 = scalar_lea.vmem %s1, 71
  %129 = vst.msk [vmem:[%s128] ss:$8 sm:$0xf] %vm127, %v126
  %s130 = scalar_lea.vmem %s1, 71
  %131 = vst.msk [vmem:[%s130] ss:$8 sm:$0xf0] %vm127, %v126

// kernel: dp_forward.1
$region0: #{dp_forward.1}
  #allocation0 [shape = 'u32[]', space=smem, size = 0x4, offset = 0x4, fixed_abs, tag = 'smem constant byte address 0x4 - core index']
  #allocation1 [shape = 'u32[144,128]{1,0:T(1,128)}', space=vmem, size = 0x12000, scoped, tag = 'internal scratch']
  #allocation2 [shape = 'f32[1,1]{1,0:T(1,128)S(1)}', space=vmem, size = 0x200, scoped, tag = 'scoped memory for dp_forward.1']
  %s0 = inlined_call_operand.vmem [shape: f32[128,1], index: 0, kind: input, shape index: {}]
  %s1 = inlined_call_operand.vmem [shape: f32[16,8,4], index: 1, kind: input, shape index: {}]
  %s2 = inlined_call_operand.vmem [shape: f32[1,16], index: 2, kind: input, shape index: {}]
  %s3 = inlined_call_operand.vmem [shape: f32[1,16], index: 3, kind: input, shape index: {}]
  %s4 = inlined_call_operand.vmem [shape: f32[16,32], index: 4, kind: input, shape index: {}]
  %s5 = inlined_call_operand.vmem [shape: f32[1,32], index: 5, kind: input, shape index: {}]
  %s6 = inlined_call_operand.vmem [shape: f32[128,32], index: 6, kind: input, shape index: {}]
  %s7 = inlined_call_operand.vmem [shape: f32[1,32], index: 7, kind: input, shape index: {}]
  %s8 = inlined_call_operand.vmem [shape: f32[32,32], index: 8, kind: input, shape index: {}]
  %s9 = inlined_call_operand.vmem [shape: f32[1,32], index: 9, kind: input, shape index: {}]
  %s10 = inlined_call_operand.vmem [shape: f32[1,1,32], index: 10, kind: input, shape index: {}]
  %s11 = inlined_call_operand.<no memory space> [shape: f32[1,1], index: 11, kind: input, shape index: {}]
  %s12 = inlined_call_operand.hbm [shape: f32[2,8], index: 12, kind: output, shape index: {0}]
  %s13 = inlined_call_operand.vmem [shape: f32[2,1], index: 13, kind: output, shape index: {1}]
  %14 = xla_tuple %s12, %s13
  %s15 = sld [smem:[#allocation0]]
  $region66: #{dp_forward.1} parent=0
    _
  %s17 = ssub.s32 1, %s15
  %s18 = scalar_select 0, %s17, %s15
  %v19 = vstv %s11
  %20 = vst [vmem:[#allocation2] sm:$0x1] %v19
  $region1: #{dp_forward.1} parent=0
    #allocation3 [shape = 'u8[1024]{0}', space=vmem, size = 0x400, scoped, tag = 'output window, operand 0, single buffered']
    #allocation4 [shape = 's32[1]{0}', space=sflag, size = 0x4, scoped, tag = 'scoped memory for dp_forward.1']
    %21 = vsyncpa [#allocation4], 0
    // Predicated region
    $region2: #{dp_forward.1} parent=1 // pred_check
      _
    $region3: #{dp_forward.1} parent=1 // pred_check_branch
      %23 = sbr.rel (0) target = $region5
    $region4: #{dp_forward.1} parent=1 // pred_region
      _
    $region5: #{dp_forward.1} parent=1 // pred_fallthru
      _
    // Predicated region
    $region6: #{dp_forward.1} parent=1 // pred_check
      _
    $region7: #{dp_forward.1} parent=1 // pred_check_branch
      %25 = sbr.rel (0) target = $region9
    $region8: #{dp_forward.1} parent=1 // pred_region
      _
    $region9: #{dp_forward.1} parent=1 // pred_fallthru
      _
    // Predicated region
    $region10: #{dp_forward.1} parent=1 // pred_check
      _
    $region11: #{dp_forward.1} parent=1 // pred_check_branch
      %27 = sbr.rel (0) target = $region13
    $region12: #{dp_forward.1} parent=1 // pred_region
      _
    $region13: #{dp_forward.1} parent=1 // pred_fallthru
      _
    // Predicated region
    $region14: #{dp_forward.1} parent=1 // pred_check
      _
    $region15: #{dp_forward.1} parent=1 // pred_check_branch
      %29 = sbr.rel (0) target = $region17
    $region16: #{dp_forward.1} parent=1 // pred_region
      _
    $region17: #{dp_forward.1} parent=1 // pred_fallthru
      _
    // Predicated region
    $region18: #{dp_forward.1} parent=1 // pred_check
      _
    $region19: #{dp_forward.1} parent=1 // pred_check_branch
      %31 = sbr.rel (0) target = $region21
    $region20: #{dp_forward.1} parent=1 // pred_region
      _
    $region21: #{dp_forward.1} parent=1 // pred_fallthru
      _
    // Predicated region
    $region22: #{dp_forward.1} parent=1 // pred_check
      _
    $region23: #{dp_forward.1} parent=1 // pred_check_branch
      %33 = sbr.rel (0) target = $region25
    $region24: #{dp_forward.1} parent=1 // pred_region
      _
    $region25: #{dp_forward.1} parent=1 // pred_fallthru
      _
    // Predicated region
    $region26: #{dp_forward.1} parent=1 // pred_check
      _
    $region27: #{dp_forward.1} parent=1 // pred_check_branch
      %35 = sbr.rel (0) target = $region29
    $region28: #{dp_forward.1} parent=1 // pred_region
      _
    $region29: #{dp_forward.1} parent=1 // pred_fallthru
      _
    // Predicated region
    $region30: #{dp_forward.1} parent=1 // pred_check
      _
    $region31: #{dp_forward.1} parent=1 // pred_check_branch
      %37 = sbr.rel (0) target = $region33
    $region32: #{dp_forward.1} parent=1 // pred_region
      _
    $region33: #{dp_forward.1} parent=1 // pred_fallthru
      _
    // Predicated region
    $region34: #{dp_forward.1} parent=1 // pred_check
      _
    $region35: #{dp_forward.1} parent=1 // pred_check_branch
      %39 = sbr.rel (0) target = $region37
    $region36: #{dp_forward.1} parent=1 // pred_region
      _
    $region37: #{dp_forward.1} parent=1 // pred_fallthru
      _
    // Predicated region
    $region38: #{dp_forward.1} parent=1 // pred_check
      _
    $region39: #{dp_forward.1} parent=1 // pred_check_branch
      %41 = sbr.rel (0) target = $region41
    $region40: #{dp_forward.1} parent=1 // pred_region
      _
    $region41: #{dp_forward.1} parent=1 // pred_fallthru
      _
    // Predicated region
    $region42: #{dp_forward.1} parent=1 // pred_check
      _
    $region43: #{dp_forward.1} parent=1 // pred_check_branch
      %43 = sbr.rel (0) target = $region45
    $region44: #{dp_forward.1} parent=1 // pred_region
      _
    $region45: #{dp_forward.1} parent=1 // pred_fallthru
      _
    // Predicated region
    $region46: #{dp_forward.1} parent=1 // pred_check
      _
    $region47: #{dp_forward.1} parent=1 // pred_check_branch
      %45 = sbr.rel (0) target = $region49
    $region48: #{dp_forward.1} parent=1 // pred_region
      _
    $region49: #{dp_forward.1} parent=1 // pred_fallthru
      _
    %v46 = vld [vmem:[%s0] sm:$0xff]
    %v47 = vld [vmem:[%s0 + $0x8] sm:$0xff]
    %v48 = vld [vmem:[%s0 + $0x10] sm:$0xff]
    %v49 = vld [vmem:[%s0 + $0x18] sm:$0xff]
    %v50 = vld [vmem:[%s0 + $0x20] sm:$0xff]
    %v51 = vld [vmem:[%s0 + $0x28] sm:$0xff]
    %v52 = vld [vmem:[%s0 + $0x30] sm:$0xff]
    %v53 = vld [vmem:[%s0 + $0x38] sm:$0xff]
    %v54 = vld [vmem:[%s0 + $0x40] sm:$0xff]
    %v55 = vld [vmem:[%s0 + $0x48] sm:$0xff]
    %v56 = vld [vmem:[%s0 + $0x50] sm:$0xff]
    %v57 = vld [vmem:[%s0 + $0x58] sm:$0xff]
    %v58 = vld [vmem:[%s0 + $0x60] sm:$0xff]
    %v59 = vld [vmem:[%s0 + $0x68] sm:$0xff]
    %v60 = vld [vmem:[%s0 + $0x70] sm:$0xff]
    %v61 = vld [vmem:[%s0 + $0x78] sm:$0xff]
    %v62 = vld [vmem:[%s2] sm:$0x1]
    %64 = vset.pattern.permute.xlu0 0
    %65 = vperm.xlu0 %64, %v46
    %v66 = vpop.permute.xlu0 %65
    %69 = vset.pattern.permute.xlu0 0
    %70 = vperm.xlu0 %69, %v47
    %v71 = vpop.permute.xlu0 %70
    %74 = vset.pattern.permute.xlu0 0
    %75 = vperm.xlu0 %74, %v48
    %v76 = vpop.permute.xlu0 %75
    %79 = vset.pattern.permute.xlu0 0
    %80 = vperm.xlu0 %79, %v49
    %v81 = vpop.permute.xlu0 %80
    %84 = vset.pattern.permute.xlu0 0
    %85 = vperm.xlu0 %84, %v50
    %v86 = vpop.permute.xlu0 %85
    %89 = vset.pattern.permute.xlu0 0
    %90 = vperm.xlu0 %89, %v51
    %v91 = vpop.permute.xlu0 %90
    %94 = vset.pattern.permute.xlu0 0
    %95 = vperm.xlu0 %94, %v52
    %v96 = vpop.permute.xlu0 %95
    %99 = vset.pattern.permute.xlu0 0
    %100 = vperm.xlu0 %99, %v53
    %v101 = vpop.permute.xlu0 %100
    %104 = vset.pattern.permute.xlu0 0
    %105 = vperm.xlu0 %104, %v54
    %v106 = vpop.permute.xlu0 %105
    %109 = vset.pattern.permute.xlu0 0
    %110 = vperm.xlu0 %109, %v55
    %v111 = vpop.permute.xlu0 %110
    %114 = vset.pattern.permute.xlu0 0
    %115 = vperm.xlu0 %114, %v56
    %v116 = vpop.permute.xlu0 %115
    %119 = vset.pattern.permute.xlu0 0
    %120 = vperm.xlu0 %119, %v57
    %v121 = vpop.permute.xlu0 %120
    %124 = vset.pattern.permute.xlu0 0
    %125 = vperm.xlu0 %124, %v58
    %v126 = vpop.permute.xlu0 %125
    %129 = vset.pattern.permute.xlu0 0
    %130 = vperm.xlu0 %129, %v59
    %v131 = vpop.permute.xlu0 %130
    %134 = vset.pattern.permute.xlu0 0
    %135 = vperm.xlu0 %134, %v60
    %v136 = vpop.permute.xlu0 %135
    %139 = vset.pattern.permute.xlu0 0
    %140 = vperm.xlu0 %139, %v61
    %v141 = vpop.permute.xlu0 %140
    %v144 = vlaneseq
    %v145 = vshrl.u32 %v144, 7
    %v146 = vsub.s32 0, %v145
    %v147 = vrot.slane %v62, %v146
    %v149 = vmul.f32 %v66, %v147
    %v150 = vmul.f32 %v71, %v147
    %v151 = vmul.f32 %v76, %v147
    %v152 = vmul.f32 %v81, %v147
    %v153 = vmul.f32 %v86, %v147
    %v154 = vmul.f32 %v91, %v147
    %v155 = vmul.f32 %v96, %v147
    %v156 = vmul.f32 %v101, %v147
    %v157 = vmul.f32 %v106, %v147
    %v158 = vmul.f32 %v111, %v147
    %v159 = vmul.f32 %v116, %v147
    %v160 = vmul.f32 %v121, %v147
    %v161 = vmul.f32 %v126, %v147
    %v162 = vmul.f32 %v131, %v147
    %v163 = vmul.f32 %v136, %v147
    %v164 = vmul.f32 %v141, %v147
    %v165 = vld [vmem:[%s3] sm:$0x1]
    %v167 = vlaneseq
    %v168 = vshrl.u32 %v167, 7
    %v169 = vsub.s32 0, %v168
    %v170 = vrot.slane %v165, %v169
    %v172 = vadd.f32 %v149, %v170
    %v173 = vadd.f32 %v150, %v170
    %v174 = vadd.f32 %v151, %v170
    %v175 = vadd.f32 %v152, %v170
    %v176 = vadd.f32 %v153, %v170
    %v177 = vadd.f32 %v154, %v170
    %v178 = vadd.f32 %v155, %v170
    %v179 = vadd.f32 %v156, %v170
    %v180 = vadd.f32 %v157, %v170
    %v181 = vadd.f32 %v158, %v170
    %v182 = vadd.f32 %v159, %v170
    %v183 = vadd.f32 %v160, %v170
    %v184 = vadd.f32 %v161, %v170
    %v185 = vadd.f32 %v162, %v170
    %v186 = vadd.f32 %v163, %v170
    %v187 = vadd.f32 %v164, %v170
    %v188 = vtanh.pop %v172
    %v189 = vtanh.pop %v173
    %v190 = vtanh.pop %v174
    %v191 = vtanh.pop %v175
    %v192 = vtanh.pop %v176
    %v193 = vtanh.pop %v177
    %v194 = vtanh.pop %v178
    %v195 = vtanh.pop %v179
    %v196 = vtanh.pop %v180
    %v197 = vtanh.pop %v181
    %v198 = vtanh.pop %v182
    %v199 = vtanh.pop %v183
    %v200 = vtanh.pop %v184
    %v201 = vtanh.pop %v185
    %v202 = vtanh.pop %v186
    %v203 = vtanh.pop %v187
    %v204 = vld [vmem:[%s4] sm:$0xff]
    %v205 = vld [vmem:[%s4 + $0x8] sm:$0xff]
    %v206 = vld [vmem:[%s5] sm:$0x1]
    %v208 = vlaneseq
    %v209 = vshrl.u32 %v208, 7
    %v210 = vsub.s32 0, %v209
    %v211 = vrot.slane %v206, %v210
    %vm213 = vcmask 130048
    %v215 = vsel %vm213, %v188, 0
    %v218 = vsel %vm213, %v189, 0
    %v221 = vsel %vm213, %v190, 0
    %v224 = vsel %vm213, %v191, 0
    %v227 = vsel %vm213, %v192, 0
    %v230 = vsel %vm213, %v193, 0
    %v233 = vsel %vm213, %v194, 0
    %v236 = vsel %vm213, %v195, 0
    %v239 = vsel %vm213, %v196, 0
    %v242 = vsel %vm213, %v197, 0
    %v245 = vsel %vm213, %v198, 0
    %v248 = vsel %vm213, %v199, 0
    %v251 = vsel %vm213, %v200, 0
    %v254 = vsel %vm213, %v201, 0
    %v257 = vsel %vm213, %v202, 0
    %v260 = vsel %vm213, %v203, 0
    %262 = vmatprep.subr.mxu0 0.0
    %263 = vmatpush1.msra.mxu0 %v204
    %264 = vmatprep.subr.mxu0 0.0
    %265 = vmatpush1.msra.mxu0 %v205
    %266 = vmatprep.subr.mxu0 0.0
    %267 = vmatpush1.msra.mxu0 0.0
    %268 = vmatprep.subr.mxu0 0.0
    %269 = vmatpush1.msra.mxu0 0.0
    %270 = vmatprep.subr.mxu0 0.0
    %271 = vmatpush1.msra.mxu0 0.0
    %272 = vmatprep.subr.mxu0 0.0
    %273 = vmatpush1.msra.mxu0 0.0
    %274 = vmatprep.subr.mxu0 0.0
    %275 = vmatpush1.msra.mxu0 0.0
    %276 = vmatprep.subr.mxu0 0.0
    %277 = vmatpush1.msra.mxu0 0.0
    %278 = vmatprep.subr.mxu0 0.0
    %279 = vmatpush1.msra.mxu0 0.0
    %280 = vmatprep.subr.mxu0 0.0
    %281 = vmatpush1.msra.mxu0 0.0
    %282 = vmatprep.subr.mxu0 0.0
    %283 = vmatpush1.msra.mxu0 0.0
    %284 = vmatprep.subr.mxu0 0.0
    %285 = vmatpush1.msra.mxu0 0.0
    %286 = vmatprep.subr.mxu0 0.0
    %287 = vmatpush1.msra.mxu0 0.0
    %288 = vmatprep.subr.mxu0 0.0
    %289 = vmatpush1.msra.mxu0 0.0
    %290 = vmatprep.subr.mxu0 0.0
    %291 = vmatpush1.msra.mxu0 0.0
    %292 = vmatprep.subr.mxu0 0.0
    %293 = vmatpush1.msra.mxu0 0.0
    %294 = vmatprep.subr.mxu0 0.0
    %295 = vmatpush1.msra.mxu0 0.0
    %296 = vmatprep.subr.mxu0 0.0
    %297 = vmatpush1.msra.mxu0 0.0
    %298 = vmatprep.subr.mxu0 0.0
    %299 = vmatpush1.msra.mxu0 0.0
    %300 = vmatprep.subr.mxu0 0.0
    %301 = vmatpush1.msra.mxu0 0.0
    %302 = vmatprep.subr.mxu0 0.0
    %303 = vmatpush1.msra.mxu0 0.0
    %304 = vmatprep.subr.mxu0 0.0
    %305 = vmatpush1.msra.mxu0 0.0
    %306 = vmatprep.subr.mxu0 0.0
    %307 = vmatpush1.msra.mxu0 0.0
    %308 = vmatprep.subr.mxu0 0.0
    %309 = vmatpush1.msra.mxu0 0.0
    %310 = vmatprep.subr.mxu0 0.0
    %311 = vmatpush1.msra.mxu0 0.0
    %312 = vmatprep.subr.mxu0 0.0
    %313 = vmatpush1.msra.mxu0 0.0
    %314 = vmatprep.subr.mxu0 0.0
    %315 = vmatpush1.msra.mxu0 0.0
    %316 = vmatprep.subr.mxu0 0.0
    %317 = vmatpush1.msra.mxu0 0.0
    %318 = vmatprep.subr.mxu0 0.0
    %319 = vmatpush1.msra.mxu0 0.0
    %320 = vmatprep.subr.mxu0 0.0
    %321 = vmatpush1.msra.mxu0 0.0
    %322 = vmatprep.subr.mxu0 0.0
    %323 = vmatpush1.msra.mxu0 0.0
    %324 = vmatprep.subr.mxu0 0.0
    %325 = vmatpush1.msra.mxu0 0.0
    %326 = vmatprep.mubr.f32.mxu0 0.0
    %327 = vmatmul.mubr.f32.gmra.mrb[0].mxu0 %v215
    %v328 = vpop.f32.mrb[0].mxu0
    %v329 = vadd.f32 %v211, %v328
    %v330 = vpop.f32.mrb[0].mxu0
    %331 = vmatprep.mubr.f32.mxu0 0.0
    %332 = vmatmul.mubr.f32.gmra.mrb[0].mxu0 %v218
    %v333 = vpop.f32.mrb[0].mxu0
    %v334 = vadd.f32 %v211, %v333
    %v335 = vpop.f32.mrb[0].mxu0
    %336 = vmatprep.mubr.f32.mxu0 0.0
    %337 = vmatmul.mubr.f32.gmra.mrb[0].mxu0 %v221
    %v338 = vpop.f32.mrb[0].mxu0
    %v339 = vadd.f32 %v211, %v338
    %v340 = vpop.f32.mrb[0].mxu0
    %341 = vmatprep.mubr.f32.mxu0 0.0
    %342 = vmatmul.mubr.f32.gmra.mrb[0].mxu0 %v224
    %v343 = vpop.f32.mrb[0].mxu0
    %v344 = vadd.f32 %v211, %v343
    %v345 = vpop.f32.mrb[0].mxu0
    %346 = vmatprep.mubr.f32.mxu0 0.0
    %347 = vmatmul.mubr.f32.gmra.mrb[0].mxu0 %v227
    %v348 = vpop.f32.mrb[0].mxu0
    %v349 = vadd.f32 %v211, %v348
    %v350 = vpop.f32.mrb[0].mxu0
    %351 = vmatprep.mubr.f32.mxu0 0.0
    %352 = vmatmul.mubr.f32.gmra.mrb[0].mxu0 %v230
    %v353 = vpop.f32.mrb[0].mxu0
    %v354 = vadd.f32 %v211, %v353
    %v355 = vpop.f32.mrb[0].mxu0
    %356 = vmatprep.mubr.f32.mxu0 0.0
    %357 = vmatmul.mubr.f32.gmra.mrb[0].mxu0 %v233
    %v358 = vpop.f32.mrb[0].mxu0
    %v359 = vadd.f32 %v211, %v358
    %v360 = vpop.f32.mrb[0].mxu0
    %361 = vmatprep.mubr.f32.mxu0 0.0
    %362 = vmatmul.mubr.f32.gmra.mrb[0].mxu0 %v236
    %v363 = vpop.f32.mrb[0].mxu0
    %v364 = vadd.f32 %v211, %v363
    %v365 = vpop.f32.mrb[0].mxu0
    %366 = vmatprep.mubr.f32.mxu0 0.0
    %367 = vmatmul.mubr.f32.gmra.mrb[0].mxu0 %v239
    %v368 = vpop.f32.mrb[0].mxu0
    %v369 = vadd.f32 %v211, %v368
    %v370 = vpop.f32.mrb[0].mxu0
    %371 = vmatprep.mubr.f32.mxu0 0.0
    %372 = vmatmul.mubr.f32.gmra.mrb[0].mxu0 %v242
    %v373 = vpop.f32.mrb[0].mxu0
    %v374 = vadd.f32 %v211, %v373
    %v375 = vpop.f32.mrb[0].mxu0
    %376 = vmatprep.mubr.f32.mxu0 0.0
    %377 = vmatmul.mubr.f32.gmra.mrb[0].mxu0 %v245
    %v378 = vpop.f32.mrb[0].mxu0
    %v379 = vadd.f32 %v211, %v378
    %v380 = vpop.f32.mrb[0].mxu0
    %381 = vmatprep.mubr.f32.mxu0 0.0
    %382 = vmatmul.mubr.f32.gmra.mrb[0].mxu0 %v248
    %v383 = vpop.f32.mrb[0].mxu0
    %v384 = vadd.f32 %v211, %v383
    %v385 = vpop.f32.mrb[0].mxu0
    %386 = vmatprep.mubr.f32.mxu0 0.0
    %387 = vmatmul.mubr.f32.gmra.mrb[0].mxu0 %v251
    %v388 = vpop.f32.mrb[0].mxu0
    %v389 = vadd.f32 %v211, %v388
    %v390 = vpop.f32.mrb[0].mxu0
    %391 = vmatprep.mubr.f32.mxu0 0.0
    %392 = vmatmul.mubr.f32.gmra.mrb[0].mxu0 %v254
    %v393 = vpop.f32.mrb[0].mxu0
    %v394 = vadd.f32 %v211, %v393
    %v395 = vpop.f32.mrb[0].mxu0
    %396 = vmatprep.mubr.f32.mxu0 0.0
    %397 = vmatmul.mubr.f32.gmra.mrb[0].mxu0 %v257
    %v398 = vpop.f32.mrb[0].mxu0
    %v399 = vadd.f32 %v211, %v398
    %v400 = vpop.f32.mrb[0].mxu0
    %401 = vmatprep.mubr.f32.mxu0 0.0
    %402 = vmatmul.mubr.f32.gmra.mrb[0].mxu0 %v260
    %v403 = vpop.f32.mrb[0].mxu0
    %v404 = vadd.f32 %v211, %v403
    %v405 = vpop.f32.mrb[0].mxu0
    %406 = vdwg.mxu0
    %v407 = vtanh.pop %v329
    %v408 = vtanh.pop %v334
    %v409 = vtanh.pop %v339
    %v410 = vtanh.pop %v344
    %v411 = vtanh.pop %v349
    %v412 = vtanh.pop %v354
    %v413 = vtanh.pop %v359
    %v414 = vtanh.pop %v364
    %v415 = vtanh.pop %v369
    %v416 = vtanh.pop %v374
    %v417 = vtanh.pop %v379
    %v418 = vtanh.pop %v384
    %v419 = vtanh.pop %v389
    %v420 = vtanh.pop %v394
    %v421 = vtanh.pop %v399
    %v422 = vtanh.pop %v404
    %v423 = vld [vmem:[%s1] sm:$0xff]
    %v424 = vld [vmem:[%s1 + $0x8] sm:$0xff]
    %v425 = vld [vmem:[%s1 + $0x10] sm:$0xff]
    %v426 = vld [vmem:[%s1 + $0x18] sm:$0xff]
    %v427 = vld [vmem:[%s1 + $0x20] sm:$0xff]
    %v428 = vld [vmem:[%s1 + $0x28] sm:$0xff]
    %v429 = vld [vmem:[%s1 + $0x30] sm:$0xff]
    %v430 = vld [vmem:[%s1 + $0x38] sm:$0xff]
    %v431 = vld [vmem:[%s1 + $0x40] sm:$0xff]
    %v432 = vld [vmem:[%s1 + $0x48] sm:$0xff]
    %v433 = vld [vmem:[%s1 + $0x50] sm:$0xff]
    %v434 = vld [vmem:[%s1 + $0x58] sm:$0xff]
    %v435 = vld [vmem:[%s1 + $0x60] sm:$0xff]
    %v436 = vld [vmem:[%s1 + $0x68] sm:$0xff]
    %v437 = vld [vmem:[%s1 + $0x70] sm:$0xff]
    %v438 = vld [vmem:[%s1 + $0x78] sm:$0xff]
    %v439 = vlaneseq
    %v440 = vshrl.u32 %v439, 7
    %v441 = vsub.s32 0, %v440
    %v442 = vrot.slane %v423, %v441
    %444 = vbcast.lane.b32.xlu0 %v442, 256
    %v445 = vpop.permute.xlu0 %444
    %v446 = vlaneseq
    %v447 = vshrl.u32 %v446, 7
    %v448 = vsub.s32 1, %v447
    %v449 = vrot.slane %v423, %v448
    %451 = vbcast.lane.b32.xlu0 %v449, 256
    %v452 = vpop.permute.xlu0 %451
    %v453 = vlaneseq
    %v454 = vshrl.u32 %v453, 7
    %v455 = vsub.s32 2, %v454
    %v456 = vrot.slane %v423, %v455
    %458 = vbcast.lane.b32.xlu0 %v456, 256
    %v459 = vpop.permute.xlu0 %458
    %v460 = vlaneseq
    %v461 = vshrl.u32 %v460, 7
    %v462 = vsub.s32 3, %v461
    %v463 = vrot.slane %v423, %v462
    %465 = vbcast.lane.b32.xlu0 %v463, 256
    %v466 = vpop.permute.xlu0 %465
    %v467 = vlaneseq
    %v468 = vshrl.u32 %v467, 7
    %v469 = vsub.s32 4, %v468
    %v470 = vrot.slane %v423, %v469
    %472 = vbcast.lane.b32.xlu0 %v470, 256
    %v473 = vpop.permute.xlu0 %472
    %v474 = vlaneseq
    %v475 = vshrl.u32 %v474, 7
    %v476 = vsub.s32 5, %v475
    %v477 = vrot.slane %v423, %v476
    %479 = vbcast.lane.b32.xlu0 %v477, 256
    %v480 = vpop.permute.xlu0 %479
    %v481 = vlaneseq
    %v482 = vshrl.u32 %v481, 7
    %v483 = vsub.s32 6, %v482
    %v484 = vrot.slane %v423, %v483
    %486 = vbcast.lane.b32.xlu0 %v484, 256
    %v487 = vpop.permute.xlu0 %486
    %v488 = vlaneseq
    %v489 = vshrl.u32 %v488, 7
    %v490 = vsub.s32 7, %v489
    %v491 = vrot.slane %v423, %v490
    %493 = vbcast.lane.b32.xlu0 %v491, 256
    %v494 = vpop.permute.xlu0 %493
    %v495 = vlaneseq
    %v496 = vshrl.u32 %v495, 7
    %v497 = vsub.s32 0, %v496
    %v498 = vrot.slane %v424, %v497
    %500 = vbcast.lane.b32.xlu0 %v498, 256
    %v501 = vpop.permute.xlu0 %500
    %v502 = vlaneseq
    %v503 = vshrl.u32 %v502, 7
    %v504 = vsub.s32 1, %v503
    %v505 = vrot.slane %v424, %v504
    %507 = vbcast.lane.b32.xlu0 %v505, 256
    %v508 = vpop.permute.xlu0 %507
    %v509 = vlaneseq
    %v510 = vshrl.u32 %v509, 7
    %v511 = vsub.s32 2, %v510
    %v512 = vrot.slane %v424, %v511
    %514 = vbcast.lane.b32.xlu0 %v512, 256
    %v515 = vpop.permute.xlu0 %514
    %v516 = vlaneseq
    %v517 = vshrl.u32 %v516, 7
    %v518 = vsub.s32 3, %v517
    %v519 = vrot.slane %v424, %v518
    %521 = vbcast.lane.b32.xlu0 %v519, 256
    %v522 = vpop.permute.xlu0 %521
    %v523 = vlaneseq
    %v524 = vshrl.u32 %v523, 7
    %v525 = vsub.s32 4, %v524
    %v526 = vrot.slane %v424, %v525
    %528 = vbcast.lane.b32.xlu0 %v526, 256
    %v529 = vpop.permute.xlu0 %528
    %v530 = vlaneseq
    %v531 = vshrl.u32 %v530, 7
    %v532 = vsub.s32 5, %v531
    %v533 = vrot.slane %v424, %v532
    %535 = vbcast.lane.b32.xlu0 %v533, 256
    %v536 = vpop.permute.xlu0 %535
    %v537 = vlaneseq
    %v538 = vshrl.u32 %v537, 7
    %v539 = vsub.s32 6, %v538
    %v540 = vrot.slane %v424, %v539
    %542 = vbcast.lane.b32.xlu0 %v540, 256
    %v543 = vpop.permute.xlu0 %542
    %v544 = vlaneseq
    %v545 = vshrl.u32 %v544, 7
    %v546 = vsub.s32 7, %v545
    %v547 = vrot.slane %v424, %v546
    %549 = vbcast.lane.b32.xlu0 %v547, 256
    %v550 = vpop.permute.xlu0 %549
    %v551 = vlaneseq
    %v552 = vshrl.u32 %v551, 7
    %v553 = vsub.s32 0, %v552
    %v554 = vrot.slane %v425, %v553
    %556 = vbcast.lane.b32.xlu0 %v554, 256
    %v557 = vpop.permute.xlu0 %556
    %v558 = vlaneseq
    %v559 = vshrl.u32 %v558, 7
    %v560 = vsub.s32 1, %v559
    %v561 = vrot.slane %v425, %v560
    %563 = vbcast.lane.b32.xlu0 %v561, 256
    %v564 = vpop.permute.xlu0 %563
    %v565 = vlaneseq
    %v566 = vshrl.u32 %v565, 7
    %v567 = vsub.s32 2, %v566
    %v568 = vrot.slane %v425, %v567
    %570 = vbcast.lane.b32.xlu0 %v568, 256
    %v571 = vpop.permute.xlu0 %570
    %v572 = vlaneseq
    %v573 = vshrl.u32 %v572, 7
    %v574 = vsub.s32 3, %v573
    %v575 = vrot.slane %v425, %v574
    %577 = vbcast.lane.b32.xlu0 %v575, 256
    %v578 = vpop.permute.xlu0 %577
    %v579 = vlaneseq
    %v580 = vshrl.u32 %v579, 7
    %v581 = vsub.s32 4, %v580
    %v582 = vrot.slane %v425, %v581
    %584 = vbcast.lane.b32.xlu0 %v582, 256
    %v585 = vpop.permute.xlu0 %584
    %v586 = vlaneseq
    %v587 = vshrl.u32 %v586, 7
    %v588 = vsub.s32 5, %v587
    %v589 = vrot.slane %v425, %v588
    %591 = vbcast.lane.b32.xlu0 %v589, 256
    %v592 = vpop.permute.xlu0 %591
    %v593 = vlaneseq
    %v594 = vshrl.u32 %v593, 7
    %v595 = vsub.s32 6, %v594
    %v596 = vrot.slane %v425, %v595
    %598 = vbcast.lane.b32.xlu0 %v596, 256
    %v599 = vpop.permute.xlu0 %598
    %v600 = vlaneseq
    %v601 = vshrl.u32 %v600, 7
    %v602 = vsub.s32 7, %v601
    %v603 = vrot.slane %v425, %v602
    %605 = vbcast.lane.b32.xlu0 %v603, 256
    %v606 = vpop.permute.xlu0 %605
    %v607 = vlaneseq
    %v608 = vshrl.u32 %v607, 7
    %v609 = vsub.s32 0, %v608
    %v610 = vrot.slane %v426, %v609
    %612 = vbcast.lane.b32.xlu0 %v610, 256
    %v613 = vpop.permute.xlu0 %612
    %v614 = vlaneseq
    %v615 = vshrl.u32 %v614, 7
    %v616 = vsub.s32 1, %v615
    %v617 = vrot.slane %v426, %v616
    %619 = vbcast.lane.b32.xlu0 %v617, 256
    %v620 = vpop.permute.xlu0 %619
    %v621 = vlaneseq
    %v622 = vshrl.u32 %v621, 7
    %v623 = vsub.s32 2, %v622
    %v624 = vrot.slane %v426, %v623
    %626 = vbcast.lane.b32.xlu0 %v624, 256
    %v627 = vpop.permute.xlu0 %626
    %v628 = vlaneseq
    %v629 = vshrl.u32 %v628, 7
    %v630 = vsub.s32 3, %v629
    %v631 = vrot.slane %v426, %v630
    %633 = vbcast.lane.b32.xlu0 %v631, 256
    %v634 = vpop.permute.xlu0 %633
    %v635 = vlaneseq
    %v636 = vshrl.u32 %v635, 7
    %v637 = vsub.s32 4, %v636
    %v638 = vrot.slane %v426, %v637
    %640 = vbcast.lane.b32.xlu0 %v638, 256
    %v641 = vpop.permute.xlu0 %640
    %v642 = vlaneseq
    %v643 = vshrl.u32 %v642, 7
    %v644 = vsub.s32 5, %v643
    %v645 = vrot.slane %v426, %v644
    %647 = vbcast.lane.b32.xlu0 %v645, 256
    %v648 = vpop.permute.xlu0 %647
    %v649 = vlaneseq
    %v650 = vshrl.u32 %v649, 7
    %v651 = vsub.s32 6, %v650
    %v652 = vrot.slane %v426, %v651
    %654 = vbcast.lane.b32.xlu0 %v652, 256
    %v655 = vpop.permute.xlu0 %654
    %v656 = vlaneseq
    %v657 = vshrl.u32 %v656, 7
    %v658 = vsub.s32 7, %v657
    %v659 = vrot.slane %v426, %v658
    %661 = vbcast.lane.b32.xlu0 %v659, 256
    %v662 = vpop.permute.xlu0 %661
    %v663 = vlaneseq
    %v664 = vshrl.u32 %v663, 7
    %v665 = vsub.s32 0, %v664
    %v666 = vrot.slane %v427, %v665
    %668 = vbcast.lane.b32.xlu0 %v666, 256
    %v669 = vpop.permute.xlu0 %668
    %v670 = vlaneseq
    %v671 = vshrl.u32 %v670, 7
    %v672 = vsub.s32 1, %v671
    %v673 = vrot.slane %v427, %v672
    %675 = vbcast.lane.b32.xlu0 %v673, 256
    %v676 = vpop.permute.xlu0 %675
    %v677 = vlaneseq
    %v678 = vshrl.u32 %v677, 7
    %v679 = vsub.s32 2, %v678
    %v680 = vrot.slane %v427, %v679
    %682 = vbcast.lane.b32.xlu0 %v680, 256
    %v683 = vpop.permute.xlu0 %682
    %v684 = vlaneseq
    %v685 = vshrl.u32 %v684, 7
    %v686 = vsub.s32 3, %v685
    %v687 = vrot.slane %v427, %v686
    %689 = vbcast.lane.b32.xlu0 %v687, 256
    %v690 = vpop.permute.xlu0 %689
    %v691 = vlaneseq
    %v692 = vshrl.u32 %v691, 7
    %v693 = vsub.s32 4, %v692
    %v694 = vrot.slane %v427, %v693
    %696 = vbcast.lane.b32.xlu0 %v694, 256
    %v697 = vpop.permute.xlu0 %696
    %v698 = vlaneseq
    %v699 = vshrl.u32 %v698, 7
    %v700 = vsub.s32 5, %v699
    %v701 = vrot.slane %v427, %v700
    %703 = vbcast.lane.b32.xlu0 %v701, 256
    %v704 = vpop.permute.xlu0 %703
    %v705 = vlaneseq
    %v706 = vshrl.u32 %v705, 7
    %v707 = vsub.s32 6, %v706
    %v708 = vrot.slane %v427, %v707
    %710 = vbcast.lane.b32.xlu0 %v708, 256
    %v711 = vpop.permute.xlu0 %710
    %v712 = vlaneseq
    %v713 = vshrl.u32 %v712, 7
    %v714 = vsub.s32 7, %v713
    %v715 = vrot.slane %v427, %v714
    %717 = vbcast.lane.b32.xlu0 %v715, 256
    %v718 = vpop.permute.xlu0 %717
    %v719 = vlaneseq
    %v720 = vshrl.u32 %v719, 7
    %v721 = vsub.s32 0, %v720
    %v722 = vrot.slane %v428, %v721
    %724 = vbcast.lane.b32.xlu0 %v722, 256
    %v725 = vpop.permute.xlu0 %724
    %v726 = vlaneseq
    %v727 = vshrl.u32 %v726, 7
    %v728 = vsub.s32 1, %v727
    %v729 = vrot.slane %v428, %v728
    %731 = vbcast.lane.b32.xlu0 %v729, 256
    %v732 = vpop.permute.xlu0 %731
    %v733 = vlaneseq
    %v734 = vshrl.u32 %v733, 7
    %v735 = vsub.s32 2, %v734
    %v736 = vrot.slane %v428, %v735
    %738 = vbcast.lane.b32.xlu0 %v736, 256
    %v739 = vpop.permute.xlu0 %738
    %v740 = vlaneseq
    %v741 = vshrl.u32 %v740, 7
    %v742 = vsub.s32 3, %v741
    %v743 = vrot.slane %v428, %v742
    %745 = vbcast.lane.b32.xlu0 %v743, 256
    %v746 = vpop.permute.xlu0 %745
    %v747 = vlaneseq
    %v748 = vshrl.u32 %v747, 7
    %v749 = vsub.s32 4, %v748
    %v750 = vrot.slane %v428, %v749
    %752 = vbcast.lane.b32.xlu0 %v750, 256
    %v753 = vpop.permute.xlu0 %752
    %v754 = vlaneseq
    %v755 = vshrl.u32 %v754, 7
    %v756 = vsub.s32 5, %v755
    %v757 = vrot.slane %v428, %v756
    %759 = vbcast.lane.b32.xlu0 %v757, 256
    %v760 = vpop.permute.xlu0 %759
    %v761 = vlaneseq
    %v762 = vshrl.u32 %v761, 7
    %v763 = vsub.s32 6, %v762
    %v764 = vrot.slane %v428, %v763
    %766 = vbcast.lane.b32.xlu0 %v764, 256
    %v767 = vpop.permute.xlu0 %766
    %v768 = vlaneseq
    %v769 = vshrl.u32 %v768, 7
    %v770 = vsub.s32 7, %v769
    %v771 = vrot.slane %v428, %v770
    %773 = vbcast.lane.b32.xlu0 %v771, 256
    %v774 = vpop.permute.xlu0 %773
    %v775 = vlaneseq
    %v776 = vshrl.u32 %v775, 7
    %v777 = vsub.s32 0, %v776
    %v778 = vrot.slane %v429, %v777
    %780 = vbcast.lane.b32.xlu0 %v778, 256
    %v781 = vpop.permute.xlu0 %780
    %v782 = vlaneseq
    %v783 = vshrl.u32 %v782, 7
    %v784 = vsub.s32 1, %v783
    %v785 = vrot.slane %v429, %v784
    %787 = vbcast.lane.b32.xlu0 %v785, 256
    %v788 = vpop.permute.xlu0 %787
    %v789 = vlaneseq
    %v790 = vshrl.u32 %v789, 7
    %v791 = vsub.s32 2, %v790
    %v792 = vrot.slane %v429, %v791
    %794 = vbcast.lane.b32.xlu0 %v792, 256
    %v795 = vpop.permute.xlu0 %794
    %v796 = vlaneseq
    %v797 = vshrl.u32 %v796, 7
    %v798 = vsub.s32 3, %v797
    %v799 = vrot.slane %v429, %v798
    %801 = vbcast.lane.b32.xlu0 %v799, 256
    %v802 = vpop.permute.xlu0 %801
    %v803 = vlaneseq
    %v804 = vshrl.u32 %v803, 7
    %v805 = vsub.s32 4, %v804
    %v806 = vrot.slane %v429, %v805
    %808 = vbcast.lane.b32.xlu0 %v806, 256
    %v809 = vpop.permute.xlu0 %808
    %v810 = vlaneseq
    %v811 = vshrl.u32 %v810, 7
    %v812 = vsub.s32 5, %v811
    %v813 = vrot.slane %v429, %v812
    %815 = vbcast.lane.b32.xlu0 %v813, 256
    %v816 = vpop.permute.xlu0 %815
    %v817 = vlaneseq
    %v818 = vshrl.u32 %v817, 7
    %v819 = vsub.s32 6, %v818
    %v820 = vrot.slane %v429, %v819
    %822 = vbcast.lane.b32.xlu0 %v820, 256
    %v823 = vpop.permute.xlu0 %822
    %v824 = vlaneseq
    %v825 = vshrl.u32 %v824, 7
    %v826 = vsub.s32 7, %v825
    %v827 = vrot.slane %v429, %v826
    %829 = vbcast.lane.b32.xlu0 %v827, 256
    %v830 = vpop.permute.xlu0 %829
    %v831 = vlaneseq
    %v832 = vshrl.u32 %v831, 7
    %v833 = vsub.s32 0, %v832
    %v834 = vrot.slane %v430, %v833
    %836 = vbcast.lane.b32.xlu0 %v834, 256
    %v837 = vpop.permute.xlu0 %836
    %v838 = vlaneseq
    %v839 = vshrl.u32 %v838, 7
    %v840 = vsub.s32 1, %v839
    %v841 = vrot.slane %v430, %v840
    %843 = vbcast.lane.b32.xlu0 %v841, 256
    %v844 = vpop.permute.xlu0 %843
    %v845 = vlaneseq
    %v846 = vshrl.u32 %v845, 7
    %v847 = vsub.s32 2, %v846
    %v848 = vrot.slane %v430, %v847
    %850 = vbcast.lane.b32.xlu0 %v848, 256
    %v851 = vpop.permute.xlu0 %850
    %v852 = vlaneseq
    %v853 = vshrl.u32 %v852, 7
    %v854 = vsub.s32 3, %v853
    %v855 = vrot.slane %v430, %v854
    %857 = vbcast.lane.b32.xlu0 %v855, 256
    %v858 = vpop.permute.xlu0 %857
    %v859 = vlaneseq
    %v860 = vshrl.u32 %v859, 7
    %v861 = vsub.s32 4, %v860
    %v862 = vrot.slane %v430, %v861
    %864 = vbcast.lane.b32.xlu0 %v862, 256
    %v865 = vpop.permute.xlu0 %864
    %v866 = vlaneseq
    %v867 = vshrl.u32 %v866, 7
    %v868 = vsub.s32 5, %v867
    %v869 = vrot.slane %v430, %v868
    %871 = vbcast.lane.b32.xlu0 %v869, 256
    %v872 = vpop.permute.xlu0 %871
    %v873 = vlaneseq
    %v874 = vshrl.u32 %v873, 7
    %v875 = vsub.s32 6, %v874
    %v876 = vrot.slane %v430, %v875
    %878 = vbcast.lane.b32.xlu0 %v876, 256
    %v879 = vpop.permute.xlu0 %878
    %v880 = vlaneseq
    %v881 = vshrl.u32 %v880, 7
    %v882 = vsub.s32 7, %v881
    %v883 = vrot.slane %v430, %v882
    %885 = vbcast.lane.b32.xlu0 %v883, 256
    %v886 = vpop.permute.xlu0 %885
    %v887 = vlaneseq
    %v888 = vshrl.u32 %v887, 7
    %v889 = vsub.s32 0, %v888
    %v890 = vrot.slane %v431, %v889
    %892 = vbcast.lane.b32.xlu0 %v890, 256
    %v893 = vpop.permute.xlu0 %892
    %v894 = vlaneseq
    %v895 = vshrl.u32 %v894, 7
    %v896 = vsub.s32 1, %v895
    %v897 = vrot.slane %v431, %v896
    %899 = vbcast.lane.b32.xlu0 %v897, 256
    %v900 = vpop.permute.xlu0 %899
    %v901 = vlaneseq
    %v902 = vshrl.u32 %v901, 7
    %v903 = vsub.s32 2, %v902
    %v904 = vrot.slane %v431, %v903
    %906 = vbcast.lane.b32.xlu0 %v904, 256
    %v907 = vpop.permute.xlu0 %906
    %v908 = vlaneseq
    %v909 = vshrl.u32 %v908, 7
    %v910 = vsub.s32 3, %v909
    %v911 = vrot.slane %v431, %v910
    %913 = vbcast.lane.b32.xlu0 %v911, 256
    %v914 = vpop.permute.xlu0 %913
    %v915 = vlaneseq
    %v916 = vshrl.u32 %v915, 7
    %v917 = vsub.s32 4, %v916
    %v918 = vrot.slane %v431, %v917
    %920 = vbcast.lane.b32.xlu0 %v918, 256
    %v921 = vpop.permute.xlu0 %920
    %v922 = vlaneseq
    %v923 = vshrl.u32 %v922, 7
    %v924 = vsub.s32 5, %v923
    %v925 = vrot.slane %v431, %v924
    %927 = vbcast.lane.b32.xlu0 %v925, 256
    %v928 = vpop.permute.xlu0 %927
    %v929 = vlaneseq
    %v930 = vshrl.u32 %v929, 7
    %v931 = vsub.s32 6, %v930
    %v932 = vrot.slane %v431, %v931
    %934 = vbcast.lane.b32.xlu0 %v932, 256
    %v935 = vpop.permute.xlu0 %934
    %v936 = vlaneseq
    %v937 = vshrl.u32 %v936, 7
    %v938 = vsub.s32 7, %v937
    %v939 = vrot.slane %v431, %v938
    %941 = vbcast.lane.b32.xlu0 %v939, 256
    %v942 = vpop.permute.xlu0 %941
    %v943 = vlaneseq
    %v944 = vshrl.u32 %v943, 7
    %v945 = vsub.s32 0, %v944
    %v946 = vrot.slane %v432, %v945
    %948 = vbcast.lane.b32.xlu0 %v946, 256
    %v949 = vpop.permute.xlu0 %948
    %v950 = vlaneseq
    %v951 = vshrl.u32 %v950, 7
    %v952 = vsub.s32 1, %v951
    %v953 = vrot.slane %v432, %v952
    %955 = vbcast.lane.b32.xlu0 %v953, 256
    %v956 = vpop.permute.xlu0 %955
    %v957 = vlaneseq
    %v958 = vshrl.u32 %v957, 7
    %v959 = vsub.s32 2, %v958
    %v960 = vrot.slane %v432, %v959
    %962 = vbcast.lane.b32.xlu0 %v960, 256
    %v963 = vpop.permute.xlu0 %962
    %v964 = vlaneseq
    %v965 = vshrl.u32 %v964, 7
    %v966 = vsub.s32 3, %v965
    %v967 = vrot.slane %v432, %v966
    %969 = vbcast.lane.b32.xlu0 %v967, 256
    %v970 = vpop.permute.xlu0 %969
    %v971 = vlaneseq
    %v972 = vshrl.u32 %v971, 7
    %v973 = vsub.s32 4, %v972
    %v974 = vrot.slane %v432, %v973
    %976 = vbcast.lane.b32.xlu0 %v974, 256
    %v977 = vpop.permute.xlu0 %976
    %v978 = vlaneseq
    %v979 = vshrl.u32 %v978, 7
    %v980 = vsub.s32 5, %v979
    %v981 = vrot.slane %v432, %v980
    %983 = vbcast.lane.b32.xlu0 %v981, 256
    %v984 = vpop.permute.xlu0 %983
    %v985 = vlaneseq
    %v986 = vshrl.u32 %v985, 7
    %v987 = vsub.s32 6, %v986
    %v988 = vrot.slane %v432, %v987
    %990 = vbcast.lane.b32.xlu0 %v988, 256
    %v991 = vpop.permute.xlu0 %990
    %v992 = vlaneseq
    %v993 = vshrl.u32 %v992, 7
    %v994 = vsub.s32 7, %v993
    %v995 = vrot.slane %v432, %v994
    %997 = vbcast.lane.b32.xlu0 %v995, 256
    %v998 = vpop.permute.xlu0 %997
    %v999 = vlaneseq
    %v1000 = vshrl.u32 %v999, 7
    %v1001 = vsub.s32 0, %v1000
    %v1002 = vrot.slane %v433, %v1001
    %1004 = vbcast.lane.b32.xlu0 %v1002, 256
    %v1005 = vpop.permute.xlu0 %1004
    %v1006 = vlaneseq
    %v1007 = vshrl.u32 %v1006, 7
    %v1008 = vsub.s32 1, %v1007
    %v1009 = vrot.slane %v433, %v1008
    %1011 = vbcast.lane.b32.xlu0 %v1009, 256
    %v1012 = vpop.permute.xlu0 %1011
    %v1013 = vlaneseq
    %v1014 = vshrl.u32 %v1013, 7
    %v1015 = vsub.s32 2, %v1014
    %v1016 = vrot.slane %v433, %v1015
    %1018 = vbcast.lane.b32.xlu0 %v1016, 256
    %v1019 = vpop.permute.xlu0 %1018
    %v1020 = vlaneseq
    %v1021 = vshrl.u32 %v1020, 7
    %v1022 = vsub.s32 3, %v1021
    %v1023 = vrot.slane %v433, %v1022
    %1025 = vbcast.lane.b32.xlu0 %v1023, 256
    %v1026 = vpop.permute.xlu0 %1025
    %v1027 = vlaneseq
    %v1028 = vshrl.u32 %v1027, 7
    %v1029 = vsub.s32 4, %v1028
    %v1030 = vrot.slane %v433, %v1029
    %1032 = vbcast.lane.b32.xlu0 %v1030, 256
    %v1033 = vpop.permute.xlu0 %1032
    %v1034 = vlaneseq
    %v1035 = vshrl.u32 %v1034, 7
    %v1036 = vsub.s32 5, %v1035
    %v1037 = vrot.slane %v433, %v1036
    %1039 = vbcast.lane.b32.xlu0 %v1037, 256
    %v1040 = vpop.permute.xlu0 %1039
    %v1041 = vlaneseq
    %v1042 = vshrl.u32 %v1041, 7
    %v1043 = vsub.s32 6, %v1042
    %v1044 = vrot.slane %v433, %v1043
    %1046 = vbcast.lane.b32.xlu0 %v1044, 256
    %v1047 = vpop.permute.xlu0 %1046
    %v1048 = vlaneseq
    %v1049 = vshrl.u32 %v1048, 7
    %v1050 = vsub.s32 7, %v1049
    %v1051 = vrot.slane %v433, %v1050
    %1053 = vbcast.lane.b32.xlu0 %v1051, 256
    %v1054 = vpop.permute.xlu0 %1053
    %v1055 = vlaneseq
    %v1056 = vshrl.u32 %v1055, 7
    %v1057 = vsub.s32 0, %v1056
    %v1058 = vrot.slane %v434, %v1057
    %1060 = vbcast.lane.b32.xlu0 %v1058, 256
    %v1061 = vpop.permute.xlu0 %1060
    %v1062 = vlaneseq
    %v1063 = vshrl.u32 %v1062, 7
    %v1064 = vsub.s32 1, %v1063
    %v1065 = vrot.slane %v434, %v1064
    %1067 = vbcast.lane.b32.xlu0 %v1065, 256
    %v1068 = vpop.permute.xlu0 %1067
    %v1069 = vlaneseq
    %v1070 = vshrl.u32 %v1069, 7
    %v1071 = vsub.s32 2, %v1070
    %v1072 = vrot.slane %v434, %v1071
    %1074 = vbcast.lane.b32.xlu0 %v1072, 256
    %v1075 = vpop.permute.xlu0 %1074
    %v1076 = vlaneseq
    %v1077 = vshrl.u32 %v1076, 7
    %v1078 = vsub.s32 3, %v1077
    %v1079 = vrot.slane %v434, %v1078
    %1081 = vbcast.lane.b32.xlu0 %v1079, 256
    %v1082 = vpop.permute.xlu0 %1081
    %v1083 = vlaneseq
    %v1084 = vshrl.u32 %v1083, 7
    %v1085 = vsub.s32 4, %v1084
    %v1086 = vrot.slane %v434, %v1085
    %1088 = vbcast.lane.b32.xlu0 %v1086, 256
    %v1089 = vpop.permute.xlu0 %1088
    %v1090 = vlaneseq
    %v1091 = vshrl.u32 %v1090, 7
    %v1092 = vsub.s32 5, %v1091
    %v1093 = vrot.slane %v434, %v1092
    %1095 = vbcast.lane.b32.xlu0 %v1093, 256
    %v1096 = vpop.permute.xlu0 %1095
    %v1097 = vlaneseq
    %v1098 = vshrl.u32 %v1097, 7
    %v1099 = vsub.s32 6, %v1098
    %v1100 = vrot.slane %v434, %v1099
    %1102 = vbcast.lane.b32.xlu0 %v1100, 256
    %v1103 = vpop.permute.xlu0 %1102
    %v1104 = vlaneseq
    %v1105 = vshrl.u32 %v1104, 7
    %v1106 = vsub.s32 7, %v1105
    %v1107 = vrot.slane %v434, %v1106
    %1109 = vbcast.lane.b32.xlu0 %v1107, 256
    %v1110 = vpop.permute.xlu0 %1109
    %v1111 = vlaneseq
    %v1112 = vshrl.u32 %v1111, 7
    %v1113 = vsub.s32 0, %v1112
    %v1114 = vrot.slane %v435, %v1113
    %1116 = vbcast.lane.b32.xlu0 %v1114, 256
    %v1117 = vpop.permute.xlu0 %1116
    %v1118 = vlaneseq
    %v1119 = vshrl.u32 %v1118, 7
    %v1120 = vsub.s32 1, %v1119
    %v1121 = vrot.slane %v435, %v1120
    %1123 = vbcast.lane.b32.xlu0 %v1121, 256
    %v1124 = vpop.permute.xlu0 %1123
    %v1125 = vlaneseq
    %v1126 = vshrl.u32 %v1125, 7
    %v1127 = vsub.s32 2, %v1126
    %v1128 = vrot.slane %v435, %v1127
    %1130 = vbcast.lane.b32.xlu0 %v1128, 256
    %v1131 = vpop.permute.xlu0 %1130
    %v1132 = vlaneseq
    %v1133 = vshrl.u32 %v1132, 7
    %v1134 = vsub.s32 3, %v1133
    %v1135 = vrot.slane %v435, %v1134
    %1137 = vbcast.lane.b32.xlu0 %v1135, 256
    %v1138 = vpop.permute.xlu0 %1137
    %v1139 = vlaneseq
    %v1140 = vshrl.u32 %v1139, 7
    %v1141 = vsub.s32 4, %v1140
    %v1142 = vrot.slane %v435, %v1141
    %1144 = vbcast.lane.b32.xlu0 %v1142, 256
    %v1145 = vpop.permute.xlu0 %1144
    %v1146 = vlaneseq
    %v1147 = vshrl.u32 %v1146, 7
    %v1148 = vsub.s32 5, %v1147
    %v1149 = vrot.slane %v435, %v1148
    %1151 = vbcast.lane.b32.xlu0 %v1149, 256
    %v1152 = vpop.permute.xlu0 %1151
    %v1153 = vlaneseq
    %v1154 = vshrl.u32 %v1153, 7
    %v1155 = vsub.s32 6, %v1154
    %v1156 = vrot.slane %v435, %v1155
    %1158 = vbcast.lane.b32.xlu0 %v1156, 256
    %v1159 = vpop.permute.xlu0 %1158
    %v1160 = vlaneseq
    %v1161 = vshrl.u32 %v1160, 7
    %v1162 = vsub.s32 7, %v1161
    %v1163 = vrot.slane %v435, %v1162
    %1165 = vbcast.lane.b32.xlu0 %v1163, 256
    %v1166 = vpop.permute.xlu0 %1165
    %v1167 = vlaneseq
    %v1168 = vshrl.u32 %v1167, 7
    %v1169 = vsub.s32 0, %v1168
    %v1170 = vrot.slane %v436, %v1169
    %1172 = vbcast.lane.b32.xlu0 %v1170, 256
    %v1173 = vpop.permute.xlu0 %1172
    %v1174 = vlaneseq
    %v1175 = vshrl.u32 %v1174, 7
    %v1176 = vsub.s32 1, %v1175
    %v1177 = vrot.slane %v436, %v1176
    %1179 = vbcast.lane.b32.xlu0 %v1177, 256
    %v1180 = vpop.permute.xlu0 %1179
    %v1181 = vlaneseq
    %v1182 = vshrl.u32 %v1181, 7
    %v1183 = vsub.s32 2, %v1182
    %v1184 = vrot.slane %v436, %v1183
    %1186 = vbcast.lane.b32.xlu0 %v1184, 256
    %v1187 = vpop.permute.xlu0 %1186
    %v1188 = vlaneseq
    %v1189 = vshrl.u32 %v1188, 7
    %v1190 = vsub.s32 3, %v1189
    %v1191 = vrot.slane %v436, %v1190
    %1193 = vbcast.lane.b32.xlu0 %v1191, 256
    %v1194 = vpop.permute.xlu0 %1193
    %v1195 = vlaneseq
    %v1196 = vshrl.u32 %v1195, 7
    %v1197 = vsub.s32 4, %v1196
    %v1198 = vrot.slane %v436, %v1197
    %1200 = vbcast.lane.b32.xlu0 %v1198, 256
    %v1201 = vpop.permute.xlu0 %1200
    %v1202 = vlaneseq
    %v1203 = vshrl.u32 %v1202, 7
    %v1204 = vsub.s32 5, %v1203
    %v1205 = vrot.slane %v436, %v1204
    %1207 = vbcast.lane.b32.xlu0 %v1205, 256
    %v1208 = vpop.permute.xlu0 %1207
    %v1209 = vlaneseq
    %v1210 = vshrl.u32 %v1209, 7
    %v1211 = vsub.s32 6, %v1210
    %v1212 = vrot.slane %v436, %v1211
    %1214 = vbcast.lane.b32.xlu0 %v1212, 256
    %v1215 = vpop.permute.xlu0 %1214
    %v1216 = vlaneseq
    %v1217 = vshrl.u32 %v1216, 7
    %v1218 = vsub.s32 7, %v1217
    %v1219 = vrot.slane %v436, %v1218
    %1221 = vbcast.lane.b32.xlu0 %v1219, 256
    %v1222 = vpop.permute.xlu0 %1221
    %v1223 = vlaneseq
    %v1224 = vshrl.u32 %v1223, 7
    %v1225 = vsub.s32 0, %v1224
    %v1226 = vrot.slane %v437, %v1225
    %1228 = vbcast.lane.b32.xlu0 %v1226, 256
    %v1229 = vpop.permute.xlu0 %1228
    %v1230 = vlaneseq
    %v1231 = vshrl.u32 %v1230, 7
    %v1232 = vsub.s32 1, %v1231
    %v1233 = vrot.slane %v437, %v1232
    %1235 = vbcast.lane.b32.xlu0 %v1233, 256
    %v1236 = vpop.permute.xlu0 %1235
    %v1237 = vlaneseq
    %v1238 = vshrl.u32 %v1237, 7
    %v1239 = vsub.s32 2, %v1238
    %v1240 = vrot.slane %v437, %v1239
    %1242 = vbcast.lane.b32.xlu0 %v1240, 256
    %v1243 = vpop.permute.xlu0 %1242
    %v1244 = vlaneseq
    %v1245 = vshrl.u32 %v1244, 7
    %v1246 = vsub.s32 3, %v1245
    %v1247 = vrot.slane %v437, %v1246
    %1249 = vbcast.lane.b32.xlu0 %v1247, 256
    %v1250 = vpop.permute.xlu0 %1249
    %v1251 = vlaneseq
    %v1252 = vshrl.u32 %v1251, 7
    %v1253 = vsub.s32 4, %v1252
    %v1254 = vrot.slane %v437, %v1253
    %1256 = vbcast.lane.b32.xlu0 %v1254, 256
    %v1257 = vpop.permute.xlu0 %1256
    %v1258 = vlaneseq
    %v1259 = vshrl.u32 %v1258, 7
    %v1260 = vsub.s32 5, %v1259
    %v1261 = vrot.slane %v437, %v1260
    %1263 = vbcast.lane.b32.xlu0 %v1261, 256
    %v1264 = vpop.permute.xlu0 %1263
    %v1265 = vlaneseq
    %v1266 = vshrl.u32 %v1265, 7
    %v1267 = vsub.s32 6, %v1266
    %v1268 = vrot.slane %v437, %v1267
    %1270 = vbcast.lane.b32.xlu0 %v1268, 256
    %v1271 = vpop.permute.xlu0 %1270
    %v1272 = vlaneseq
    %v1273 = vshrl.u32 %v1272, 7
    %v1274 = vsub.s32 7, %v1273
    %v1275 = vrot.slane %v437, %v1274
    %1277 = vbcast.lane.b32.xlu0 %v1275, 256
    %v1278 = vpop.permute.xlu0 %1277
    %v1279 = vlaneseq
    %v1280 = vshrl.u32 %v1279, 7
    %v1281 = vsub.s32 0, %v1280
    %v1282 = vrot.slane %v438, %v1281
    %1284 = vbcast.lane.b32.xlu0 %v1282, 256
    %v1285 = vpop.permute.xlu0 %1284
    %v1286 = vlaneseq
    %v1287 = vshrl.u32 %v1286, 7
    %v1288 = vsub.s32 1, %v1287
    %v1289 = vrot.slane %v438, %v1288
    %1291 = vbcast.lane.b32.xlu0 %v1289, 256
    %v1292 = vpop.permute.xlu0 %1291
    %v1293 = vlaneseq
    %v1294 = vshrl.u32 %v1293, 7
    %v1295 = vsub.s32 2, %v1294
    %v1296 = vrot.slane %v438, %v1295
    %1298 = vbcast.lane.b32.xlu0 %v1296, 256
    %v1299 = vpop.permute.xlu0 %1298
    %v1300 = vlaneseq
    %v1301 = vshrl.u32 %v1300, 7
    %v1302 = vsub.s32 3, %v1301
    %v1303 = vrot.slane %v438, %v1302
    %1305 = vbcast.lane.b32.xlu0 %v1303, 256
    %v1306 = vpop.permute.xlu0 %1305
    %v1307 = vlaneseq
    %v1308 = vshrl.u32 %v1307, 7
    %v1309 = vsub.s32 4, %v1308
    %v1310 = vrot.slane %v438, %v1309
    %1312 = vbcast.lane.b32.xlu0 %v1310, 256
    %v1313 = vpop.permute.xlu0 %1312
    %v1314 = vlaneseq
    %v1315 = vshrl.u32 %v1314, 7
    %v1316 = vsub.s32 5, %v1315
    %v1317 = vrot.slane %v438, %v1316
    %1319 = vbcast.lane.b32.xlu0 %v1317, 256
    %v1320 = vpop.permute.xlu0 %1319
    %v1321 = vlaneseq
    %v1322 = vshrl.u32 %v1321, 7
    %v1323 = vsub.s32 6, %v1322
    %v1324 = vrot.slane %v438, %v1323
    %1326 = vbcast.lane.b32.xlu0 %v1324, 256
    %v1327 = vpop.permute.xlu0 %1326
    %v1328 = vlaneseq
    %v1329 = vshrl.u32 %v1328, 7
    %v1330 = vsub.s32 7, %v1329
    %v1331 = vrot.slane %v438, %v1330
    %1333 = vbcast.lane.b32.xlu0 %v1331, 256
    %v1334 = vpop.permute.xlu0 %1333
    %v1351 = vcombine.high %v407, %v407
    %v1353 = vunpack.c.l.s4 1966171168
    %v1354 = vunpack.c.0.s8 %v1353
    %v1355 = vlaneseq
    %v1356 = vshrl.u32 %v1355, 7
    %v1357 = vsub.s32 %v1354, %v1356
    %v1358 = vrot.slane %v407, %v1357
    %v1360 = vunpack.c.l.s4 1966171168
    %v1361 = vunpack.c.0.s8 %v1360
    %v1362 = vlaneseq
    %v1363 = vshrl.u32 %v1362, 7
    %v1364 = vsub.s32 %v1361, %v1363
    %v1365 = vrot.slane %v1351, %v1364
    %v1366 = vcombine.high %v1358, %v1358
    %v1367 = vcombine.high %v1365, %v1365
    %v1369 = vunpack.c.l.s4 1966171168
    %v1370 = vunpack.c.0.s8 %v1369
    %v1371 = vlaneseq
    %v1372 = vshrl.u32 %v1371, 7
    %v1373 = vsub.s32 %v1370, %v1372
    %v1374 = vrot.slane %v1358, %v1373
    %v1376 = vunpack.c.l.s4 1966171168
    %v1377 = vunpack.c.0.s8 %v1376
    %v1378 = vlaneseq
    %v1379 = vshrl.u32 %v1378, 7
    %v1380 = vsub.s32 %v1377, %v1379
    %v1381 = vrot.slane %v1365, %v1380
    %v1383 = vunpack.c.l.s4 1966171168
    %v1384 = vunpack.c.0.s8 %v1383
    %v1385 = vlaneseq
    %v1386 = vshrl.u32 %v1385, 7
    %v1387 = vsub.s32 %v1384, %v1386
    %v1388 = vrot.slane %v1366, %v1387
    %v1390 = vunpack.c.l.s4 1966171168
    %v1391 = vunpack.c.0.s8 %v1390
    %v1392 = vlaneseq
    %v1393 = vshrl.u32 %v1392, 7
    %v1394 = vsub.s32 %v1391, %v1393
    %v1395 = vrot.slane %v1367, %v1394
    %v1396 = vcombine.high %v1374, %v1374
    %v1397 = vcombine.high %v1381, %v1381
    %v1398 = vcombine.high %v1388, %v1388
    %v1399 = vcombine.high %v1395, %v1395
    %v1400 = vcombine.high %v408, %v408
    %v1402 = vunpack.c.l.s4 1966171168
    %v1403 = vunpack.c.0.s8 %v1402
    %v1404 = vlaneseq
    %v1405 = vshrl.u32 %v1404, 7
    %v1406 = vsub.s32 %v1403, %v1405
    %v1407 = vrot.slane %v408, %v1406
    %v1409 = vunpack.c.l.s4 1966171168
    %v1410 = vunpack.c.0.s8 %v1409
    %v1411 = vlaneseq
    %v1412 = vshrl.u32 %v1411, 7
    %v1413 = vsub.s32 %v1410, %v1412
    %v1414 = vrot.slane %v1400, %v1413
    %v1415 = vcombine.high %v1407, %v1407
    %v1416 = vcombine.high %v1414, %v1414
    %v1418 = vunpack.c.l.s4 1966171168
    %v1419 = vunpack.c.0.s8 %v1418
    %v1420 = vlaneseq
    %v1421 = vshrl.u32 %v1420, 7
    %v1422 = vsub.s32 %v1419, %v1421
    %v1423 = vrot.slane %v1407, %v1422
    %v1425 = vunpack.c.l.s4 1966171168
    %v1426 = vunpack.c.0.s8 %v1425
    %v1427 = vlaneseq
    %v1428 = vshrl.u32 %v1427, 7
    %v1429 = vsub.s32 %v1426, %v1428
    %v1430 = vrot.slane %v1414, %v1429
    %v1432 = vunpack.c.l.s4 1966171168
    %v1433 = vunpack.c.0.s8 %v1432
    %v1434 = vlaneseq
    %v1435 = vshrl.u32 %v1434, 7
    %v1436 = vsub.s32 %v1433, %v1435
    %v1437 = vrot.slane %v1415, %v1436
    %v1439 = vunpack.c.l.s4 1966171168
    %v1440 = vunpack.c.0.s8 %v1439
    %v1441 = vlaneseq
    %v1442 = vshrl.u32 %v1441, 7
    %v1443 = vsub.s32 %v1440, %v1442
    %v1444 = vrot.slane %v1416, %v1443
    %v1445 = vcombine.high %v1423, %v1423
    %v1446 = vcombine.high %v1430, %v1430
    %v1447 = vcombine.high %v1437, %v1437
    %v1448 = vcombine.high %v1444, %v1444
    %v1449 = vcombine.high %v409, %v409
    %v1451 = vunpack.c.l.s4 1966171168
    %v1452 = vunpack.c.0.s8 %v1451
    %v1453 = vlaneseq
    %v1454 = vshrl.u32 %v1453, 7
    %v1455 = vsub.s32 %v1452, %v1454
    %v1456 = vrot.slane %v409, %v1455
    %v1458 = vunpack.c.l.s4 1966171168
    %v1459 = vunpack.c.0.s8 %v1458
    %v1460 = vlaneseq
    %v1461 = vshrl.u32 %v1460, 7
    %v1462 = vsub.s32 %v1459, %v1461
    %v1463 = vrot.slane %v1449, %v1462
    %v1464 = vcombine.high %v1456, %v1456
    %v1465 = vcombine.high %v1463, %v1463
    %v1467 = vunpack.c.l.s4 1966171168
    %v1468 = vunpack.c.0.s8 %v1467
    %v1469 = vlaneseq
    %v1470 = vshrl.u32 %v1469, 7
    %v1471 = vsub.s32 %v1468, %v1470
    %v1472 = vrot.slane %v1456, %v1471
    %v1474 = vunpack.c.l.s4 1966171168
    %v1475 = vunpack.c.0.s8 %v1474
    %v1476 = vlaneseq
    %v1477 = vshrl.u32 %v1476, 7
    %v1478 = vsub.s32 %v1475, %v1477
    %v1479 = vrot.slane %v1463, %v1478
    %v1481 = vunpack.c.l.s4 1966171168
    %v1482 = vunpack.c.0.s8 %v1481
    %v1483 = vlaneseq
    %v1484 = vshrl.u32 %v1483, 7
    %v1485 = vsub.s32 %v1482, %v1484
    %v1486 = vrot.slane %v1464, %v1485
    %v1488 = vunpack.c.l.s4 1966171168
    %v1489 = vunpack.c.0.s8 %v1488
    %v1490 = vlaneseq
    %v1491 = vshrl.u32 %v1490, 7
    %v1492 = vsub.s32 %v1489, %v1491
    %v1493 = vrot.slane %v1465, %v1492
    %v1494 = vcombine.high %v1472, %v1472
    %v1495 = vcombine.high %v1479, %v1479
    %v1496 = vcombine.high %v1486, %v1486
    %v1497 = vcombine.high %v1493, %v1493
    %v1498 = vcombine.high %v410, %v410
    %v1500 = vunpack.c.l.s4 1966171168
    %v1501 = vunpack.c.0.s8 %v1500
    %v1502 = vlaneseq
    %v1503 = vshrl.u32 %v1502, 7
    %v1504 = vsub.s32 %v1501, %v1503
    %v1505 = vrot.slane %v410, %v1504
    %v1507 = vunpack.c.l.s4 1966171168
    %v1508 = vunpack.c.0.s8 %v1507
    %v1509 = vlaneseq
    %v1510 = vshrl.u32 %v1509, 7
    %v1511 = vsub.s32 %v1508, %v1510
    %v1512 = vrot.slane %v1498, %v1511
    %v1513 = vcombine.high %v1505, %v1505
    %v1514 = vcombine.high %v1512, %v1512
    %v1516 = vunpack.c.l.s4 1966171168
    %v1517 = vunpack.c.0.s8 %v1516
    %v1518 = vlaneseq
    %v1519 = vshrl.u32 %v1518, 7
    %v1520 = vsub.s32 %v1517, %v1519
    %v1521 = vrot.slane %v1505, %v1520
    %v1523 = vunpack.c.l.s4 1966171168
    %v1524 = vunpack.c.0.s8 %v1523
    %v1525 = vlaneseq
    %v1526 = vshrl.u32 %v1525, 7
    %v1527 = vsub.s32 %v1524, %v1526
    %v1528 = vrot.slane %v1512, %v1527
    %v1530 = vunpack.c.l.s4 1966171168
    %v1531 = vunpack.c.0.s8 %v1530
    %v1532 = vlaneseq
    %v1533 = vshrl.u32 %v1532, 7
    %v1534 = vsub.s32 %v1531, %v1533
    %v1535 = vrot.slane %v1513, %v1534
    %v1537 = vunpack.c.l.s4 1966171168
    %v1538 = vunpack.c.0.s8 %v1537
    %v1539 = vlaneseq
    %v1540 = vshrl.u32 %v1539, 7
    %v1541 = vsub.s32 %v1538, %v1540
    %v1542 = vrot.slane %v1514, %v1541
    %v1543 = vcombine.high %v1521, %v1521
    %v1544 = vcombine.high %v1528, %v1528
    %v1545 = vcombine.high %v1535, %v1535
    %v1546 = vcombine.high %v1542, %v1542
    %v1547 = vcombine.high %v411, %v411
    %v1549 = vunpack.c.l.s4 1966171168
    %v1550 = vunpack.c.0.s8 %v1549
    %v1551 = vlaneseq
    %v1552 = vshrl.u32 %v1551, 7
    %v1553 = vsub.s32 %v1550, %v1552
    %v1554 = vrot.slane %v411, %v1553
    %v1556 = vunpack.c.l.s4 1966171168
    %v1557 = vunpack.c.0.s8 %v1556
    %v1558 = vlaneseq
    %v1559 = vshrl.u32 %v1558, 7
    %v1560 = vsub.s32 %v1557, %v1559
    %v1561 = vrot.slane %v1547, %v1560
    %v1562 = vcombine.high %v1554, %v1554
    %v1563 = vcombine.high %v1561, %v1561
    %v1565 = vunpack.c.l.s4 1966171168
    %v1566 = vunpack.c.0.s8 %v1565
    %v1567 = vlaneseq
    %v1568 = vshrl.u32 %v1567, 7
    %v1569 = vsub.s32 %v1566, %v1568
    %v1570 = vrot.slane %v1554, %v1569
    %v1572 = vunpack.c.l.s4 1966171168
    %v1573 = vunpack.c.0.s8 %v1572
    %v1574 = vlaneseq
    %v1575 = vshrl.u32 %v1574, 7
    %v1576 = vsub.s32 %v1573, %v1575
    %v1577 = vrot.slane %v1561, %v1576
    %v1579 = vunpack.c.l.s4 1966171168
    %v1580 = vunpack.c.0.s8 %v1579
    %v1581 = vlaneseq
    %v1582 = vshrl.u32 %v1581, 7
    %v1583 = vsub.s32 %v1580, %v1582
    %v1584 = vrot.slane %v1562, %v1583
    %v1586 = vunpack.c.l.s4 1966171168
    %v1587 = vunpack.c.0.s8 %v1586
    %v1588 = vlaneseq
    %v1589 = vshrl.u32 %v1588, 7
    %v1590 = vsub.s32 %v1587, %v1589
    %v1591 = vrot.slane %v1563, %v1590
    %v1592 = vcombine.high %v1570, %v1570
    %v1593 = vcombine.high %v1577, %v1577
    %v1594 = vcombine.high %v1584, %v1584
    %v1595 = vcombine.high %v1591, %v1591
    %v1596 = vcombine.high %v412, %v412
    %v1598 = vunpack.c.l.s4 1966171168
    %v1599 = vunpack.c.0.s8 %v1598
    %v1600 = vlaneseq
    %v1601 = vshrl.u32 %v1600, 7
    %v1602 = vsub.s32 %v1599, %v1601
    %v1603 = vrot.slane %v412, %v1602
    %v1605 = vunpack.c.l.s4 1966171168
    %v1606 = vunpack.c.0.s8 %v1605
    %v1607 = vlaneseq
    %v1608 = vshrl.u32 %v1607, 7
    %v1609 = vsub.s32 %v1606, %v1608
    %v1610 = vrot.slane %v1596, %v1609
    %v1611 = vcombine.high %v1603, %v1603
    %v1612 = vcombine.high %v1610, %v1610
    %v1614 = vunpack.c.l.s4 1966171168
    %v1615 = vunpack.c.0.s8 %v1614
    %v1616 = vlaneseq
    %v1617 = vshrl.u32 %v1616, 7
    %v1618 = vsub.s32 %v1615, %v1617
    %v1619 = vrot.slane %v1603, %v1618
    %v1621 = vunpack.c.l.s4 1966171168
    %v1622 = vunpack.c.0.s8 %v1621
    %v1623 = vlaneseq
    %v1624 = vshrl.u32 %v1623, 7
    %v1625 = vsub.s32 %v1622, %v1624
    %v1626 = vrot.slane %v1610, %v1625
    %v1628 = vunpack.c.l.s4 1966171168
    %v1629 = vunpack.c.0.s8 %v1628
    %v1630 = vlaneseq
    %v1631 = vshrl.u32 %v1630, 7
    %v1632 = vsub.s32 %v1629, %v1631
    %v1633 = vrot.slane %v1611, %v1632
    %v1635 = vunpack.c.l.s4 1966171168
    %v1636 = vunpack.c.0.s8 %v1635
    %v1637 = vlaneseq
    %v1638 = vshrl.u32 %v1637, 7
    %v1639 = vsub.s32 %v1636, %v1638
    %v1640 = vrot.slane %v1612, %v1639
    %v1641 = vcombine.high %v1619, %v1619
    %v1642 = vcombine.high %v1626, %v1626
    %v1643 = vcombine.high %v1633, %v1633
    %v1644 = vcombine.high %v1640, %v1640
    %v1645 = vcombine.high %v413, %v413
    %v1647 = vunpack.c.l.s4 1966171168
    %v1648 = vunpack.c.0.s8 %v1647
    %v1649 = vlaneseq
    %v1650 = vshrl.u32 %v1649, 7
    %v1651 = vsub.s32 %v1648, %v1650
    %v1652 = vrot.slane %v413, %v1651
    %v1654 = vunpack.c.l.s4 1966171168
    %v1655 = vunpack.c.0.s8 %v1654
    %v1656 = vlaneseq
    %v1657 = vshrl.u32 %v1656, 7
    %v1658 = vsub.s32 %v1655, %v1657
    %v1659 = vrot.slane %v1645, %v1658
    %v1660 = vcombine.high %v1652, %v1652
    %v1661 = vcombine.high %v1659, %v1659
    %v1663 = vunpack.c.l.s4 1966171168
    %v1664 = vunpack.c.0.s8 %v1663
    %v1665 = vlaneseq
    %v1666 = vshrl.u32 %v1665, 7
    %v1667 = vsub.s32 %v1664, %v1666
    %v1668 = vrot.slane %v1652, %v1667
    %v1670 = vunpack.c.l.s4 1966171168
    %v1671 = vunpack.c.0.s8 %v1670
    %v1672 = vlaneseq
    %v1673 = vshrl.u32 %v1672, 7
    %v1674 = vsub.s32 %v1671, %v1673
    %v1675 = vrot.slane %v1659, %v1674
    %v1677 = vunpack.c.l.s4 1966171168
    %v1678 = vunpack.c.0.s8 %v1677
    %v1679 = vlaneseq
    %v1680 = vshrl.u32 %v1679, 7
    %v1681 = vsub.s32 %v1678, %v1680
    %v1682 = vrot.slane %v1660, %v1681
    %v1684 = vunpack.c.l.s4 1966171168
    %v1685 = vunpack.c.0.s8 %v1684
    %v1686 = vlaneseq
    %v1687 = vshrl.u32 %v1686, 7
    %v1688 = vsub.s32 %v1685, %v1687
    %v1689 = vrot.slane %v1661, %v1688
    %v1690 = vcombine.high %v1668, %v1668
    %v1691 = vcombine.high %v1675, %v1675
    %v1692 = vcombine.high %v1682, %v1682
    %v1693 = vcombine.high %v1689, %v1689
    %v1694 = vcombine.high %v414, %v414
    %v1696 = vunpack.c.l.s4 1966171168
    %v1697 = vunpack.c.0.s8 %v1696
    %v1698 = vlaneseq
    %v1699 = vshrl.u32 %v1698, 7
    %v1700 = vsub.s32 %v1697, %v1699
    %v1701 = vrot.slane %v414, %v1700
    %v1703 = vunpack.c.l.s4 1966171168
    %v1704 = vunpack.c.0.s8 %v1703
    %v1705 = vlaneseq
    %v1706 = vshrl.u32 %v1705, 7
    %v1707 = vsub.s32 %v1704, %v1706
    %v1708 = vrot.slane %v1694, %v1707
    %v1709 = vcombine.high %v1701, %v1701
    %v1710 = vcombine.high %v1708, %v1708
    %v1712 = vunpack.c.l.s4 1966171168
    %v1713 = vunpack.c.0.s8 %v1712
    %v1714 = vlaneseq
    %v1715 = vshrl.u32 %v1714, 7
    %v1716 = vsub.s32 %v1713, %v1715
    %v1717 = vrot.slane %v1701, %v1716
    %v1719 = vunpack.c.l.s4 1966171168
    %v1720 = vunpack.c.0.s8 %v1719
    %v1721 = vlaneseq
    %v1722 = vshrl.u32 %v1721, 7
    %v1723 = vsub.s32 %v1720, %v1722
    %v1724 = vrot.slane %v1708, %v1723
    %v1726 = vunpack.c.l.s4 1966171168
    %v1727 = vunpack.c.0.s8 %v1726
    %v1728 = vlaneseq
    %v1729 = vshrl.u32 %v1728, 7
    %v1730 = vsub.s32 %v1727, %v1729
    %v1731 = vrot.slane %v1709, %v1730
    %v1733 = vunpack.c.l.s4 1966171168
    %v1734 = vunpack.c.0.s8 %v1733
    %v1735 = vlaneseq
    %v1736 = vshrl.u32 %v1735, 7
    %v1737 = vsub.s32 %v1734, %v1736
    %v1738 = vrot.slane %v1710, %v1737
    %v1739 = vcombine.high %v1717, %v1717
    %v1740 = vcombine.high %v1724, %v1724
    %v1741 = vcombine.high %v1731, %v1731
    %v1742 = vcombine.high %v1738, %v1738
    %v1743 = vcombine.high %v415, %v415
    %v1745 = vunpack.c.l.s4 1966171168
    %v1746 = vunpack.c.0.s8 %v1745
    %v1747 = vlaneseq
    %v1748 = vshrl.u32 %v1747, 7
    %v1749 = vsub.s32 %v1746, %v1748
    %v1750 = vrot.slane %v415, %v1749
    %v1752 = vunpack.c.l.s4 1966171168
    %v1753 = vunpack.c.0.s8 %v1752
    %v1754 = vlaneseq
    %v1755 = vshrl.u32 %v1754, 7
    %v1756 = vsub.s32 %v1753, %v1755
    %v1757 = vrot.slane %v1743, %v1756
    %v1758 = vcombine.high %v1750, %v1750
    %v1759 = vcombine.high %v1757, %v1757
    %v1761 = vunpack.c.l.s4 1966171168
    %v1762 = vunpack.c.0.s8 %v1761
    %v1763 = vlaneseq
    %v1764 = vshrl.u32 %v1763, 7
    %v1765 = vsub.s32 %v1762, %v1764
    %v1766 = vrot.slane %v1750, %v1765
    %v1768 = vunpack.c.l.s4 1966171168
    %v1769 = vunpack.c.0.s8 %v1768
    %v1770 = vlaneseq
    %v1771 = vshrl.u32 %v1770, 7
    %v1772 = vsub.s32 %v1769, %v1771
    %v1773 = vrot.slane %v1757, %v1772
    %v1775 = vunpack.c.l.s4 1966171168
    %v1776 = vunpack.c.0.s8 %v1775
    %v1777 = vlaneseq
    %v1778 = vshrl.u32 %v1777, 7
    %v1779 = vsub.s32 %v1776, %v1778
    %v1780 = vrot.slane %v1758, %v1779
    %v1782 = vunpack.c.l.s4 1966171168
    %v1783 = vunpack.c.0.s8 %v1782
    %v1784 = vlaneseq
    %v1785 = vshrl.u32 %v1784, 7
    %v1786 = vsub.s32 %v1783, %v1785
    %v1787 = vrot.slane %v1759, %v1786
    %v1788 = vcombine.high %v1766, %v1766
    %v1789 = vcombine.high %v1773, %v1773
    %v1790 = vcombine.high %v1780, %v1780
    %v1791 = vcombine.high %v1787, %v1787
    %v1792 = vcombine.high %v416, %v416
    %v1794 = vunpack.c.l.s4 1966171168
    %v1795 = vunpack.c.0.s8 %v1794
    %v1796 = vlaneseq
    %v1797 = vshrl.u32 %v1796, 7
    %v1798 = vsub.s32 %v1795, %v1797
    %v1799 = vrot.slane %v416, %v1798
    %v1801 = vunpack.c.l.s4 1966171168
    %v1802 = vunpack.c.0.s8 %v1801
    %v1803 = vlaneseq
    %v1804 = vshrl.u32 %v1803, 7
    %v1805 = vsub.s32 %v1802, %v1804
    %v1806 = vrot.slane %v1792, %v1805
    %v1807 = vcombine.high %v1799, %v1799
    %v1808 = vcombine.high %v1806, %v1806
    %v1810 = vunpack.c.l.s4 1966171168
    %v1811 = vunpack.c.0.s8 %v1810
    %v1812 = vlaneseq
    %v1813 = vshrl.u32 %v1812, 7
    %v1814 = vsub.s32 %v1811, %v1813
    %v1815 = vrot.slane %v1799, %v1814
    %v1817 = vunpack.c.l.s4 1966171168
    %v1818 = vunpack.c.0.s8 %v1817
    %v1819 = vlaneseq
    %v1820 = vshrl.u32 %v1819, 7
    %v1821 = vsub.s32 %v1818, %v1820
    %v1822 = vrot.slane %v1806, %v1821
    %v1824 = vunpack.c.l.s4 1966171168
    %v1825 = vunpack.c.0.s8 %v1824
    %v1826 = vlaneseq
    %v1827 = vshrl.u32 %v1826, 7
    %v1828 = vsub.s32 %v1825, %v1827
    %v1829 = vrot.slane %v1807, %v1828
    %v1831 = vunpack.c.l.s4 1966171168
    %v1832 = vunpack.c.0.s8 %v1831
    %v1833 = vlaneseq
    %v1834 = vshrl.u32 %v1833, 7
    %v1835 = vsub.s32 %v1832, %v1834
    %v1836 = vrot.slane %v1808, %v1835
    %v1837 = vcombine.high %v1815, %v1815
    %v1838 = vcombine.high %v1822, %v1822
    %v1839 = vcombine.high %v1829, %v1829
    %v1840 = vcombine.high %v1836, %v1836
    %v1841 = vcombine.high %v417, %v417
    %v1843 = vunpack.c.l.s4 1966171168
    %v1844 = vunpack.c.0.s8 %v1843
    %v1845 = vlaneseq
    %v1846 = vshrl.u32 %v1845, 7
    %v1847 = vsub.s32 %v1844, %v1846
    %v1848 = vrot.slane %v417, %v1847
    %v1850 = vunpack.c.l.s4 1966171168
    %v1851 = vunpack.c.0.s8 %v1850
    %v1852 = vlaneseq
    %v1853 = vshrl.u32 %v1852, 7
    %v1854 = vsub.s32 %v1851, %v1853
    %v1855 = vrot.slane %v1841, %v1854
    %v1856 = vcombine.high %v1848, %v1848
    %v1857 = vcombine.high %v1855, %v1855
    %v1859 = vunpack.c.l.s4 1966171168
    %v1860 = vunpack.c.0.s8 %v1859
    %v1861 = vlaneseq
    %v1862 = vshrl.u32 %v1861, 7
    %v1863 = vsub.s32 %v1860, %v1862
    %v1864 = vrot.slane %v1848, %v1863
    %v1866 = vunpack.c.l.s4 1966171168
    %v1867 = vunpack.c.0.s8 %v1866
    %v1868 = vlaneseq
    %v1869 = vshrl.u32 %v1868, 7
    %v1870 = vsub.s32 %v1867, %v1869
    %v1871 = vrot.slane %v1855, %v1870
    %v1873 = vunpack.c.l.s4 1966171168
    %v1874 = vunpack.c.0.s8 %v1873
    %v1875 = vlaneseq
    %v1876 = vshrl.u32 %v1875, 7
    %v1877 = vsub.s32 %v1874, %v1876
    %v1878 = vrot.slane %v1856, %v1877
    %v1880 = vunpack.c.l.s4 1966171168
    %v1881 = vunpack.c.0.s8 %v1880
    %v1882 = vlaneseq
    %v1883 = vshrl.u32 %v1882, 7
    %v1884 = vsub.s32 %v1881, %v1883
    %v1885 = vrot.slane %v1857, %v1884
    %v1886 = vcombine.high %v1864, %v1864
    %v1887 = vcombine.high %v1871, %v1871
    %v1888 = vcombine.high %v1878, %v1878
    %v1889 = vcombine.high %v1885, %v1885
    %v1890 = vcombine.high %v418, %v418
    %v1892 = vunpack.c.l.s4 1966171168
    %v1893 = vunpack.c.0.s8 %v1892
    %v1894 = vlaneseq
    %v1895 = vshrl.u32 %v1894, 7
    %v1896 = vsub.s32 %v1893, %v1895
    %v1897 = vrot.slane %v418, %v1896
    %v1899 = vunpack.c.l.s4 1966171168
    %v1900 = vunpack.c.0.s8 %v1899
    %v1901 = vlaneseq
    %v1902 = vshrl.u32 %v1901, 7
    %v1903 = vsub.s32 %v1900, %v1902
    %v1904 = vrot.slane %v1890, %v1903
    %v1905 = vcombine.high %v1897, %v1897
    %v1906 = vcombine.high %v1904, %v1904
    %v1908 = vunpack.c.l.s4 1966171168
    %v1909 = vunpack.c.0.s8 %v1908
    %v1910 = vlaneseq
    %v1911 = vshrl.u32 %v1910, 7
    %v1912 = vsub.s32 %v1909, %v1911
    %v1913 = vrot.slane %v1897, %v1912
    %v1915 = vunpack.c.l.s4 1966171168
    %v1916 = vunpack.c.0.s8 %v1915
    %v1917 = vlaneseq
    %v1918 = vshrl.u32 %v1917, 7
    %v1919 = vsub.s32 %v1916, %v1918
    %v1920 = vrot.slane %v1904, %v1919
    %v1922 = vunpack.c.l.s4 1966171168
    %v1923 = vunpack.c.0.s8 %v1922
    %v1924 = vlaneseq
    %v1925 = vshrl.u32 %v1924, 7
    %v1926 = vsub.s32 %v1923, %v1925
    %v1927 = vrot.slane %v1905, %v1926
    %v1929 = vunpack.c.l.s4 1966171168
    %v1930 = vunpack.c.0.s8 %v1929
    %v1931 = vlaneseq
    %v1932 = vshrl.u32 %v1931, 7
    %v1933 = vsub.s32 %v1930, %v1932
    %v1934 = vrot.slane %v1906, %v1933
    %v1935 = vcombine.high %v1913, %v1913
    %v1936 = vcombine.high %v1920, %v1920
    %v1937 = vcombine.high %v1927, %v1927
    %v1938 = vcombine.high %v1934, %v1934
    %v1939 = vcombine.high %v419, %v419
    %v1941 = vunpack.c.l.s4 1966171168
    %v1942 = vunpack.c.0.s8 %v1941
    %v1943 = vlaneseq
    %v1944 = vshrl.u32 %v1943, 7
    %v1945 = vsub.s32 %v1942, %v1944
    %v1946 = vrot.slane %v419, %v1945
    %v1948 = vunpack.c.l.s4 1966171168
    %v1949 = vunpack.c.0.s8 %v1948
    %v1950 = vlaneseq
    %v1951 = vshrl.u32 %v1950, 7
    %v1952 = vsub.s32 %v1949, %v1951
    %v1953 = vrot.slane %v1939, %v1952
    %v1954 = vcombine.high %v1946, %v1946
    %v1955 = vcombine.high %v1953, %v1953
    %v1957 = vunpack.c.l.s4 1966171168
    %v1958 = vunpack.c.0.s8 %v1957
    %v1959 = vlaneseq
    %v1960 = vshrl.u32 %v1959, 7
    %v1961 = vsub.s32 %v1958, %v1960
    %v1962 = vrot.slane %v1946, %v1961
    %v1964 = vunpack.c.l.s4 1966171168
    %v1965 = vunpack.c.0.s8 %v1964
    %v1966 = vlaneseq
    %v1967 = vshrl.u32 %v1966, 7
    %v1968 = vsub.s32 %v1965, %v1967
    %v1969 = vrot.slane %v1953, %v1968
    %v1971 = vunpack.c.l.s4 1966171168
    %v1972 = vunpack.c.0.s8 %v1971
    %v1973 = vlaneseq
    %v1974 = vshrl.u32 %v1973, 7
    %v1975 = vsub.s32 %v1972, %v1974
    %v1976 = vrot.slane %v1954, %v1975
    %v1978 = vunpack.c.l.s4 1966171168
    %v1979 = vunpack.c.0.s8 %v1978
    %v1980 = vlaneseq
    %v1981 = vshrl.u32 %v1980, 7
    %v1982 = vsub.s32 %v1979, %v1981
    %v1983 = vrot.slane %v1955, %v1982
    %v1984 = vcombine.high %v1962, %v1962
    %v1985 = vcombine.high %v1969, %v1969
    %v1986 = vcombine.high %v1976, %v1976
    %v1987 = vcombine.high %v1983, %v1983
    %v1988 = vcombine.high %v420, %v420
    %v1990 = vunpack.c.l.s4 1966171168
    %v1991 = vunpack.c.0.s8 %v1990
    %v1992 = vlaneseq
    %v1993 = vshrl.u32 %v1992, 7
    %v1994 = vsub.s32 %v1991, %v1993
    %v1995 = vrot.slane %v420, %v1994
    %v1997 = vunpack.c.l.s4 1966171168
    %v1998 = vunpack.c.0.s8 %v1997
    %v1999 = vlaneseq
    %v2000 = vshrl.u32 %v1999, 7
    %v2001 = vsub.s32 %v1998, %v2000
    %v2002 = vrot.slane %v1988, %v2001
    %v2003 = vcombine.high %v1995, %v1995
    %v2004 = vcombine.high %v2002, %v2002
    %v2006 = vunpack.c.l.s4 1966171168
    %v2007 = vunpack.c.0.s8 %v2006
    %v2008 = vlaneseq
    %v2009 = vshrl.u32 %v2008, 7
    %v2010 = vsub.s32 %v2007, %v2009
    %v2011 = vrot.slane %v1995, %v2010
    %v2013 = vunpack.c.l.s4 1966171168
    %v2014 = vunpack.c.0.s8 %v2013
    %v2015 = vlaneseq
    %v2016 = vshrl.u32 %v2015, 7
    %v2017 = vsub.s32 %v2014, %v2016
    %v2018 = vrot.slane %v2002, %v2017
    %v2020 = vunpack.c.l.s4 1966171168
    %v2021 = vunpack.c.0.s8 %v2020
    %v2022 = vlaneseq
    %v2023 = vshrl.u32 %v2022, 7
    %v2024 = vsub.s32 %v2021, %v2023
    %v2025 = vrot.slane %v2003, %v2024
    %v2027 = vunpack.c.l.s4 1966171168
    %v2028 = vunpack.c.0.s8 %v2027
    %v2029 = vlaneseq
    %v2030 = vshrl.u32 %v2029, 7
    %v2031 = vsub.s32 %v2028, %v2030
    %v2032 = vrot.slane %v2004, %v2031
    %v2033 = vcombine.high %v2011, %v2011
    %v2034 = vcombine.high %v2018, %v2018
    %v2035 = vcombine.high %v2025, %v2025
    %v2036 = vcombine.high %v2032, %v2032
    %v2037 = vcombine.high %v421, %v421
    %v2039 = vunpack.c.l.s4 1966171168
    %v2040 = vunpack.c.0.s8 %v2039
    %v2041 = vlaneseq
    %v2042 = vshrl.u32 %v2041, 7
    %v2043 = vsub.s32 %v2040, %v2042
    %v2044 = vrot.slane %v421, %v2043
    %v2046 = vunpack.c.l.s4 1966171168
    %v2047 = vunpack.c.0.s8 %v2046
    %v2048 = vlaneseq
    %v2049 = vshrl.u32 %v2048, 7
    %v2050 = vsub.s32 %v2047, %v2049
    %v2051 = vrot.slane %v2037, %v2050
    %v2052 = vcombine.high %v2044, %v2044
    %v2053 = vcombine.high %v2051, %v2051
    %v2055 = vunpack.c.l.s4 1966171168
    %v2056 = vunpack.c.0.s8 %v2055
    %v2057 = vlaneseq
    %v2058 = vshrl.u32 %v2057, 7
    %v2059 = vsub.s32 %v2056, %v2058
    %v2060 = vrot.slane %v2044, %v2059
    %v2062 = vunpack.c.l.s4 1966171168
    %v2063 = vunpack.c.0.s8 %v2062
    %v2064 = vlaneseq
    %v2065 = vshrl.u32 %v2064, 7
    %v2066 = vsub.s32 %v2063, %v2065
    %v2067 = vrot.slane %v2051, %v2066
    %v2069 = vunpack.c.l.s4 1966171168
    %v2070 = vunpack.c.0.s8 %v2069
    %v2071 = vlaneseq
    %v2072 = vshrl.u32 %v2071, 7
    %v2073 = vsub.s32 %v2070, %v2072
    %v2074 = vrot.slane %v2052, %v2073
    %v2076 = vunpack.c.l.s4 1966171168
    %v2077 = vunpack.c.0.s8 %v2076
    %v2078 = vlaneseq
    %v2079 = vshrl.u32 %v2078, 7
    %v2080 = vsub.s32 %v2077, %v2079
    %v2081 = vrot.slane %v2053, %v2080
    %v2082 = vcombine.high %v2060, %v2060
    %v2083 = vcombine.high %v2067, %v2067
    %v2084 = vcombine.high %v2074, %v2074
    %v2085 = vcombine.high %v2081, %v2081
    %v2086 = vcombine.high %v422, %v422
    %v2088 = vunpack.c.l.s4 1966171168
    %v2089 = vunpack.c.0.s8 %v2088
    %v2090 = vlaneseq
    %v2091 = vshrl.u32 %v2090, 7
    %v2092 = vsub.s32 %v2089, %v2091
    %v2093 = vrot.slane %v422, %v2092
    %v2095 = vunpack.c.l.s4 1966171168
    %v2096 = vunpack.c.0.s8 %v2095
    %v2097 = vlaneseq
    %v2098 = vshrl.u32 %v2097, 7
    %v2099 = vsub.s32 %v2096, %v2098
    %v2100 = vrot.slane %v2086, %v2099
    %v2101 = vcombine.high %v2093, %v2093
    %v2102 = vcombine.high %v2100, %v2100
    %v2104 = vunpack.c.l.s4 1966171168
    %v2105 = vunpack.c.0.s8 %v2104
    %v2106 = vlaneseq
    %v2107 = vshrl.u32 %v2106, 7
    %v2108 = vsub.s32 %v2105, %v2107
    %v2109 = vrot.slane %v2093, %v2108
    %v2111 = vunpack.c.l.s4 1966171168
    %v2112 = vunpack.c.0.s8 %v2111
    %v2113 = vlaneseq
    %v2114 = vshrl.u32 %v2113, 7
    %v2115 = vsub.s32 %v2112, %v2114
    %v2116 = vrot.slane %v2100, %v2115
    %v2118 = vunpack.c.l.s4 1966171168
    %v2119 = vunpack.c.0.s8 %v2118
    %v2120 = vlaneseq
    %v2121 = vshrl.u32 %v2120, 7
    %v2122 = vsub.s32 %v2119, %v2121
    %v2123 = vrot.slane %v2101, %v2122
    %v2125 = vunpack.c.l.s4 1966171168
    %v2126 = vunpack.c.0.s8 %v2125
    %v2127 = vlaneseq
    %v2128 = vshrl.u32 %v2127, 7
    %v2129 = vsub.s32 %v2126, %v2128
    %v2130 = vrot.slane %v2102, %v2129
    %v2131 = vcombine.high %v2109, %v2109
    %v2132 = vcombine.high %v2116, %v2116
    %v2133 = vcombine.high %v2123, %v2123
    %v2134 = vcombine.high %v2130, %v2130
    %v2135 = vlaneseq
    %v2136 = vshrl.u32 %v2135, 7
    %v2137 = vsub.s32 0, %v2136
    %v2138 = vrot.slane %v1374, %v2137
    %v2139 = vlaneseq
    %v2140 = vshrl.u32 %v2139, 7
    %v2141 = vsub.s32 0, %v2140
    %v2142 = vrot.slane %v1388, %v2141
    %v2143 = vlaneseq
    %v2144 = vshrl.u32 %v2143, 7
    %v2145 = vsub.s32 0, %v2144
    %v2146 = vrot.slane %v1396, %v2145
    %v2147 = vlaneseq
    %v2148 = vshrl.u32 %v2147, 7
    %v2149 = vsub.s32 0, %v2148
    %v2150 = vrot.slane %v1398, %v2149
    %v2151 = vlaneseq
    %v2152 = vshrl.u32 %v2151, 7
    %v2153 = vsub.s32 0, %v2152
    %v2154 = vrot.slane %v1381, %v2153
    %v2155 = vlaneseq
    %v2156 = vshrl.u32 %v2155, 7
    %v2157 = vsub.s32 0, %v2156
    %v2158 = vrot.slane %v1395, %v2157
    %v2159 = vlaneseq
    %v2160 = vshrl.u32 %v2159, 7
    %v2161 = vsub.s32 0, %v2160
    %v2162 = vrot.slane %v1397, %v2161
    %v2163 = vlaneseq
    %v2164 = vshrl.u32 %v2163, 7
    %v2165 = vsub.s32 0, %v2164
    %v2166 = vrot.slane %v1399, %v2165
    %v2167 = vlaneseq
    %v2168 = vshrl.u32 %v2167, 7
    %v2169 = vsub.s32 0, %v2168
    %v2170 = vrot.slane %v1423, %v2169
    %v2171 = vlaneseq
    %v2172 = vshrl.u32 %v2171, 7
    %v2173 = vsub.s32 0, %v2172
    %v2174 = vrot.slane %v1437, %v2173
    %v2175 = vlaneseq
    %v2176 = vshrl.u32 %v2175, 7
    %v2177 = vsub.s32 0, %v2176
    %v2178 = vrot.slane %v1445, %v2177
    %v2179 = vlaneseq
    %v2180 = vshrl.u32 %v2179, 7
    %v2181 = vsub.s32 0, %v2180
    %v2182 = vrot.slane %v1447, %v2181
    %v2183 = vlaneseq
    %v2184 = vshrl.u32 %v2183, 7
    %v2185 = vsub.s32 0, %v2184
    %v2186 = vrot.slane %v1430, %v2185
    %v2187 = vlaneseq
    %v2188 = vshrl.u32 %v2187, 7
    %v2189 = vsub.s32 0, %v2188
    %v2190 = vrot.slane %v1444, %v2189
    %v2191 = vlaneseq
    %v2192 = vshrl.u32 %v2191, 7
    %v2193 = vsub.s32 0, %v2192
    %v2194 = vrot.slane %v1446, %v2193
    %v2195 = vlaneseq
    %v2196 = vshrl.u32 %v2195, 7
    %v2197 = vsub.s32 0, %v2196
    %v2198 = vrot.slane %v1448, %v2197
    %v2199 = vlaneseq
    %v2200 = vshrl.u32 %v2199, 7
    %v2201 = vsub.s32 0, %v2200
    %v2202 = vrot.slane %v1472, %v2201
    %v2203 = vlaneseq
    %v2204 = vshrl.u32 %v2203, 7
    %v2205 = vsub.s32 0, %v2204
    %v2206 = vrot.slane %v1486, %v2205
    %v2207 = vlaneseq
    %v2208 = vshrl.u32 %v2207, 7
    %v2209 = vsub.s32 0, %v2208
    %v2210 = vrot.slane %v1494, %v2209
    %v2211 = vlaneseq
    %v2212 = vshrl.u32 %v2211, 7
    %v2213 = vsub.s32 0, %v2212
    %v2214 = vrot.slane %v1496, %v2213
    %v2215 = vlaneseq
    %v2216 = vshrl.u32 %v2215, 7
    %v2217 = vsub.s32 0, %v2216
    %v2218 = vrot.slane %v1479, %v2217
    %v2219 = vlaneseq
    %v2220 = vshrl.u32 %v2219, 7
    %v2221 = vsub.s32 0, %v2220
    %v2222 = vrot.slane %v1493, %v2221
    %v2223 = vlaneseq
    %v2224 = vshrl.u32 %v2223, 7
    %v2225 = vsub.s32 0, %v2224
    %v2226 = vrot.slane %v1495, %v2225
    %v2227 = vlaneseq
    %v2228 = vshrl.u32 %v2227, 7
    %v2229 = vsub.s32 0, %v2228
    %v2230 = vrot.slane %v1497, %v2229
    %v2231 = vlaneseq
    %v2232 = vshrl.u32 %v2231, 7
    %v2233 = vsub.s32 0, %v2232
    %v2234 = vrot.slane %v1521, %v2233
    %v2235 = vlaneseq
    %v2236 = vshrl.u32 %v2235, 7
    %v2237 = vsub.s32 0, %v2236
    %v2238 = vrot.slane %v1535, %v2237
    %v2239 = vlaneseq
    %v2240 = vshrl.u32 %v2239, 7
    %v2241 = vsub.s32 0, %v2240
    %v2242 = vrot.slane %v1543, %v2241
    %v2243 = vlaneseq
    %v2244 = vshrl.u32 %v2243, 7
    %v2245 = vsub.s32 0, %v2244
    %v2246 = vrot.slane %v1545, %v2245
    %v2247 = vlaneseq
    %v2248 = vshrl.u32 %v2247, 7
    %v2249 = vsub.s32 0, %v2248
    %v2250 = vrot.slane %v1528, %v2249
    %v2251 = vlaneseq
    %v2252 = vshrl.u32 %v2251, 7
    %v2253 = vsub.s32 0, %v2252
    %v2254 = vrot.slane %v1542, %v2253
    %v2255 = vlaneseq
    %v2256 = vshrl.u32 %v2255, 7
    %v2257 = vsub.s32 0, %v2256
    %v2258 = vrot.slane %v1544, %v2257
    %v2259 = vlaneseq
    %v2260 = vshrl.u32 %v2259, 7
    %v2261 = vsub.s32 0, %v2260
    %v2262 = vrot.slane %v1546, %v2261
    %v2263 = vlaneseq
    %v2264 = vshrl.u32 %v2263, 7
    %v2265 = vsub.s32 0, %v2264
    %v2266 = vrot.slane %v1570, %v2265
    %v2267 = vlaneseq
    %v2268 = vshrl.u32 %v2267, 7
    %v2269 = vsub.s32 0, %v2268
    %v2270 = vrot.slane %v1584, %v2269
    %v2271 = vlaneseq
    %v2272 = vshrl.u32 %v2271, 7
    %v2273 = vsub.s32 0, %v2272
    %v2274 = vrot.slane %v1592, %v2273
    %v2275 = vlaneseq
    %v2276 = vshrl.u32 %v2275, 7
    %v2277 = vsub.s32 0, %v2276
    %v2278 = vrot.slane %v1594, %v2277
    %v2279 = vlaneseq
    %v2280 = vshrl.u32 %v2279, 7
    %v2281 = vsub.s32 0, %v2280
    %v2282 = vrot.slane %v1577, %v2281
    %v2283 = vlaneseq
    %v2284 = vshrl.u32 %v2283, 7
    %v2285 = vsub.s32 0, %v2284
    %v2286 = vrot.slane %v1591, %v2285
    %v2287 = vlaneseq
    %v2288 = vshrl.u32 %v2287, 7
    %v2289 = vsub.s32 0, %v2288
    %v2290 = vrot.slane %v1593, %v2289
    %v2291 = vlaneseq
    %v2292 = vshrl.u32 %v2291, 7
    %v2293 = vsub.s32 0, %v2292
    %v2294 = vrot.slane %v1595, %v2293
    %v2295 = vlaneseq
    %v2296 = vshrl.u32 %v2295, 7
    %v2297 = vsub.s32 0, %v2296
    %v2298 = vrot.slane %v1619, %v2297
    %v2299 = vlaneseq
    %v2300 = vshrl.u32 %v2299, 7
    %v2301 = vsub.s32 0, %v2300
    %v2302 = vrot.slane %v1633, %v2301
    %v2303 = vlaneseq
    %v2304 = vshrl.u32 %v2303, 7
    %v2305 = vsub.s32 0, %v2304
    %v2306 = vrot.slane %v1641, %v2305
    %v2307 = vlaneseq
    %v2308 = vshrl.u32 %v2307, 7
    %v2309 = vsub.s32 0, %v2308
    %v2310 = vrot.slane %v1643, %v2309
    %v2311 = vlaneseq
    %v2312 = vshrl.u32 %v2311, 7
    %v2313 = vsub.s32 0, %v2312
    %v2314 = vrot.slane %v1626, %v2313
    %v2315 = vlaneseq
    %v2316 = vshrl.u32 %v2315, 7
    %v2317 = vsub.s32 0, %v2316
    %v2318 = vrot.slane %v1640, %v2317
    %v2319 = vlaneseq
    %v2320 = vshrl.u32 %v2319, 7
    %v2321 = vsub.s32 0, %v2320
    %v2322 = vrot.slane %v1642, %v2321
    %v2323 = vlaneseq
    %v2324 = vshrl.u32 %v2323, 7
    %v2325 = vsub.s32 0, %v2324
    %v2326 = vrot.slane %v1644, %v2325
    %v2327 = vlaneseq
    %v2328 = vshrl.u32 %v2327, 7
    %v2329 = vsub.s32 0, %v2328
    %v2330 = vrot.slane %v1668, %v2329
    %v2331 = vlaneseq
    %v2332 = vshrl.u32 %v2331, 7
    %v2333 = vsub.s32 0, %v2332
    %v2334 = vrot.slane %v1682, %v2333
    %v2335 = vlaneseq
    %v2336 = vshrl.u32 %v2335, 7
    %v2337 = vsub.s32 0, %v2336
    %v2338 = vrot.slane %v1690, %v2337
    %v2339 = vlaneseq
    %v2340 = vshrl.u32 %v2339, 7
    %v2341 = vsub.s32 0, %v2340
    %v2342 = vrot.slane %v1692, %v2341
    %v2343 = vlaneseq
    %v2344 = vshrl.u32 %v2343, 7
    %v2345 = vsub.s32 0, %v2344
    %v2346 = vrot.slane %v1675, %v2345
    %v2347 = vlaneseq
    %v2348 = vshrl.u32 %v2347, 7
    %v2349 = vsub.s32 0, %v2348
    %v2350 = vrot.slane %v1689, %v2349
    %v2351 = vlaneseq
    %v2352 = vshrl.u32 %v2351, 7
    %v2353 = vsub.s32 0, %v2352
    %v2354 = vrot.slane %v1691, %v2353
    %v2355 = vlaneseq
    %v2356 = vshrl.u32 %v2355, 7
    %v2357 = vsub.s32 0, %v2356
    %v2358 = vrot.slane %v1693, %v2357
    %v2359 = vlaneseq
    %v2360 = vshrl.u32 %v2359, 7
    %v2361 = vsub.s32 0, %v2360
    %v2362 = vrot.slane %v1717, %v2361
    %v2363 = vlaneseq
    %v2364 = vshrl.u32 %v2363, 7
    %v2365 = vsub.s32 0, %v2364
    %v2366 = vrot.slane %v1731, %v2365
    %v2367 = vlaneseq
    %v2368 = vshrl.u32 %v2367, 7
    %v2369 = vsub.s32 0, %v2368
    %v2370 = vrot.slane %v1739, %v2369
    %v2371 = vlaneseq
    %v2372 = vshrl.u32 %v2371, 7
    %v2373 = vsub.s32 0, %v2372
    %v2374 = vrot.slane %v1741, %v2373
    %v2375 = vlaneseq
    %v2376 = vshrl.u32 %v2375, 7
    %v2377 = vsub.s32 0, %v2376
    %v2378 = vrot.slane %v1724, %v2377
    %v2379 = vlaneseq
    %v2380 = vshrl.u32 %v2379, 7
    %v2381 = vsub.s32 0, %v2380
    %v2382 = vrot.slane %v1738, %v2381
    %v2383 = vlaneseq
    %v2384 = vshrl.u32 %v2383, 7
    %v2385 = vsub.s32 0, %v2384
    %v2386 = vrot.slane %v1740, %v2385
    %v2387 = vlaneseq
    %v2388 = vshrl.u32 %v2387, 7
    %v2389 = vsub.s32 0, %v2388
    %v2390 = vrot.slane %v1742, %v2389
    %v2391 = vlaneseq
    %v2392 = vshrl.u32 %v2391, 7
    %v2393 = vsub.s32 0, %v2392
    %v2394 = vrot.slane %v1766, %v2393
    %v2395 = vlaneseq
    %v2396 = vshrl.u32 %v2395, 7
    %v2397 = vsub.s32 0, %v2396
    %v2398 = vrot.slane %v1780, %v2397
    %v2399 = vlaneseq
    %v2400 = vshrl.u32 %v2399, 7
    %v2401 = vsub.s32 0, %v2400
    %v2402 = vrot.slane %v1788, %v2401
    %v2403 = vlaneseq
    %v2404 = vshrl.u32 %v2403, 7
    %v2405 = vsub.s32 0, %v2404
    %v2406 = vrot.slane %v1790, %v2405
    %v2407 = vlaneseq
    %v2408 = vshrl.u32 %v2407, 7
    %v2409 = vsub.s32 0, %v2408
    %v2410 = vrot.slane %v1773, %v2409
    %v2411 = vlaneseq
    %v2412 = vshrl.u32 %v2411, 7
    %v2413 = vsub.s32 0, %v2412
    %v2414 = vrot.slane %v1787, %v2413
    %v2415 = vlaneseq
    %v2416 = vshrl.u32 %v2415, 7
    %v2417 = vsub.s32 0, %v2416
    %v2418 = vrot.slane %v1789, %v2417
    %v2419 = vlaneseq
    %v2420 = vshrl.u32 %v2419, 7
    %v2421 = vsub.s32 0, %v2420
    %v2422 = vrot.slane %v1791, %v2421
    %v2423 = vlaneseq
    %v2424 = vshrl.u32 %v2423, 7
    %v2425 = vsub.s32 0, %v2424
    %v2426 = vrot.slane %v1815, %v2425
    %v2427 = vlaneseq
    %v2428 = vshrl.u32 %v2427, 7
    %v2429 = vsub.s32 0, %v2428
    %v2430 = vrot.slane %v1829, %v2429
    %v2431 = vlaneseq
    %v2432 = vshrl.u32 %v2431, 7
    %v2433 = vsub.s32 0, %v2432
    %v2434 = vrot.slane %v1837, %v2433
    %v2435 = vlaneseq
    %v2436 = vshrl.u32 %v2435, 7
    %v2437 = vsub.s32 0, %v2436
    %v2438 = vrot.slane %v1839, %v2437
    %v2439 = vlaneseq
    %v2440 = vshrl.u32 %v2439, 7
    %v2441 = vsub.s32 0, %v2440
    %v2442 = vrot.slane %v1822, %v2441
    %v2443 = vlaneseq
    %v2444 = vshrl.u32 %v2443, 7
    %v2445 = vsub.s32 0, %v2444
    %v2446 = vrot.slane %v1836, %v2445
    %v2447 = vlaneseq
    %v2448 = vshrl.u32 %v2447, 7
    %v2449 = vsub.s32 0, %v2448
    %v2450 = vrot.slane %v1838, %v2449
    %v2451 = vlaneseq
    %v2452 = vshrl.u32 %v2451, 7
    %v2453 = vsub.s32 0, %v2452
    %v2454 = vrot.slane %v1840, %v2453
    %v2455 = vlaneseq
    %v2456 = vshrl.u32 %v2455, 7
    %v2457 = vsub.s32 0, %v2456
    %v2458 = vrot.slane %v1864, %v2457
    %v2459 = vlaneseq
    %v2460 = vshrl.u32 %v2459, 7
    %v2461 = vsub.s32 0, %v2460
    %v2462 = vrot.slane %v1878, %v2461
    %v2463 = vlaneseq
    %v2464 = vshrl.u32 %v2463, 7
    %v2465 = vsub.s32 0, %v2464
    %v2466 = vrot.slane %v1886, %v2465
    %v2467 = vlaneseq
    %v2468 = vshrl.u32 %v2467, 7
    %v2469 = vsub.s32 0, %v2468
    %v2470 = vrot.slane %v1888, %v2469
    %v2471 = vlaneseq
    %v2472 = vshrl.u32 %v2471, 7
    %v2473 = vsub.s32 0, %v2472
    %v2474 = vrot.slane %v1871, %v2473
    %v2475 = vlaneseq
    %v2476 = vshrl.u32 %v2475, 7
    %v2477 = vsub.s32 0, %v2476
    %v2478 = vrot.slane %v1885, %v2477
    %v2479 = vlaneseq
    %v2480 = vshrl.u32 %v2479, 7
    %v2481 = vsub.s32 0, %v2480
    %v2482 = vrot.slane %v1887, %v2481
    %v2483 = vlaneseq
    %v2484 = vshrl.u32 %v2483, 7
    %v2485 = vsub.s32 0, %v2484
    %v2486 = vrot.slane %v1889, %v2485
    %v2487 = vlaneseq
    %v2488 = vshrl.u32 %v2487, 7
    %v2489 = vsub.s32 0, %v2488
    %v2490 = vrot.slane %v1913, %v2489
    %v2491 = vlaneseq
    %v2492 = vshrl.u32 %v2491, 7
    %v2493 = vsub.s32 0, %v2492
    %v2494 = vrot.slane %v1927, %v2493
    %v2495 = vlaneseq
    %v2496 = vshrl.u32 %v2495, 7
    %v2497 = vsub.s32 0, %v2496
    %v2498 = vrot.slane %v1935, %v2497
    %v2499 = vlaneseq
    %v2500 = vshrl.u32 %v2499, 7
    %v2501 = vsub.s32 0, %v2500
    %v2502 = vrot.slane %v1937, %v2501
    %v2503 = vlaneseq
    %v2504 = vshrl.u32 %v2503, 7
    %v2505 = vsub.s32 0, %v2504
    %v2506 = vrot.slane %v1920, %v2505
    %v2507 = vlaneseq
    %v2508 = vshrl.u32 %v2507, 7
    %v2509 = vsub.s32 0, %v2508
    %v2510 = vrot.slane %v1934, %v2509
    %v2511 = vlaneseq
    %v2512 = vshrl.u32 %v2511, 7
    %v2513 = vsub.s32 0, %v2512
    %v2514 = vrot.slane %v1936, %v2513
    %v2515 = vlaneseq
    %v2516 = vshrl.u32 %v2515, 7
    %v2517 = vsub.s32 0, %v2516
    %v2518 = vrot.slane %v1938, %v2517
    %v2519 = vlaneseq
    %v2520 = vshrl.u32 %v2519, 7
    %v2521 = vsub.s32 0, %v2520
    %v2522 = vrot.slane %v1962, %v2521
    %v2523 = vlaneseq
    %v2524 = vshrl.u32 %v2523, 7
    %v2525 = vsub.s32 0, %v2524
    %v2526 = vrot.slane %v1976, %v2525
    %v2527 = vlaneseq
    %v2528 = vshrl.u32 %v2527, 7
    %v2529 = vsub.s32 0, %v2528
    %v2530 = vrot.slane %v1984, %v2529
    %v2531 = vlaneseq
    %v2532 = vshrl.u32 %v2531, 7
    %v2533 = vsub.s32 0, %v2532
    %v2534 = vrot.slane %v1986, %v2533
    %v2535 = vlaneseq
    %v2536 = vshrl.u32 %v2535, 7
    %v2537 = vsub.s32 0, %v2536
    %v2538 = vrot.slane %v1969, %v2537
    %v2539 = vlaneseq
    %v2540 = vshrl.u32 %v2539, 7
    %v2541 = vsub.s32 0, %v2540
    %v2542 = vrot.slane %v1983, %v2541
    %v2543 = vlaneseq
    %v2544 = vshrl.u32 %v2543, 7
    %v2545 = vsub.s32 0, %v2544
    %v2546 = vrot.slane %v1985, %v2545
    %v2547 = vlaneseq
    %v2548 = vshrl.u32 %v2547, 7
    %v2549 = vsub.s32 0, %v2548
    %v2550 = vrot.slane %v1987, %v2549
    %v2551 = vlaneseq
    %v2552 = vshrl.u32 %v2551, 7
    %v2553 = vsub.s32 0, %v2552
    %v2554 = vrot.slane %v2011, %v2553
    %v2555 = vlaneseq
    %v2556 = vshrl.u32 %v2555, 7
    %v2557 = vsub.s32 0, %v2556
    %v2558 = vrot.slane %v2025, %v2557
    %v2559 = vlaneseq
    %v2560 = vshrl.u32 %v2559, 7
    %v2561 = vsub.s32 0, %v2560
    %v2562 = vrot.slane %v2033, %v2561
    %v2563 = vlaneseq
    %v2564 = vshrl.u32 %v2563, 7
    %v2565 = vsub.s32 0, %v2564
    %v2566 = vrot.slane %v2035, %v2565
    %v2567 = vlaneseq
    %v2568 = vshrl.u32 %v2567, 7
    %v2569 = vsub.s32 0, %v2568
    %v2570 = vrot.slane %v2018, %v2569
    %v2571 = vlaneseq
    %v2572 = vshrl.u32 %v2571, 7
    %v2573 = vsub.s32 0, %v2572
    %v2574 = vrot.slane %v2032, %v2573
    %v2575 = vlaneseq
    %v2576 = vshrl.u32 %v2575, 7
    %v2577 = vsub.s32 0, %v2576
    %v2578 = vrot.slane %v2034, %v2577
    %v2579 = vlaneseq
    %v2580 = vshrl.u32 %v2579, 7
    %v2581 = vsub.s32 0, %v2580
    %v2582 = vrot.slane %v2036, %v2581
    %v2583 = vlaneseq
    %v2584 = vshrl.u32 %v2583, 7
    %v2585 = vsub.s32 0, %v2584
    %v2586 = vrot.slane %v2060, %v2585
    %v2587 = vlaneseq
    %v2588 = vshrl.u32 %v2587, 7
    %v2589 = vsub.s32 0, %v2588
    %v2590 = vrot.slane %v2074, %v2589
    %v2591 = vlaneseq
    %v2592 = vshrl.u32 %v2591, 7
    %v2593 = vsub.s32 0, %v2592
    %v2594 = vrot.slane %v2082, %v2593
    %v2595 = vlaneseq
    %v2596 = vshrl.u32 %v2595, 7
    %v2597 = vsub.s32 0, %v2596
    %v2598 = vrot.slane %v2084, %v2597
    %v2599 = vlaneseq
    %v2600 = vshrl.u32 %v2599, 7
    %v2601 = vsub.s32 0, %v2600
    %v2602 = vrot.slane %v2067, %v2601
    %v2603 = vlaneseq
    %v2604 = vshrl.u32 %v2603, 7
    %v2605 = vsub.s32 0, %v2604
    %v2606 = vrot.slane %v2081, %v2605
    %v2607 = vlaneseq
    %v2608 = vshrl.u32 %v2607, 7
    %v2609 = vsub.s32 0, %v2608
    %v2610 = vrot.slane %v2083, %v2609
    %v2611 = vlaneseq
    %v2612 = vshrl.u32 %v2611, 7
    %v2613 = vsub.s32 0, %v2612
    %v2614 = vrot.slane %v2085, %v2613
    %v2615 = vlaneseq
    %v2616 = vshrl.u32 %v2615, 7
    %v2617 = vsub.s32 0, %v2616
    %v2618 = vrot.slane %v2109, %v2617
    %v2619 = vlaneseq
    %v2620 = vshrl.u32 %v2619, 7
    %v2621 = vsub.s32 0, %v2620
    %v2622 = vrot.slane %v2123, %v2621
    %v2623 = vlaneseq
    %v2624 = vshrl.u32 %v2623, 7
    %v2625 = vsub.s32 0, %v2624
    %v2626 = vrot.slane %v2131, %v2625
    %v2627 = vlaneseq
    %v2628 = vshrl.u32 %v2627, 7
    %v2629 = vsub.s32 0, %v2628
    %v2630 = vrot.slane %v2133, %v2629
    %v2631 = vlaneseq
    %v2632 = vshrl.u32 %v2631, 7
    %v2633 = vsub.s32 0, %v2632
    %v2634 = vrot.slane %v2116, %v2633
    %v2635 = vlaneseq
    %v2636 = vshrl.u32 %v2635, 7
    %v2637 = vsub.s32 0, %v2636
    %v2638 = vrot.slane %v2130, %v2637
    %v2639 = vlaneseq
    %v2640 = vshrl.u32 %v2639, 7
    %v2641 = vsub.s32 0, %v2640
    %v2642 = vrot.slane %v2132, %v2641
    %v2643 = vlaneseq
    %v2644 = vshrl.u32 %v2643, 7
    %v2645 = vsub.s32 0, %v2644
    %v2646 = vrot.slane %v2134, %v2645
    %v2775 = vmul.f32 %v445, %v2138
    %v2776 = vmul.f32 %v452, %v2142
    %v2777 = vmul.f32 %v459, %v2146
    %v2778 = vmul.f32 %v466, %v2150
    %v2779 = vmul.f32 %v473, %v2154
    %v2780 = vmul.f32 %v480, %v2158
    %v2781 = vmul.f32 %v487, %v2162
    %v2782 = vmul.f32 %v494, %v2166
    %v2783 = vmul.f32 %v501, %v2170
    %v2784 = vmul.f32 %v508, %v2174
    %v2785 = vmul.f32 %v515, %v2178
    %v2786 = vmul.f32 %v522, %v2182
    %v2787 = vmul.f32 %v529, %v2186
    %v2788 = vmul.f32 %v536, %v2190
    %v2789 = vmul.f32 %v543, %v2194
    %v2790 = vmul.f32 %v550, %v2198
    %v2791 = vmul.f32 %v557, %v2202
    %v2792 = vmul.f32 %v564, %v2206
    %v2793 = vmul.f32 %v571, %v2210
    %v2794 = vmul.f32 %v578, %v2214
    %v2795 = vmul.f32 %v585, %v2218
    %v2796 = vmul.f32 %v592, %v2222
    %v2797 = vmul.f32 %v599, %v2226
    %v2798 = vmul.f32 %v606, %v2230
    %v2799 = vmul.f32 %v613, %v2234
    %v2800 = vmul.f32 %v620, %v2238
    %v2801 = vmul.f32 %v627, %v2242
    %v2802 = vmul.f32 %v634, %v2246
    %v2803 = vmul.f32 %v641, %v2250
    %v2804 = vmul.f32 %v648, %v2254
    %v2805 = vmul.f32 %v655, %v2258
    %v2806 = vmul.f32 %v662, %v2262
    %v2807 = vmul.f32 %v669, %v2266
    %v2808 = vmul.f32 %v676, %v2270
    %v2809 = vmul.f32 %v683, %v2274
    %v2810 = vmul.f32 %v690, %v2278
    %v2811 = vmul.f32 %v697, %v2282
    %v2812 = vmul.f32 %v704, %v2286
    %v2813 = vmul.f32 %v711, %v2290
    %v2814 = vmul.f32 %v718, %v2294
    %v2815 = vmul.f32 %v725, %v2298
    %v2816 = vmul.f32 %v732, %v2302
    %v2817 = vmul.f32 %v739, %v2306
    %v2818 = vmul.f32 %v746, %v2310
    %v2819 = vmul.f32 %v753, %v2314
    %v2820 = vmul.f32 %v760, %v2318
    %v2821 = vmul.f32 %v767, %v2322
    %v2822 = vmul.f32 %v774, %v2326
    %v2823 = vmul.f32 %v781, %v2330
    %v2824 = vmul.f32 %v788, %v2334
    %v2825 = vmul.f32 %v795, %v2338
    %v2826 = vmul.f32 %v802, %v2342
    %v2827 = vmul.f32 %v809, %v2346
    %v2828 = vmul.f32 %v816, %v2350
    %v2829 = vmul.f32 %v823, %v2354
    %v2830 = vmul.f32 %v830, %v2358
    %v2831 = vmul.f32 %v837, %v2362
    %v2832 = vmul.f32 %v844, %v2366
    %v2833 = vmul.f32 %v851, %v2370
    %v2834 = vmul.f32 %v858, %v2374
    %v2835 = vmul.f32 %v865, %v2378
    %v2836 = vmul.f32 %v872, %v2382
    %v2837 = vmul.f32 %v879, %v2386
    %v2838 = vmul.f32 %v886, %v2390
    %v2839 = vmul.f32 %v893, %v2394
    %v2840 = vmul.f32 %v900, %v2398
    %v2841 = vmul.f32 %v907, %v2402
    %v2842 = vmul.f32 %v914, %v2406
    %v2843 = vmul.f32 %v921, %v2410
    %v2844 = vmul.f32 %v928, %v2414
    %v2845 = vmul.f32 %v935, %v2418
    %v2846 = vmul.f32 %v942, %v2422
    %v2847 = vmul.f32 %v949, %v2426
    %v2848 = vmul.f32 %v956, %v2430
    %v2849 = vmul.f32 %v963, %v2434
    %v2850 = vmul.f32 %v970, %v2438
    %v2851 = vmul.f32 %v977, %v2442
    %v2852 = vmul.f32 %v984, %v2446
    %v2853 = vmul.f32 %v991, %v2450
    %v2854 = vmul.f32 %v998, %v2454
    %v2855 = vmul.f32 %v1005, %v2458
    %v2856 = vmul.f32 %v1012, %v2462
    %v2857 = vmul.f32 %v1019, %v2466
    %v2858 = vmul.f32 %v1026, %v2470
    %v2859 = vmul.f32 %v1033, %v2474
    %v2860 = vmul.f32 %v1040, %v2478
    %v2861 = vmul.f32 %v1047, %v2482
    %v2862 = vmul.f32 %v1054, %v2486
    %v2863 = vmul.f32 %v1061, %v2490
    %v2864 = vmul.f32 %v1068, %v2494
    %v2865 = vmul.f32 %v1075, %v2498
    %v2866 = vmul.f32 %v1082, %v2502
    %v2867 = vmul.f32 %v1089, %v2506
    %v2868 = vmul.f32 %v1096, %v2510
    %v2869 = vmul.f32 %v1103, %v2514
    %v2870 = vmul.f32 %v1110, %v2518
    %v2871 = vmul.f32 %v1117, %v2522
    %v2872 = vmul.f32 %v1124, %v2526
    %v2873 = vmul.f32 %v1131, %v2530
    %v2874 = vmul.f32 %v1138, %v2534
    %v2875 = vmul.f32 %v1145, %v2538
    %v2876 = vmul.f32 %v1152, %v2542
    %v2877 = vmul.f32 %v1159, %v2546
    %v2878 = vmul.f32 %v1166, %v2550
    %v2879 = vmul.f32 %v1173, %v2554
    %v2880 = vmul.f32 %v1180, %v2558
    %v2881 = vmul.f32 %v1187, %v2562
    %v2882 = vmul.f32 %v1194, %v2566
    %v2883 = vmul.f32 %v1201, %v2570
    %v2884 = vmul.f32 %v1208, %v2574
    %v2885 = vmul.f32 %v1215, %v2578
    %v2886 = vmul.f32 %v1222, %v2582
    %v2887 = vmul.f32 %v1229, %v2586
    %v2888 = vmul.f32 %v1236, %v2590
    %v2889 = vmul.f32 %v1243, %v2594
    %v2890 = vmul.f32 %v1250, %v2598
    %v2891 = vmul.f32 %v1257, %v2602
    %v2892 = vmul.f32 %v1264, %v2606
    %v2893 = vmul.f32 %v1271, %v2610
    %v2894 = vmul.f32 %v1278, %v2614
    %v2895 = vmul.f32 %v1285, %v2618
    %v2896 = vmul.f32 %v1292, %v2622
    %v2897 = vmul.f32 %v1299, %v2626
    %v2898 = vmul.f32 %v1306, %v2630
    %v2899 = vmul.f32 %v1313, %v2634
    %v2900 = vmul.f32 %v1320, %v2638
    %v2901 = vmul.f32 %v1327, %v2642
    %v2902 = vmul.f32 %v1334, %v2646
    %vm2903 = vcmask 257024
    %v2904 = vsel %vm2903, %v2775, 0.0
    %v2905 = vsel %vm2903, %v2776, 0.0
    %v2906 = vadd.f32 %v2904, %v2905
    %v2907 = vsel %vm2903, %v2777, 0.0
    %v2908 = vadd.f32 %v2906, %v2907
    %v2909 = vsel %vm2903, %v2778, 0.0
    %v2910 = vadd.f32 %v2908, %v2909
    %v2911 = vsel %vm2903, %v2779, 0.0
    %v2912 = vadd.f32 %v2910, %v2911
    %v2913 = vsel %vm2903, %v2780, 0.0
    %v2914 = vadd.f32 %v2912, %v2913
    %v2915 = vsel %vm2903, %v2781, 0.0
    %v2916 = vadd.f32 %v2914, %v2915
    %v2917 = vsel %vm2903, %v2782, 0.0
    %v2918 = vadd.f32 %v2916, %v2917
    %v2919 = vsel %vm2903, %v2783, 0.0
    %v2920 = vsel %vm2903, %v2784, 0.0
    %v2921 = vadd.f32 %v2919, %v2920
    %v2922 = vsel %vm2903, %v2785, 0.0
    %v2923 = vadd.f32 %v2921, %v2922
    %v2924 = vsel %vm2903, %v2786, 0.0
    %v2925 = vadd.f32 %v2923, %v2924
    %v2926 = vsel %vm2903, %v2787, 0.0
    %v2927 = vadd.f32 %v2925, %v2926
    %v2928 = vsel %vm2903, %v2788, 0.0
    %v2929 = vadd.f32 %v2927, %v2928
    %v2930 = vsel %vm2903, %v2789, 0.0
    %v2931 = vadd.f32 %v2929, %v2930
    %v2932 = vsel %vm2903, %v2790, 0.0
    %v2933 = vadd.f32 %v2931, %v2932
    %v2934 = vsel %vm2903, %v2791, 0.0
    %v2935 = vsel %vm2903, %v2792, 0.0
    %v2936 = vadd.f32 %v2934, %v2935
    %v2937 = vsel %vm2903, %v2793, 0.0
    %v2938 = vadd.f32 %v2936, %v2937
    %v2939 = vsel %vm2903, %v2794, 0.0
    %v2940 = vadd.f32 %v2938, %v2939
    %v2941 = vsel %vm2903, %v2795, 0.0
    %v2942 = vadd.f32 %v2940, %v2941
    %v2943 = vsel %vm2903, %v2796, 0.0
    %v2944 = vadd.f32 %v2942, %v2943
    %v2945 = vsel %vm2903, %v2797, 0.0
    %v2946 = vadd.f32 %v2944, %v2945
    %v2947 = vsel %vm2903, %v2798, 0.0
    %v2948 = vadd.f32 %v2946, %v2947
    %v2949 = vsel %vm2903, %v2799, 0.0
    %v2950 = vsel %vm2903, %v2800, 0.0
    %v2951 = vadd.f32 %v2949, %v2950
    %v2952 = vsel %vm2903, %v2801, 0.0
    %v2953 = vadd.f32 %v2951, %v2952
    %v2954 = vsel %vm2903, %v2802, 0.0
    %v2955 = vadd.f32 %v2953, %v2954
    %v2956 = vsel %vm2903, %v2803, 0.0
    %v2957 = vadd.f32 %v2955, %v2956
    %v2958 = vsel %vm2903, %v2804, 0.0
    %v2959 = vadd.f32 %v2957, %v2958
    %v2960 = vsel %vm2903, %v2805, 0.0
    %v2961 = vadd.f32 %v2959, %v2960
    %v2962 = vsel %vm2903, %v2806, 0.0
    %v2963 = vadd.f32 %v2961, %v2962
    %v2964 = vsel %vm2903, %v2807, 0.0
    %v2965 = vsel %vm2903, %v2808, 0.0
    %v2966 = vadd.f32 %v2964, %v2965
    %v2967 = vsel %vm2903, %v2809, 0.0
    %v2968 = vadd.f32 %v2966, %v2967
    %v2969 = vsel %vm2903, %v2810, 0.0
    %v2970 = vadd.f32 %v2968, %v2969
    %v2971 = vsel %vm2903, %v2811, 0.0
    %v2972 = vadd.f32 %v2970, %v2971
    %v2973 = vsel %vm2903, %v2812, 0.0
    %v2974 = vadd.f32 %v2972, %v2973
    %v2975 = vsel %vm2903, %v2813, 0.0
    %v2976 = vadd.f32 %v2974, %v2975
    %v2977 = vsel %vm2903, %v2814, 0.0
    %v2978 = vadd.f32 %v2976, %v2977
    %v2979 = vsel %vm2903, %v2815, 0.0
    %v2980 = vsel %vm2903, %v2816, 0.0
    %v2981 = vadd.f32 %v2979, %v2980
    %v2982 = vsel %vm2903, %v2817, 0.0
    %v2983 = vadd.f32 %v2981, %v2982
    %v2984 = vsel %vm2903, %v2818, 0.0
    %v2985 = vadd.f32 %v2983, %v2984
    %v2986 = vsel %vm2903, %v2819, 0.0
    %v2987 = vadd.f32 %v2985, %v2986
    %v2988 = vsel %vm2903, %v2820, 0.0
    %v2989 = vadd.f32 %v2987, %v2988
    %v2990 = vsel %vm2903, %v2821, 0.0
    %v2991 = vadd.f32 %v2989, %v2990
    %v2992 = vsel %vm2903, %v2822, 0.0
    %v2993 = vadd.f32 %v2991, %v2992
    %v2994 = vsel %vm2903, %v2823, 0.0
    %v2995 = vsel %vm2903, %v2824, 0.0
    %v2996 = vadd.f32 %v2994, %v2995
    %v2997 = vsel %vm2903, %v2825, 0.0
    %v2998 = vadd.f32 %v2996, %v2997
    %v2999 = vsel %vm2903, %v2826, 0.0
    %v3000 = vadd.f32 %v2998, %v2999
    %v3001 = vsel %vm2903, %v2827, 0.0
    %v3002 = vadd.f32 %v3000, %v3001
    %v3003 = vsel %vm2903, %v2828, 0.0
    %v3004 = vadd.f32 %v3002, %v3003
    %v3005 = vsel %vm2903, %v2829, 0.0
    %v3006 = vadd.f32 %v3004, %v3005
    %v3007 = vsel %vm2903, %v2830, 0.0
    %v3008 = vadd.f32 %v3006, %v3007
    %v3009 = vsel %vm2903, %v2831, 0.0
    %v3010 = vsel %vm2903, %v2832, 0.0
    %v3011 = vadd.f32 %v3009, %v3010
    %v3012 = vsel %vm2903, %v2833, 0.0
    %v3013 = vadd.f32 %v3011, %v3012
    %v3014 = vsel %vm2903, %v2834, 0.0
    %v3015 = vadd.f32 %v3013, %v3014
    %v3016 = vsel %vm2903, %v2835, 0.0
    %v3017 = vadd.f32 %v3015, %v3016
    %v3018 = vsel %vm2903, %v2836, 0.0
    %v3019 = vadd.f32 %v3017, %v3018
    %v3020 = vsel %vm2903, %v2837, 0.0
    %v3021 = vadd.f32 %v3019, %v3020
    %v3022 = vsel %vm2903, %v2838, 0.0
    %v3023 = vadd.f32 %v3021, %v3022
    %v3024 = vsel %vm2903, %v2839, 0.0
    %v3025 = vsel %vm2903, %v2840, 0.0
    %v3026 = vadd.f32 %v3024, %v3025
    %v3027 = vsel %vm2903, %v2841, 0.0
    %v3028 = vadd.f32 %v3026, %v3027
    %v3029 = vsel %vm2903, %v2842, 0.0
    %v3030 = vadd.f32 %v3028, %v3029
    %v3031 = vsel %vm2903, %v2843, 0.0
    %v3032 = vadd.f32 %v3030, %v3031
    %v3033 = vsel %vm2903, %v2844, 0.0
    %v3034 = vadd.f32 %v3032, %v3033
    %v3035 = vsel %vm2903, %v2845, 0.0
    %v3036 = vadd.f32 %v3034, %v3035
    %v3037 = vsel %vm2903, %v2846, 0.0
    %v3038 = vadd.f32 %v3036, %v3037
    %v3039 = vsel %vm2903, %v2847, 0.0
    %v3040 = vsel %vm2903, %v2848, 0.0
    %v3041 = vadd.f32 %v3039, %v3040
    %v3042 = vsel %vm2903, %v2849, 0.0
    %v3043 = vadd.f32 %v3041, %v3042
    %v3044 = vsel %vm2903, %v2850, 0.0
    %v3045 = vadd.f32 %v3043, %v3044
    %v3046 = vsel %vm2903, %v2851, 0.0
    %v3047 = vadd.f32 %v3045, %v3046
    %v3048 = vsel %vm2903, %v2852, 0.0
    %v3049 = vadd.f32 %v3047, %v3048
    %v3050 = vsel %vm2903, %v2853, 0.0
    %v3051 = vadd.f32 %v3049, %v3050
    %v3052 = vsel %vm2903, %v2854, 0.0
    %v3053 = vadd.f32 %v3051, %v3052
    %v3054 = vsel %vm2903, %v2855, 0.0
    %v3055 = vsel %vm2903, %v2856, 0.0
    %v3056 = vadd.f32 %v3054, %v3055
    %v3057 = vsel %vm2903, %v2857, 0.0
    %v3058 = vadd.f32 %v3056, %v3057
    %v3059 = vsel %vm2903, %v2858, 0.0
    %v3060 = vadd.f32 %v3058, %v3059
    %v3061 = vsel %vm2903, %v2859, 0.0
    %v3062 = vadd.f32 %v3060, %v3061
    %v3063 = vsel %vm2903, %v2860, 0.0
    %v3064 = vadd.f32 %v3062, %v3063
    %v3065 = vsel %vm2903, %v2861, 0.0
    %v3066 = vadd.f32 %v3064, %v3065
    %v3067 = vsel %vm2903, %v2862, 0.0
    %v3068 = vadd.f32 %v3066, %v3067
    %v3069 = vsel %vm2903, %v2863, 0.0
    %v3070 = vsel %vm2903, %v2864, 0.0
    %v3071 = vadd.f32 %v3069, %v3070
    %v3072 = vsel %vm2903, %v2865, 0.0
    %v3073 = vadd.f32 %v3071, %v3072
    %v3074 = vsel %vm2903, %v2866, 0.0
    %v3075 = vadd.f32 %v3073, %v3074
    %v3076 = vsel %vm2903, %v2867, 0.0
    %v3077 = vadd.f32 %v3075, %v3076
    %v3078 = vsel %vm2903, %v2868, 0.0
    %v3079 = vadd.f32 %v3077, %v3078
    %v3080 = vsel %vm2903, %v2869, 0.0
    %v3081 = vadd.f32 %v3079, %v3080
    %v3082 = vsel %vm2903, %v2870, 0.0
    %v3083 = vadd.f32 %v3081, %v3082
    %v3084 = vsel %vm2903, %v2871, 0.0
    %v3085 = vsel %vm2903, %v2872, 0.0
    %v3086 = vadd.f32 %v3084, %v3085
    %v3087 = vsel %vm2903, %v2873, 0.0
    %v3088 = vadd.f32 %v3086, %v3087
    %v3089 = vsel %vm2903, %v2874, 0.0
    %v3090 = vadd.f32 %v3088, %v3089
    %v3091 = vsel %vm2903, %v2875, 0.0
    %v3092 = vadd.f32 %v3090, %v3091
    %v3093 = vsel %vm2903, %v2876, 0.0
    %v3094 = vadd.f32 %v3092, %v3093
    %v3095 = vsel %vm2903, %v2877, 0.0
    %v3096 = vadd.f32 %v3094, %v3095
    %v3097 = vsel %vm2903, %v2878, 0.0
    %v3098 = vadd.f32 %v3096, %v3097
    %v3099 = vsel %vm2903, %v2879, 0.0
    %v3100 = vsel %vm2903, %v2880, 0.0
    %v3101 = vadd.f32 %v3099, %v3100
    %v3102 = vsel %vm2903, %v2881, 0.0
    %v3103 = vadd.f32 %v3101, %v3102
    %v3104 = vsel %vm2903, %v2882, 0.0
    %v3105 = vadd.f32 %v3103, %v3104
    %v3106 = vsel %vm2903, %v2883, 0.0
    %v3107 = vadd.f32 %v3105, %v3106
    %v3108 = vsel %vm2903, %v2884, 0.0
    %v3109 = vadd.f32 %v3107, %v3108
    %v3110 = vsel %vm2903, %v2885, 0.0
    %v3111 = vadd.f32 %v3109, %v3110
    %v3112 = vsel %vm2903, %v2886, 0.0
    %v3113 = vadd.f32 %v3111, %v3112
    %v3114 = vsel %vm2903, %v2887, 0.0
    %v3115 = vsel %vm2903, %v2888, 0.0
    %v3116 = vadd.f32 %v3114, %v3115
    %v3117 = vsel %vm2903, %v2889, 0.0
    %v3118 = vadd.f32 %v3116, %v3117
    %v3119 = vsel %vm2903, %v2890, 0.0
    %v3120 = vadd.f32 %v3118, %v3119
    %v3121 = vsel %vm2903, %v2891, 0.0
    %v3122 = vadd.f32 %v3120, %v3121
    %v3123 = vsel %vm2903, %v2892, 0.0
    %v3124 = vadd.f32 %v3122, %v3123
    %v3125 = vsel %vm2903, %v2893, 0.0
    %v3126 = vadd.f32 %v3124, %v3125
    %v3127 = vsel %vm2903, %v2894, 0.0
    %v3128 = vadd.f32 %v3126, %v3127
    %v3129 = vsel %vm2903, %v2895, 0.0
    %v3130 = vsel %vm2903, %v2896, 0.0
    %v3131 = vadd.f32 %v3129, %v3130
    %v3132 = vsel %vm2903, %v2897, 0.0
    %v3133 = vadd.f32 %v3131, %v3132
    %v3134 = vsel %vm2903, %v2898, 0.0
    %v3135 = vadd.f32 %v3133, %v3134
    %v3136 = vsel %vm2903, %v2899, 0.0
    %v3137 = vadd.f32 %v3135, %v3136
    %v3138 = vsel %vm2903, %v2900, 0.0
    %v3139 = vadd.f32 %v3137, %v3138
    %v3140 = vsel %vm2903, %v2901, 0.0
    %v3141 = vadd.f32 %v3139, %v3140
    %v3142 = vsel %vm2903, %v2902, 0.0
    %v3143 = vadd.f32 %v3141, %v3142
    %v3144 = vlaneseq
    %v3145 = vshrl.u32 %v3144, 7
    %v3146 = vsub.s32 0, %v3145
    %v3147 = vrot.slane %v2918, %v3146
    %3149 = vbcast.lane.b32.xlu0 %v3147, 256
    %v3150 = vpop.permute.xlu0 %3149
    %v3151 = vlaneseq
    %v3152 = vshrl.u32 %v3151, 7
    %v3153 = vsub.s32 1, %v3152
    %v3154 = vrot.slane %v2918, %v3153
    %3156 = vbcast.lane.b32.xlu0 %v3154, 256
    %v3157 = vpop.permute.xlu0 %3156
    %v3158 = vlaneseq
    %v3159 = vshrl.u32 %v3158, 7
    %v3160 = vsub.s32 2, %v3159
    %v3161 = vrot.slane %v2918, %v3160
    %3163 = vbcast.lane.b32.xlu0 %v3161, 256
    %v3164 = vpop.permute.xlu0 %3163
    %v3165 = vlaneseq
    %v3166 = vshrl.u32 %v3165, 7
    %v3167 = vsub.s32 3, %v3166
    %v3168 = vrot.slane %v2918, %v3167
    %3170 = vbcast.lane.b32.xlu0 %v3168, 256
    %v3171 = vpop.permute.xlu0 %3170
    %v3172 = vlaneseq
    %v3173 = vshrl.u32 %v3172, 7
    %v3174 = vsub.s32 0, %v3173
    %v3175 = vrot.slane %v2933, %v3174
    %3177 = vbcast.lane.b32.xlu0 %v3175, 256
    %v3178 = vpop.permute.xlu0 %3177
    %v3179 = vlaneseq
    %v3180 = vshrl.u32 %v3179, 7
    %v3181 = vsub.s32 1, %v3180
    %v3182 = vrot.slane %v2933, %v3181
    %3184 = vbcast.lane.b32.xlu0 %v3182, 256
    %v3185 = vpop.permute.xlu0 %3184
    %v3186 = vlaneseq
    %v3187 = vshrl.u32 %v3186, 7
    %v3188 = vsub.s32 2, %v3187
    %v3189 = vrot.slane %v2933, %v3188
    %3191 = vbcast.lane.b32.xlu0 %v3189, 256
    %v3192 = vpop.permute.xlu0 %3191
    %v3193 = vlaneseq
    %v3194 = vshrl.u32 %v3193, 7
    %v3195 = vsub.s32 3, %v3194
    %v3196 = vrot.slane %v2933, %v3195
    %3198 = vbcast.lane.b32.xlu0 %v3196, 256
    %v3199 = vpop.permute.xlu0 %3198
    %v3200 = vlaneseq
    %v3201 = vshrl.u32 %v3200, 7
    %v3202 = vsub.s32 0, %v3201
    %v3203 = vrot.slane %v2948, %v3202
    %3205 = vbcast.lane.b32.xlu0 %v3203, 256
    %v3206 = vpop.permute.xlu0 %3205
    %v3207 = vlaneseq
    %v3208 = vshrl.u32 %v3207, 7
    %v3209 = vsub.s32 1, %v3208
    %v3210 = vrot.slane %v2948, %v3209
    %3212 = vbcast.lane.b32.xlu0 %v3210, 256
    %v3213 = vpop.permute.xlu0 %3212
    %v3214 = vlaneseq
    %v3215 = vshrl.u32 %v3214, 7
    %v3216 = vsub.s32 2, %v3215
    %v3217 = vrot.slane %v2948, %v3216
    %3219 = vbcast.lane.b32.xlu0 %v3217, 256
    %v3220 = vpop.permute.xlu0 %3219
    %v3221 = vlaneseq
    %v3222 = vshrl.u32 %v3221, 7
    %v3223 = vsub.s32 3, %v3222
    %v3224 = vrot.slane %v2948, %v3223
    %3226 = vbcast.lane.b32.xlu0 %v3224, 256
    %v3227 = vpop.permute.xlu0 %3226
    %v3228 = vlaneseq
    %v3229 = vshrl.u32 %v3228, 7
    %v3230 = vsub.s32 0, %v3229
    %v3231 = vrot.slane %v2963, %v3230
    %3233 = vbcast.lane.b32.xlu0 %v3231, 256
    %v3234 = vpop.permute.xlu0 %3233
    %v3235 = vlaneseq
    %v3236 = vshrl.u32 %v3235, 7
    %v3237 = vsub.s32 1, %v3236
    %v3238 = vrot.slane %v2963, %v3237
    %3240 = vbcast.lane.b32.xlu0 %v3238, 256
    %v3241 = vpop.permute.xlu0 %3240
    %v3242 = vlaneseq
    %v3243 = vshrl.u32 %v3242, 7
    %v3244 = vsub.s32 2, %v3243
    %v3245 = vrot.slane %v2963, %v3244
    %3247 = vbcast.lane.b32.xlu0 %v3245, 256
    %v3248 = vpop.permute.xlu0 %3247
    %v3249 = vlaneseq
    %v3250 = vshrl.u32 %v3249, 7
    %v3251 = vsub.s32 3, %v3250
    %v3252 = vrot.slane %v2963, %v3251
    %3254 = vbcast.lane.b32.xlu0 %v3252, 256
    %v3255 = vpop.permute.xlu0 %3254
    %v3256 = vlaneseq
    %v3257 = vshrl.u32 %v3256, 7
    %v3258 = vsub.s32 0, %v3257
    %v3259 = vrot.slane %v2978, %v3258
    %3261 = vbcast.lane.b32.xlu0 %v3259, 256
    %v3262 = vpop.permute.xlu0 %3261
    %v3263 = vlaneseq
    %v3264 = vshrl.u32 %v3263, 7
    %v3265 = vsub.s32 1, %v3264
    %v3266 = vrot.slane %v2978, %v3265
    %3268 = vbcast.lane.b32.xlu0 %v3266, 256
    %v3269 = vpop.permute.xlu0 %3268
    %v3270 = vlaneseq
    %v3271 = vshrl.u32 %v3270, 7
    %v3272 = vsub.s32 2, %v3271
    %v3273 = vrot.slane %v2978, %v3272
    %3275 = vbcast.lane.b32.xlu0 %v3273, 256
    %v3276 = vpop.permute.xlu0 %3275
    %v3277 = vlaneseq
    %v3278 = vshrl.u32 %v3277, 7
    %v3279 = vsub.s32 3, %v3278
    %v3280 = vrot.slane %v2978, %v3279
    %3282 = vbcast.lane.b32.xlu0 %v3280, 256
    %v3283 = vpop.permute.xlu0 %3282
    %v3284 = vlaneseq
    %v3285 = vshrl.u32 %v3284, 7
    %v3286 = vsub.s32 0, %v3285
    %v3287 = vrot.slane %v2993, %v3286
    %3289 = vbcast.lane.b32.xlu0 %v3287, 256
    %v3290 = vpop.permute.xlu0 %3289
    %v3291 = vlaneseq
    %v3292 = vshrl.u32 %v3291, 7
    %v3293 = vsub.s32 1, %v3292
    %v3294 = vrot.slane %v2993, %v3293
    %3296 = vbcast.lane.b32.xlu0 %v3294, 256
    %v3297 = vpop.permute.xlu0 %3296
    %v3298 = vlaneseq
    %v3299 = vshrl.u32 %v3298, 7
    %v3300 = vsub.s32 2, %v3299
    %v3301 = vrot.slane %v2993, %v3300
    %3303 = vbcast.lane.b32.xlu0 %v3301, 256
    %v3304 = vpop.permute.xlu0 %3303
    %v3305 = vlaneseq
    %v3306 = vshrl.u32 %v3305, 7
    %v3307 = vsub.s32 3, %v3306
    %v3308 = vrot.slane %v2993, %v3307
    %3310 = vbcast.lane.b32.xlu0 %v3308, 256
    %v3311 = vpop.permute.xlu0 %3310
    %v3312 = vlaneseq
    %v3313 = vshrl.u32 %v3312, 7
    %v3314 = vsub.s32 0, %v3313
    %v3315 = vrot.slane %v3008, %v3314
    %3317 = vbcast.lane.b32.xlu0 %v3315, 256
    %v3318 = vpop.permute.xlu0 %3317
    %v3319 = vlaneseq
    %v3320 = vshrl.u32 %v3319, 7
    %v3321 = vsub.s32 1, %v3320
    %v3322 = vrot.slane %v3008, %v3321
    %3324 = vbcast.lane.b32.xlu0 %v3322, 256
    %v3325 = vpop.permute.xlu0 %3324
    %v3326 = vlaneseq
    %v3327 = vshrl.u32 %v3326, 7
    %v3328 = vsub.s32 2, %v3327
    %v3329 = vrot.slane %v3008, %v3328
    %3331 = vbcast.lane.b32.xlu0 %v3329, 256
    %v3332 = vpop.permute.xlu0 %3331
    %v3333 = vlaneseq
    %v3334 = vshrl.u32 %v3333, 7
    %v3335 = vsub.s32 3, %v3334
    %v3336 = vrot.slane %v3008, %v3335
    %3338 = vbcast.lane.b32.xlu0 %v3336, 256
    %v3339 = vpop.permute.xlu0 %3338
    %v3340 = vlaneseq
    %v3341 = vshrl.u32 %v3340, 7
    %v3342 = vsub.s32 0, %v3341
    %v3343 = vrot.slane %v3023, %v3342
    %3345 = vbcast.lane.b32.xlu0 %v3343, 256
    %v3346 = vpop.permute.xlu0 %3345
    %v3347 = vlaneseq
    %v3348 = vshrl.u32 %v3347, 7
    %v3349 = vsub.s32 1, %v3348
    %v3350 = vrot.slane %v3023, %v3349
    %3352 = vbcast.lane.b32.xlu0 %v3350, 256
    %v3353 = vpop.permute.xlu0 %3352
    %v3354 = vlaneseq
    %v3355 = vshrl.u32 %v3354, 7
    %v3356 = vsub.s32 2, %v3355
    %v3357 = vrot.slane %v3023, %v3356
    %3359 = vbcast.lane.b32.xlu0 %v3357, 256
    %v3360 = vpop.permute.xlu0 %3359
    %v3361 = vlaneseq
    %v3362 = vshrl.u32 %v3361, 7
    %v3363 = vsub.s32 3, %v3362
    %v3364 = vrot.slane %v3023, %v3363
    %3366 = vbcast.lane.b32.xlu0 %v3364, 256
    %v3367 = vpop.permute.xlu0 %3366
    %v3368 = vlaneseq
    %v3369 = vshrl.u32 %v3368, 7
    %v3370 = vsub.s32 0, %v3369
    %v3371 = vrot.slane %v3038, %v3370
    %3373 = vbcast.lane.b32.xlu0 %v3371, 256
    %v3374 = vpop.permute.xlu0 %3373
    %v3375 = vlaneseq
    %v3376 = vshrl.u32 %v3375, 7
    %v3377 = vsub.s32 1, %v3376
    %v3378 = vrot.slane %v3038, %v3377
    %3380 = vbcast.lane.b32.xlu0 %v3378, 256
    %v3381 = vpop.permute.xlu0 %3380
    %v3382 = vlaneseq
    %v3383 = vshrl.u32 %v3382, 7
    %v3384 = vsub.s32 2, %v3383
    %v3385 = vrot.slane %v3038, %v3384
    %3387 = vbcast.lane.b32.xlu0 %v3385, 256
    %v3388 = vpop.permute.xlu0 %3387
    %v3389 = vlaneseq
    %v3390 = vshrl.u32 %v3389, 7
    %v3391 = vsub.s32 3, %v3390
    %v3392 = vrot.slane %v3038, %v3391
    %3394 = vbcast.lane.b32.xlu0 %v3392, 256
    %v3395 = vpop.permute.xlu0 %3394
    %v3396 = vlaneseq
    %v3397 = vshrl.u32 %v3396, 7
    %v3398 = vsub.s32 0, %v3397
    %v3399 = vrot.slane %v3053, %v3398
    %3401 = vbcast.lane.b32.xlu0 %v3399, 256
    %v3402 = vpop.permute.xlu0 %3401
    %v3403 = vlaneseq
    %v3404 = vshrl.u32 %v3403, 7
    %v3405 = vsub.s32 1, %v3404
    %v3406 = vrot.slane %v3053, %v3405
    %3408 = vbcast.lane.b32.xlu0 %v3406, 256
    %v3409 = vpop.permute.xlu0 %3408
    %v3410 = vlaneseq
    %v3411 = vshrl.u32 %v3410, 7
    %v3412 = vsub.s32 2, %v3411
    %v3413 = vrot.slane %v3053, %v3412
    %3415 = vbcast.lane.b32.xlu0 %v3413, 256
    %v3416 = vpop.permute.xlu0 %3415
    %v3417 = vlaneseq
    %v3418 = vshrl.u32 %v3417, 7
    %v3419 = vsub.s32 3, %v3418
    %v3420 = vrot.slane %v3053, %v3419
    %3422 = vbcast.lane.b32.xlu0 %v3420, 256
    %v3423 = vpop.permute.xlu0 %3422
    %v3424 = vlaneseq
    %v3425 = vshrl.u32 %v3424, 7
    %v3426 = vsub.s32 0, %v3425
    %v3427 = vrot.slane %v3068, %v3426
    %3429 = vbcast.lane.b32.xlu0 %v3427, 256
    %v3430 = vpop.permute.xlu0 %3429
    %v3431 = vlaneseq
    %v3432 = vshrl.u32 %v3431, 7
    %v3433 = vsub.s32 1, %v3432
    %v3434 = vrot.slane %v3068, %v3433
    %3436 = vbcast.lane.b32.xlu0 %v3434, 256
    %v3437 = vpop.permute.xlu0 %3436
    %v3438 = vlaneseq
    %v3439 = vshrl.u32 %v3438, 7
    %v3440 = vsub.s32 2, %v3439
    %v3441 = vrot.slane %v3068, %v3440
    %3443 = vbcast.lane.b32.xlu0 %v3441, 256
    %v3444 = vpop.permute.xlu0 %3443
    %v3445 = vlaneseq
    %v3446 = vshrl.u32 %v3445, 7
    %v3447 = vsub.s32 3, %v3446
    %v3448 = vrot.slane %v3068, %v3447
    %3450 = vbcast.lane.b32.xlu0 %v3448, 256
    %v3451 = vpop.permute.xlu0 %3450
    %v3452 = vlaneseq
    %v3453 = vshrl.u32 %v3452, 7
    %v3454 = vsub.s32 0, %v3453
    %v3455 = vrot.slane %v3083, %v3454
    %3457 = vbcast.lane.b32.xlu0 %v3455, 256
    %v3458 = vpop.permute.xlu0 %3457
    %v3459 = vlaneseq
    %v3460 = vshrl.u32 %v3459, 7
    %v3461 = vsub.s32 1, %v3460
    %v3462 = vrot.slane %v3083, %v3461
    %3464 = vbcast.lane.b32.xlu0 %v3462, 256
    %v3465 = vpop.permute.xlu0 %3464
    %v3466 = vlaneseq
    %v3467 = vshrl.u32 %v3466, 7
    %v3468 = vsub.s32 2, %v3467
    %v3469 = vrot.slane %v3083, %v3468
    %3471 = vbcast.lane.b32.xlu0 %v3469, 256
    %v3472 = vpop.permute.xlu0 %3471
    %v3473 = vlaneseq
    %v3474 = vshrl.u32 %v3473, 7
    %v3475 = vsub.s32 3, %v3474
    %v3476 = vrot.slane %v3083, %v3475
    %3478 = vbcast.lane.b32.xlu0 %v3476, 256
    %v3479 = vpop.permute.xlu0 %3478
    %v3480 = vlaneseq
    %v3481 = vshrl.u32 %v3480, 7
    %v3482 = vsub.s32 0, %v3481
    %v3483 = vrot.slane %v3098, %v3482
    %3485 = vbcast.lane.b32.xlu0 %v3483, 256
    %v3486 = vpop.permute.xlu0 %3485
    %v3487 = vlaneseq
    %v3488 = vshrl.u32 %v3487, 7
    %v3489 = vsub.s32 1, %v3488
    %v3490 = vrot.slane %v3098, %v3489
    %3492 = vbcast.lane.b32.xlu0 %v3490, 256
    %v3493 = vpop.permute.xlu0 %3492
    %v3494 = vlaneseq
    %v3495 = vshrl.u32 %v3494, 7
    %v3496 = vsub.s32 2, %v3495
    %v3497 = vrot.slane %v3098, %v3496
    %3499 = vbcast.lane.b32.xlu0 %v3497, 256
    %v3500 = vpop.permute.xlu0 %3499
    %v3501 = vlaneseq
    %v3502 = vshrl.u32 %v3501, 7
    %v3503 = vsub.s32 3, %v3502
    %v3504 = vrot.slane %v3098, %v3503
    %3506 = vbcast.lane.b32.xlu0 %v3504, 256
    %v3507 = vpop.permute.xlu0 %3506
    %v3508 = vlaneseq
    %v3509 = vshrl.u32 %v3508, 7
    %v3510 = vsub.s32 0, %v3509
    %v3511 = vrot.slane %v3113, %v3510
    %3513 = vbcast.lane.b32.xlu0 %v3511, 256
    %v3514 = vpop.permute.xlu0 %3513
    %v3515 = vlaneseq
    %v3516 = vshrl.u32 %v3515, 7
    %v3517 = vsub.s32 1, %v3516
    %v3518 = vrot.slane %v3113, %v3517
    %3520 = vbcast.lane.b32.xlu0 %v3518, 256
    %v3521 = vpop.permute.xlu0 %3520
    %v3522 = vlaneseq
    %v3523 = vshrl.u32 %v3522, 7
    %v3524 = vsub.s32 2, %v3523
    %v3525 = vrot.slane %v3113, %v3524
    %3527 = vbcast.lane.b32.xlu0 %v3525, 256
    %v3528 = vpop.permute.xlu0 %3527
    %v3529 = vlaneseq
    %v3530 = vshrl.u32 %v3529, 7
    %v3531 = vsub.s32 3, %v3530
    %v3532 = vrot.slane %v3113, %v3531
    %3534 = vbcast.lane.b32.xlu0 %v3532, 256
    %v3535 = vpop.permute.xlu0 %3534
    %v3536 = vlaneseq
    %v3537 = vshrl.u32 %v3536, 7
    %v3538 = vsub.s32 0, %v3537
    %v3539 = vrot.slane %v3128, %v3538
    %3541 = vbcast.lane.b32.xlu0 %v3539, 256
    %v3542 = vpop.permute.xlu0 %3541
    %v3543 = vlaneseq
    %v3544 = vshrl.u32 %v3543, 7
    %v3545 = vsub.s32 1, %v3544
    %v3546 = vrot.slane %v3128, %v3545
    %3548 = vbcast.lane.b32.xlu0 %v3546, 256
    %v3549 = vpop.permute.xlu0 %3548
    %v3550 = vlaneseq
    %v3551 = vshrl.u32 %v3550, 7
    %v3552 = vsub.s32 2, %v3551
    %v3553 = vrot.slane %v3128, %v3552
    %3555 = vbcast.lane.b32.xlu0 %v3553, 256
    %v3556 = vpop.permute.xlu0 %3555
    %v3557 = vlaneseq
    %v3558 = vshrl.u32 %v3557, 7
    %v3559 = vsub.s32 3, %v3558
    %v3560 = vrot.slane %v3128, %v3559
    %3562 = vbcast.lane.b32.xlu0 %v3560, 256
    %v3563 = vpop.permute.xlu0 %3562
    %v3564 = vlaneseq
    %v3565 = vshrl.u32 %v3564, 7
    %v3566 = vsub.s32 0, %v3565
    %v3567 = vrot.slane %v3143, %v3566
    %3569 = vbcast.lane.b32.xlu0 %v3567, 256
    %v3570 = vpop.permute.xlu0 %3569
    %v3571 = vlaneseq
    %v3572 = vshrl.u32 %v3571, 7
    %v3573 = vsub.s32 1, %v3572
    %v3574 = vrot.slane %v3143, %v3573
    %3576 = vbcast.lane.b32.xlu0 %v3574, 256
    %v3577 = vpop.permute.xlu0 %3576
    %v3578 = vlaneseq
    %v3579 = vshrl.u32 %v3578, 7
    %v3580 = vsub.s32 2, %v3579
    %v3581 = vrot.slane %v3143, %v3580
    %3583 = vbcast.lane.b32.xlu0 %v3581, 256
    %v3584 = vpop.permute.xlu0 %3583
    %v3585 = vlaneseq
    %v3586 = vshrl.u32 %v3585, 7
    %v3587 = vsub.s32 3, %v3586
    %v3588 = vrot.slane %v3143, %v3587
    %3590 = vbcast.lane.b32.xlu0 %v3588, 256
    %v3591 = vpop.permute.xlu0 %3590
    %v3609 = vunpack.c.l.s4 1966171168
    %v3610 = vunpack.c.0.s8 %v3609
    %v3611 = vlaneseq
    %v3612 = vshrl.u32 %v3611, 7
    %v3613 = vsub.s32 %v3610, %v3612
    %v3614 = vrot.slane %v2918, %v3613
    %v3615 = vcombine.high %v3614, %v3614
    %v3617 = vunpack.c.l.s4 1966171168
    %v3618 = vunpack.c.0.s8 %v3617
    %v3619 = vlaneseq
    %v3620 = vshrl.u32 %v3619, 7
    %v3621 = vsub.s32 %v3618, %v3620
    %v3622 = vrot.slane %v3614, %v3621
    %v3624 = vunpack.c.l.s4 1966171168
    %v3625 = vunpack.c.0.s8 %v3624
    %v3626 = vlaneseq
    %v3627 = vshrl.u32 %v3626, 7
    %v3628 = vsub.s32 %v3625, %v3627
    %v3629 = vrot.slane %v3615, %v3628
    %v3630 = vcombine.high %v3622, %v3622
    %v3631 = vcombine.high %v3629, %v3629
    %v3633 = vunpack.c.l.s4 1966171168
    %v3634 = vunpack.c.0.s8 %v3633
    %v3635 = vlaneseq
    %v3636 = vshrl.u32 %v3635, 7
    %v3637 = vsub.s32 %v3634, %v3636
    %v3638 = vrot.slane %v2933, %v3637
    %v3639 = vcombine.high %v3638, %v3638
    %v3641 = vunpack.c.l.s4 1966171168
    %v3642 = vunpack.c.0.s8 %v3641
    %v3643 = vlaneseq
    %v3644 = vshrl.u32 %v3643, 7
    %v3645 = vsub.s32 %v3642, %v3644
    %v3646 = vrot.slane %v3638, %v3645
    %v3648 = vunpack.c.l.s4 1966171168
    %v3649 = vunpack.c.0.s8 %v3648
    %v3650 = vlaneseq
    %v3651 = vshrl.u32 %v3650, 7
    %v3652 = vsub.s32 %v3649, %v3651
    %v3653 = vrot.slane %v3639, %v3652
    %v3654 = vcombine.high %v3646, %v3646
    %v3655 = vcombine.high %v3653, %v3653
    %v3657 = vunpack.c.l.s4 1966171168
    %v3658 = vunpack.c.0.s8 %v3657
    %v3659 = vlaneseq
    %v3660 = vshrl.u32 %v3659, 7
    %v3661 = vsub.s32 %v3658, %v3660
    %v3662 = vrot.slane %v2948, %v3661
    %v3663 = vcombine.high %v3662, %v3662
    %v3665 = vunpack.c.l.s4 1966171168
    %v3666 = vunpack.c.0.s8 %v3665
    %v3667 = vlaneseq
    %v3668 = vshrl.u32 %v3667, 7
    %v3669 = vsub.s32 %v3666, %v3668
    %v3670 = vrot.slane %v3662, %v3669
    %v3672 = vunpack.c.l.s4 1966171168
    %v3673 = vunpack.c.0.s8 %v3672
    %v3674 = vlaneseq
    %v3675 = vshrl.u32 %v3674, 7
    %v3676 = vsub.s32 %v3673, %v3675
    %v3677 = vrot.slane %v3663, %v3676
    %v3678 = vcombine.high %v3670, %v3670
    %v3679 = vcombine.high %v3677, %v3677
    %v3681 = vunpack.c.l.s4 1966171168
    %v3682 = vunpack.c.0.s8 %v3681
    %v3683 = vlaneseq
    %v3684 = vshrl.u32 %v3683, 7
    %v3685 = vsub.s32 %v3682, %v3684
    %v3686 = vrot.slane %v2963, %v3685
    %v3687 = vcombine.high %v3686, %v3686
    %v3689 = vunpack.c.l.s4 1966171168
    %v3690 = vunpack.c.0.s8 %v3689
    %v3691 = vlaneseq
    %v3692 = vshrl.u32 %v3691, 7
    %v3693 = vsub.s32 %v3690, %v3692
    %v3694 = vrot.slane %v3686, %v3693
    %v3696 = vunpack.c.l.s4 1966171168
    %v3697 = vunpack.c.0.s8 %v3696
    %v3698 = vlaneseq
    %v3699 = vshrl.u32 %v3698, 7
    %v3700 = vsub.s32 %v3697, %v3699
    %v3701 = vrot.slane %v3687, %v3700
    %v3702 = vcombine.high %v3694, %v3694
    %v3703 = vcombine.high %v3701, %v3701
    %v3705 = vunpack.c.l.s4 1966171168
    %v3706 = vunpack.c.0.s8 %v3705
    %v3707 = vlaneseq
    %v3708 = vshrl.u32 %v3707, 7
    %v3709 = vsub.s32 %v3706, %v3708
    %v3710 = vrot.slane %v2978, %v3709
    %v3711 = vcombine.high %v3710, %v3710
    %v3713 = vunpack.c.l.s4 1966171168
    %v3714 = vunpack.c.0.s8 %v3713
    %v3715 = vlaneseq
    %v3716 = vshrl.u32 %v3715, 7
    %v3717 = vsub.s32 %v3714, %v3716
    %v3718 = vrot.slane %v3710, %v3717
    %v3720 = vunpack.c.l.s4 1966171168
    %v3721 = vunpack.c.0.s8 %v3720
    %v3722 = vlaneseq
    %v3723 = vshrl.u32 %v3722, 7
    %v3724 = vsub.s32 %v3721, %v3723
    %v3725 = vrot.slane %v3711, %v3724
    %v3726 = vcombine.high %v3718, %v3718
    %v3727 = vcombine.high %v3725, %v3725
    %v3729 = vunpack.c.l.s4 1966171168
    %v3730 = vunpack.c.0.s8 %v3729
    %v3731 = vlaneseq
    %v3732 = vshrl.u32 %v3731, 7
    %v3733 = vsub.s32 %v3730, %v3732
    %v3734 = vrot.slane %v2993, %v3733
    %v3735 = vcombine.high %v3734, %v3734
    %v3737 = vunpack.c.l.s4 1966171168
    %v3738 = vunpack.c.0.s8 %v3737
    %v3739 = vlaneseq
    %v3740 = vshrl.u32 %v3739, 7
    %v3741 = vsub.s32 %v3738, %v3740
    %v3742 = vrot.slane %v3734, %v3741
    %v3744 = vunpack.c.l.s4 1966171168
    %v3745 = vunpack.c.0.s8 %v3744
    %v3746 = vlaneseq
    %v3747 = vshrl.u32 %v3746, 7
    %v3748 = vsub.s32 %v3745, %v3747
    %v3749 = vrot.slane %v3735, %v3748
    %v3750 = vcombine.high %v3742, %v3742
    %v3751 = vcombine.high %v3749, %v3749
    %v3753 = vunpack.c.l.s4 1966171168
    %v3754 = vunpack.c.0.s8 %v3753
    %v3755 = vlaneseq
    %v3756 = vshrl.u32 %v3755, 7
    %v3757 = vsub.s32 %v3754, %v3756
    %v3758 = vrot.slane %v3008, %v3757
    %v3759 = vcombine.high %v3758, %v3758
    %v3761 = vunpack.c.l.s4 1966171168
    %v3762 = vunpack.c.0.s8 %v3761
    %v3763 = vlaneseq
    %v3764 = vshrl.u32 %v3763, 7
    %v3765 = vsub.s32 %v3762, %v3764
    %v3766 = vrot.slane %v3758, %v3765
    %v3768 = vunpack.c.l.s4 1966171168
    %v3769 = vunpack.c.0.s8 %v3768
    %v3770 = vlaneseq
    %v3771 = vshrl.u32 %v3770, 7
    %v3772 = vsub.s32 %v3769, %v3771
    %v3773 = vrot.slane %v3759, %v3772
    %v3774 = vcombine.high %v3766, %v3766
    %v3775 = vcombine.high %v3773, %v3773
    %v3777 = vunpack.c.l.s4 1966171168
    %v3778 = vunpack.c.0.s8 %v3777
    %v3779 = vlaneseq
    %v3780 = vshrl.u32 %v3779, 7
    %v3781 = vsub.s32 %v3778, %v3780
    %v3782 = vrot.slane %v3023, %v3781
    %v3783 = vcombine.high %v3782, %v3782
    %v3785 = vunpack.c.l.s4 1966171168
    %v3786 = vunpack.c.0.s8 %v3785
    %v3787 = vlaneseq
    %v3788 = vshrl.u32 %v3787, 7
    %v3789 = vsub.s32 %v3786, %v3788
    %v3790 = vrot.slane %v3782, %v3789
    %v3792 = vunpack.c.l.s4 1966171168
    %v3793 = vunpack.c.0.s8 %v3792
    %v3794 = vlaneseq
    %v3795 = vshrl.u32 %v3794, 7
    %v3796 = vsub.s32 %v3793, %v3795
    %v3797 = vrot.slane %v3783, %v3796
    %v3798 = vcombine.high %v3790, %v3790
    %v3799 = vcombine.high %v3797, %v3797
    %v3801 = vunpack.c.l.s4 1966171168
    %v3802 = vunpack.c.0.s8 %v3801
    %v3803 = vlaneseq
    %v3804 = vshrl.u32 %v3803, 7
    %v3805 = vsub.s32 %v3802, %v3804
    %v3806 = vrot.slane %v3038, %v3805
    %v3807 = vcombine.high %v3806, %v3806
    %v3809 = vunpack.c.l.s4 1966171168
    %v3810 = vunpack.c.0.s8 %v3809
    %v3811 = vlaneseq
    %v3812 = vshrl.u32 %v3811, 7
    %v3813 = vsub.s32 %v3810, %v3812
    %v3814 = vrot.slane %v3806, %v3813
    %v3816 = vunpack.c.l.s4 1966171168
    %v3817 = vunpack.c.0.s8 %v3816
    %v3818 = vlaneseq
    %v3819 = vshrl.u32 %v3818, 7
    %v3820 = vsub.s32 %v3817, %v3819
    %v3821 = vrot.slane %v3807, %v3820
    %v3822 = vcombine.high %v3814, %v3814
    %v3823 = vcombine.high %v3821, %v3821
    %v3825 = vunpack.c.l.s4 1966171168
    %v3826 = vunpack.c.0.s8 %v3825
    %v3827 = vlaneseq
    %v3828 = vshrl.u32 %v3827, 7
    %v3829 = vsub.s32 %v3826, %v3828
    %v3830 = vrot.slane %v3053, %v3829
    %v3831 = vcombine.high %v3830, %v3830
    %v3833 = vunpack.c.l.s4 1966171168
    %v3834 = vunpack.c.0.s8 %v3833
    %v3835 = vlaneseq
    %v3836 = vshrl.u32 %v3835, 7
    %v3837 = vsub.s32 %v3834, %v3836
    %v3838 = vrot.slane %v3830, %v3837
    %v3840 = vunpack.c.l.s4 1966171168
    %v3841 = vunpack.c.0.s8 %v3840
    %v3842 = vlaneseq
    %v3843 = vshrl.u32 %v3842, 7
    %v3844 = vsub.s32 %v3841, %v3843
    %v3845 = vrot.slane %v3831, %v3844
    %v3846 = vcombine.high %v3838, %v3838
    %v3847 = vcombine.high %v3845, %v3845
    %v3849 = vunpack.c.l.s4 1966171168
    %v3850 = vunpack.c.0.s8 %v3849
    %v3851 = vlaneseq
    %v3852 = vshrl.u32 %v3851, 7
    %v3853 = vsub.s32 %v3850, %v3852
    %v3854 = vrot.slane %v3068, %v3853
    %v3855 = vcombine.high %v3854, %v3854
    %v3857 = vunpack.c.l.s4 1966171168
    %v3858 = vunpack.c.0.s8 %v3857
    %v3859 = vlaneseq
    %v3860 = vshrl.u32 %v3859, 7
    %v3861 = vsub.s32 %v3858, %v3860
    %v3862 = vrot.slane %v3854, %v3861
    %v3864 = vunpack.c.l.s4 1966171168
    %v3865 = vunpack.c.0.s8 %v3864
    %v3866 = vlaneseq
    %v3867 = vshrl.u32 %v3866, 7
    %v3868 = vsub.s32 %v3865, %v3867
    %v3869 = vrot.slane %v3855, %v3868
    %v3870 = vcombine.high %v3862, %v3862
    %v3871 = vcombine.high %v3869, %v3869
    %v3873 = vunpack.c.l.s4 1966171168
    %v3874 = vunpack.c.0.s8 %v3873
    %v3875 = vlaneseq
    %v3876 = vshrl.u32 %v3875, 7
    %v3877 = vsub.s32 %v3874, %v3876
    %v3878 = vrot.slane %v3083, %v3877
    %v3879 = vcombine.high %v3878, %v3878
    %v3881 = vunpack.c.l.s4 1966171168
    %v3882 = vunpack.c.0.s8 %v3881
    %v3883 = vlaneseq
    %v3884 = vshrl.u32 %v3883, 7
    %v3885 = vsub.s32 %v3882, %v3884
    %v3886 = vrot.slane %v3878, %v3885
    %v3888 = vunpack.c.l.s4 1966171168
    %v3889 = vunpack.c.0.s8 %v3888
    %v3890 = vlaneseq
    %v3891 = vshrl.u32 %v3890, 7
    %v3892 = vsub.s32 %v3889, %v3891
    %v3893 = vrot.slane %v3879, %v3892
    %v3894 = vcombine.high %v3886, %v3886
    %v3895 = vcombine.high %v3893, %v3893
    %v3897 = vunpack.c.l.s4 1966171168
    %v3898 = vunpack.c.0.s8 %v3897
    %v3899 = vlaneseq
    %v3900 = vshrl.u32 %v3899, 7
    %v3901 = vsub.s32 %v3898, %v3900
    %v3902 = vrot.slane %v3098, %v3901
    %v3903 = vcombine.high %v3902, %v3902
    %v3905 = vunpack.c.l.s4 1966171168
    %v3906 = vunpack.c.0.s8 %v3905
    %v3907 = vlaneseq
    %v3908 = vshrl.u32 %v3907, 7
    %v3909 = vsub.s32 %v3906, %v3908
    %v3910 = vrot.slane %v3902, %v3909
    %v3912 = vunpack.c.l.s4 1966171168
    %v3913 = vunpack.c.0.s8 %v3912
    %v3914 = vlaneseq
    %v3915 = vshrl.u32 %v3914, 7
    %v3916 = vsub.s32 %v3913, %v3915
    %v3917 = vrot.slane %v3903, %v3916
    %v3918 = vcombine.high %v3910, %v3910
    %v3919 = vcombine.high %v3917, %v3917
    %v3921 = vunpack.c.l.s4 1966171168
    %v3922 = vunpack.c.0.s8 %v3921
    %v3923 = vlaneseq
    %v3924 = vshrl.u32 %v3923, 7
    %v3925 = vsub.s32 %v3922, %v3924
    %v3926 = vrot.slane %v3113, %v3925
    %v3927 = vcombine.high %v3926, %v3926
    %v3929 = vunpack.c.l.s4 1966171168
    %v3930 = vunpack.c.0.s8 %v3929
    %v3931 = vlaneseq
    %v3932 = vshrl.u32 %v3931, 7
    %v3933 = vsub.s32 %v3930, %v3932
    %v3934 = vrot.slane %v3926, %v3933
    %v3936 = vunpack.c.l.s4 1966171168
    %v3937 = vunpack.c.0.s8 %v3936
    %v3938 = vlaneseq
    %v3939 = vshrl.u32 %v3938, 7
    %v3940 = vsub.s32 %v3937, %v3939
    %v3941 = vrot.slane %v3927, %v3940
    %v3942 = vcombine.high %v3934, %v3934
    %v3943 = vcombine.high %v3941, %v3941
    %v3945 = vunpack.c.l.s4 1966171168
    %v3946 = vunpack.c.0.s8 %v3945
    %v3947 = vlaneseq
    %v3948 = vshrl.u32 %v3947, 7
    %v3949 = vsub.s32 %v3946, %v3948
    %v3950 = vrot.slane %v3128, %v3949
    %v3951 = vcombine.high %v3950, %v3950
    %v3953 = vunpack.c.l.s4 1966171168
    %v3954 = vunpack.c.0.s8 %v3953
    %v3955 = vlaneseq
    %v3956 = vshrl.u32 %v3955, 7
    %v3957 = vsub.s32 %v3954, %v3956
    %v3958 = vrot.slane %v3950, %v3957
    %v3960 = vunpack.c.l.s4 1966171168
    %v3961 = vunpack.c.0.s8 %v3960
    %v3962 = vlaneseq
    %v3963 = vshrl.u32 %v3962, 7
    %v3964 = vsub.s32 %v3961, %v3963
    %v3965 = vrot.slane %v3951, %v3964
    %v3966 = vcombine.high %v3958, %v3958
    %v3967 = vcombine.high %v3965, %v3965
    %v3969 = vunpack.c.l.s4 1966171168
    %v3970 = vunpack.c.0.s8 %v3969
    %v3971 = vlaneseq
    %v3972 = vshrl.u32 %v3971, 7
    %v3973 = vsub.s32 %v3970, %v3972
    %v3974 = vrot.slane %v3143, %v3973
    %v3975 = vcombine.high %v3974, %v3974
    %v3977 = vunpack.c.l.s4 1966171168
    %v3978 = vunpack.c.0.s8 %v3977
    %v3979 = vlaneseq
    %v3980 = vshrl.u32 %v3979, 7
    %v3981 = vsub.s32 %v3978, %v3980
    %v3982 = vrot.slane %v3974, %v3981
    %v3984 = vunpack.c.l.s4 1966171168
    %v3985 = vunpack.c.0.s8 %v3984
    %v3986 = vlaneseq
    %v3987 = vshrl.u32 %v3986, 7
    %v3988 = vsub.s32 %v3985, %v3987
    %v3989 = vrot.slane %v3975, %v3988
    %v3990 = vcombine.high %v3982, %v3982
    %v3991 = vcombine.high %v3989, %v3989
    %v3992 = vlaneseq
    %v3993 = vshrl.u32 %v3992, 7
    %v3994 = vsub.s32 0, %v3993
    %v3995 = vrot.slane %v3622, %v3994
    %v3996 = vlaneseq
    %v3997 = vshrl.u32 %v3996, 7
    %v3998 = vsub.s32 0, %v3997
    %v3999 = vrot.slane %v3629, %v3998
    %v4000 = vlaneseq
    %v4001 = vshrl.u32 %v4000, 7
    %v4002 = vsub.s32 0, %v4001
    %v4003 = vrot.slane %v3630, %v4002
    %v4004 = vlaneseq
    %v4005 = vshrl.u32 %v4004, 7
    %v4006 = vsub.s32 0, %v4005
    %v4007 = vrot.slane %v3631, %v4006
    %v4008 = vlaneseq
    %v4009 = vshrl.u32 %v4008, 7
    %v4010 = vsub.s32 0, %v4009
    %v4011 = vrot.slane %v3646, %v4010
    %v4012 = vlaneseq
    %v4013 = vshrl.u32 %v4012, 7
    %v4014 = vsub.s32 0, %v4013
    %v4015 = vrot.slane %v3653, %v4014
    %v4016 = vlaneseq
    %v4017 = vshrl.u32 %v4016, 7
    %v4018 = vsub.s32 0, %v4017
    %v4019 = vrot.slane %v3654, %v4018
    %v4020 = vlaneseq
    %v4021 = vshrl.u32 %v4020, 7
    %v4022 = vsub.s32 0, %v4021
    %v4023 = vrot.slane %v3655, %v4022
    %v4024 = vlaneseq
    %v4025 = vshrl.u32 %v4024, 7
    %v4026 = vsub.s32 0, %v4025
    %v4027 = vrot.slane %v3670, %v4026
    %v4028 = vlaneseq
    %v4029 = vshrl.u32 %v4028, 7
    %v4030 = vsub.s32 0, %v4029
    %v4031 = vrot.slane %v3677, %v4030
    %v4032 = vlaneseq
    %v4033 = vshrl.u32 %v4032, 7
    %v4034 = vsub.s32 0, %v4033
    %v4035 = vrot.slane %v3678, %v4034
    %v4036 = vlaneseq
    %v4037 = vshrl.u32 %v4036, 7
    %v4038 = vsub.s32 0, %v4037
    %v4039 = vrot.slane %v3679, %v4038
    %v4040 = vlaneseq
    %v4041 = vshrl.u32 %v4040, 7
    %v4042 = vsub.s32 0, %v4041
    %v4043 = vrot.slane %v3694, %v4042
    %v4044 = vlaneseq
    %v4045 = vshrl.u32 %v4044, 7
    %v4046 = vsub.s32 0, %v4045
    %v4047 = vrot.slane %v3701, %v4046
    %v4048 = vlaneseq
    %v4049 = vshrl.u32 %v4048, 7
    %v4050 = vsub.s32 0, %v4049
    %v4051 = vrot.slane %v3702, %v4050
    %v4052 = vlaneseq
    %v4053 = vshrl.u32 %v4052, 7
    %v4054 = vsub.s32 0, %v4053
    %v4055 = vrot.slane %v3703, %v4054
    %v4056 = vlaneseq
    %v4057 = vshrl.u32 %v4056, 7
    %v4058 = vsub.s32 0, %v4057
    %v4059 = vrot.slane %v3718, %v4058
    %v4060 = vlaneseq
    %v4061 = vshrl.u32 %v4060, 7
    %v4062 = vsub.s32 0, %v4061
    %v4063 = vrot.slane %v3725, %v4062
    %v4064 = vlaneseq
    %v4065 = vshrl.u32 %v4064, 7
    %v4066 = vsub.s32 0, %v4065
    %v4067 = vrot.slane %v3726, %v4066
    %v4068 = vlaneseq
    %v4069 = vshrl.u32 %v4068, 7
    %v4070 = vsub.s32 0, %v4069
    %v4071 = vrot.slane %v3727, %v4070
    %v4072 = vlaneseq
    %v4073 = vshrl.u32 %v4072, 7
    %v4074 = vsub.s32 0, %v4073
    %v4075 = vrot.slane %v3742, %v4074
    %v4076 = vlaneseq
    %v4077 = vshrl.u32 %v4076, 7
    %v4078 = vsub.s32 0, %v4077
    %v4079 = vrot.slane %v3749, %v4078
    %v4080 = vlaneseq
    %v4081 = vshrl.u32 %v4080, 7
    %v4082 = vsub.s32 0, %v4081
    %v4083 = vrot.slane %v3750, %v4082
    %v4084 = vlaneseq
    %v4085 = vshrl.u32 %v4084, 7
    %v4086 = vsub.s32 0, %v4085
    %v4087 = vrot.slane %v3751, %v4086
    %v4088 = vlaneseq
    %v4089 = vshrl.u32 %v4088, 7
    %v4090 = vsub.s32 0, %v4089
    %v4091 = vrot.slane %v3766, %v4090
    %v4092 = vlaneseq
    %v4093 = vshrl.u32 %v4092, 7
    %v4094 = vsub.s32 0, %v4093
    %v4095 = vrot.slane %v3773, %v4094
    %v4096 = vlaneseq
    %v4097 = vshrl.u32 %v4096, 7
    %v4098 = vsub.s32 0, %v4097
    %v4099 = vrot.slane %v3774, %v4098
    %v4100 = vlaneseq
    %v4101 = vshrl.u32 %v4100, 7
    %v4102 = vsub.s32 0, %v4101
    %v4103 = vrot.slane %v3775, %v4102
    %v4104 = vlaneseq
    %v4105 = vshrl.u32 %v4104, 7
    %v4106 = vsub.s32 0, %v4105
    %v4107 = vrot.slane %v3790, %v4106
    %v4108 = vlaneseq
    %v4109 = vshrl.u32 %v4108, 7
    %v4110 = vsub.s32 0, %v4109
    %v4111 = vrot.slane %v3797, %v4110
    %v4112 = vlaneseq
    %v4113 = vshrl.u32 %v4112, 7
    %v4114 = vsub.s32 0, %v4113
    %v4115 = vrot.slane %v3798, %v4114
    %v4116 = vlaneseq
    %v4117 = vshrl.u32 %v4116, 7
    %v4118 = vsub.s32 0, %v4117
    %v4119 = vrot.slane %v3799, %v4118
    %v4120 = vlaneseq
    %v4121 = vshrl.u32 %v4120, 7
    %v4122 = vsub.s32 0, %v4121
    %v4123 = vrot.slane %v3814, %v4122
    %v4124 = vlaneseq
    %v4125 = vshrl.u32 %v4124, 7
    %v4126 = vsub.s32 0, %v4125
    %v4127 = vrot.slane %v3821, %v4126
    %v4128 = vlaneseq
    %v4129 = vshrl.u32 %v4128, 7
    %v4130 = vsub.s32 0, %v4129
    %v4131 = vrot.slane %v3822, %v4130
    %v4132 = vlaneseq
    %v4133 = vshrl.u32 %v4132, 7
    %v4134 = vsub.s32 0, %v4133
    %v4135 = vrot.slane %v3823, %v4134
    %v4136 = vlaneseq
    %v4137 = vshrl.u32 %v4136, 7
    %v4138 = vsub.s32 0, %v4137
    %v4139 = vrot.slane %v3838, %v4138
    %v4140 = vlaneseq
    %v4141 = vshrl.u32 %v4140, 7
    %v4142 = vsub.s32 0, %v4141
    %v4143 = vrot.slane %v3845, %v4142
    %v4144 = vlaneseq
    %v4145 = vshrl.u32 %v4144, 7
    %v4146 = vsub.s32 0, %v4145
    %v4147 = vrot.slane %v3846, %v4146
    %v4148 = vlaneseq
    %v4149 = vshrl.u32 %v4148, 7
    %v4150 = vsub.s32 0, %v4149
    %v4151 = vrot.slane %v3847, %v4150
    %v4152 = vlaneseq
    %v4153 = vshrl.u32 %v4152, 7
    %v4154 = vsub.s32 0, %v4153
    %v4155 = vrot.slane %v3862, %v4154
    %v4156 = vlaneseq
    %v4157 = vshrl.u32 %v4156, 7
    %v4158 = vsub.s32 0, %v4157
    %v4159 = vrot.slane %v3869, %v4158
    %v4160 = vlaneseq
    %v4161 = vshrl.u32 %v4160, 7
    %v4162 = vsub.s32 0, %v4161
    %v4163 = vrot.slane %v3870, %v4162
    %v4164 = vlaneseq
    %v4165 = vshrl.u32 %v4164, 7
    %v4166 = vsub.s32 0, %v4165
    %v4167 = vrot.slane %v3871, %v4166
    %v4168 = vlaneseq
    %v4169 = vshrl.u32 %v4168, 7
    %v4170 = vsub.s32 0, %v4169
    %v4171 = vrot.slane %v3886, %v4170
    %v4172 = vlaneseq
    %v4173 = vshrl.u32 %v4172, 7
    %v4174 = vsub.s32 0, %v4173
    %v4175 = vrot.slane %v3893, %v4174
    %v4176 = vlaneseq
    %v4177 = vshrl.u32 %v4176, 7
    %v4178 = vsub.s32 0, %v4177
    %v4179 = vrot.slane %v3894, %v4178
    %v4180 = vlaneseq
    %v4181 = vshrl.u32 %v4180, 7
    %v4182 = vsub.s32 0, %v4181
    %v4183 = vrot.slane %v3895, %v4182
    %v4184 = vlaneseq
    %v4185 = vshrl.u32 %v4184, 7
    %v4186 = vsub.s32 0, %v4185
    %v4187 = vrot.slane %v3910, %v4186
    %v4188 = vlaneseq
    %v4189 = vshrl.u32 %v4188, 7
    %v4190 = vsub.s32 0, %v4189
    %v4191 = vrot.slane %v3917, %v4190
    %v4192 = vlaneseq
    %v4193 = vshrl.u32 %v4192, 7
    %v4194 = vsub.s32 0, %v4193
    %v4195 = vrot.slane %v3918, %v4194
    %v4196 = vlaneseq
    %v4197 = vshrl.u32 %v4196, 7
    %v4198 = vsub.s32 0, %v4197
    %v4199 = vrot.slane %v3919, %v4198
    %v4200 = vlaneseq
    %v4201 = vshrl.u32 %v4200, 7
    %v4202 = vsub.s32 0, %v4201
    %v4203 = vrot.slane %v3934, %v4202
    %v4204 = vlaneseq
    %v4205 = vshrl.u32 %v4204, 7
    %v4206 = vsub.s32 0, %v4205
    %v4207 = vrot.slane %v3941, %v4206
    %v4208 = vlaneseq
    %v4209 = vshrl.u32 %v4208, 7
    %v4210 = vsub.s32 0, %v4209
    %v4211 = vrot.slane %v3942, %v4210
    %v4212 = vlaneseq
    %v4213 = vshrl.u32 %v4212, 7
    %v4214 = vsub.s32 0, %v4213
    %v4215 = vrot.slane %v3943, %v4214
    %v4216 = vlaneseq
    %v4217 = vshrl.u32 %v4216, 7
    %v4218 = vsub.s32 0, %v4217
    %v4219 = vrot.slane %v3958, %v4218
    %v4220 = vlaneseq
    %v4221 = vshrl.u32 %v4220, 7
    %v4222 = vsub.s32 0, %v4221
    %v4223 = vrot.slane %v3965, %v4222
    %v4224 = vlaneseq
    %v4225 = vshrl.u32 %v4224, 7
    %v4226 = vsub.s32 0, %v4225
    %v4227 = vrot.slane %v3966, %v4226
    %v4228 = vlaneseq
    %v4229 = vshrl.u32 %v4228, 7
    %v4230 = vsub.s32 0, %v4229
    %v4231 = vrot.slane %v3967, %v4230
    %v4232 = vlaneseq
    %v4233 = vshrl.u32 %v4232, 7
    %v4234 = vsub.s32 0, %v4233
    %v4235 = vrot.slane %v3982, %v4234
    %v4236 = vlaneseq
    %v4237 = vshrl.u32 %v4236, 7
    %v4238 = vsub.s32 0, %v4237
    %v4239 = vrot.slane %v3989, %v4238
    %v4240 = vlaneseq
    %v4241 = vshrl.u32 %v4240, 7
    %v4242 = vsub.s32 0, %v4241
    %v4243 = vrot.slane %v3990, %v4242
    %v4244 = vlaneseq
    %v4245 = vshrl.u32 %v4244, 7
    %v4246 = vsub.s32 0, %v4245
    %v4247 = vrot.slane %v3991, %v4246
    %v4312 = vmul.f32 %v3150, %v3995
    %v4313 = vmul.f32 %v3157, %v3999
    %v4314 = vmul.f32 %v3164, %v4003
    %v4315 = vmul.f32 %v3171, %v4007
    %v4316 = vmul.f32 %v3178, %v4011
    %v4317 = vmul.f32 %v3185, %v4015
    %v4318 = vmul.f32 %v3192, %v4019
    %v4319 = vmul.f32 %v3199, %v4023
    %v4320 = vmul.f32 %v3206, %v4027
    %v4321 = vmul.f32 %v3213, %v4031
    %v4322 = vmul.f32 %v3220, %v4035
    %v4323 = vmul.f32 %v3227, %v4039
    %v4324 = vmul.f32 %v3234, %v4043
    %v4325 = vmul.f32 %v3241, %v4047
    %v4326 = vmul.f32 %v3248, %v4051
    %v4327 = vmul.f32 %v3255, %v4055
    %v4328 = vmul.f32 %v3262, %v4059
    %v4329 = vmul.f32 %v3269, %v4063
    %v4330 = vmul.f32 %v3276, %v4067
    %v4331 = vmul.f32 %v3283, %v4071
    %v4332 = vmul.f32 %v3290, %v4075
    %v4333 = vmul.f32 %v3297, %v4079
    %v4334 = vmul.f32 %v3304, %v4083
    %v4335 = vmul.f32 %v3311, %v4087
    %v4336 = vmul.f32 %v3318, %v4091
    %v4337 = vmul.f32 %v3325, %v4095
    %v4338 = vmul.f32 %v3332, %v4099
    %v4339 = vmul.f32 %v3339, %v4103
    %v4340 = vmul.f32 %v3346, %v4107
    %v4341 = vmul.f32 %v3353, %v4111
    %v4342 = vmul.f32 %v3360, %v4115
    %v4343 = vmul.f32 %v3367, %v4119
    %v4344 = vmul.f32 %v3374, %v4123
    %v4345 = vmul.f32 %v3381, %v4127
    %v4346 = vmul.f32 %v3388, %v4131
    %v4347 = vmul.f32 %v3395, %v4135
    %v4348 = vmul.f32 %v3402, %v4139
    %v4349 = vmul.f32 %v3409, %v4143
    %v4350 = vmul.f32 %v3416, %v4147
    %v4351 = vmul.f32 %v3423, %v4151
    %v4352 = vmul.f32 %v3430, %v4155
    %v4353 = vmul.f32 %v3437, %v4159
    %v4354 = vmul.f32 %v3444, %v4163
    %v4355 = vmul.f32 %v3451, %v4167
    %v4356 = vmul.f32 %v3458, %v4171
    %v4357 = vmul.f32 %v3465, %v4175
    %v4358 = vmul.f32 %v3472, %v4179
    %v4359 = vmul.f32 %v3479, %v4183
    %v4360 = vmul.f32 %v3486, %v4187
    %v4361 = vmul.f32 %v3493, %v4191
    %v4362 = vmul.f32 %v3500, %v4195
    %v4363 = vmul.f32 %v3507, %v4199
    %v4364 = vmul.f32 %v3514, %v4203
    %v4365 = vmul.f32 %v3521, %v4207
    %v4366 = vmul.f32 %v3528, %v4211
    %v4367 = vmul.f32 %v3535, %v4215
    %v4368 = vmul.f32 %v3542, %v4219
    %v4369 = vmul.f32 %v3549, %v4223
    %v4370 = vmul.f32 %v3556, %v4227
    %v4371 = vmul.f32 %v3563, %v4231
    %v4372 = vmul.f32 %v3570, %v4235
    %v4373 = vmul.f32 %v3577, %v4239
    %v4374 = vmul.f32 %v3584, %v4243
    %v4375 = vmul.f32 %v3591, %v4247
    %v4376 = vsel %vm2903, %v4312, 0.0
    %v4377 = vsel %vm2903, %v4313, 0.0
    %v4378 = vadd.f32 %v4376, %v4377
    %v4379 = vsel %vm2903, %v4314, 0.0
    %v4380 = vadd.f32 %v4378, %v4379
    %v4381 = vsel %vm2903, %v4315, 0.0
    %v4382 = vadd.f32 %v4380, %v4381
    %v4383 = vsel %vm2903, %v4316, 0.0
    %v4384 = vsel %vm2903, %v4317, 0.0
    %v4385 = vadd.f32 %v4383, %v4384
    %v4386 = vsel %vm2903, %v4318, 0.0
    %v4387 = vadd.f32 %v4385, %v4386
    %v4388 = vsel %vm2903, %v4319, 0.0
    %v4389 = vadd.f32 %v4387, %v4388
    %v4390 = vsel %vm2903, %v4320, 0.0
    %v4391 = vsel %vm2903, %v4321, 0.0
    %v4392 = vadd.f32 %v4390, %v4391
    %v4393 = vsel %vm2903, %v4322, 0.0
    %v4394 = vadd.f32 %v4392, %v4393
    %v4395 = vsel %vm2903, %v4323, 0.0
    %v4396 = vadd.f32 %v4394, %v4395
    %v4397 = vsel %vm2903, %v4324, 0.0
    %v4398 = vsel %vm2903, %v4325, 0.0
    %v4399 = vadd.f32 %v4397, %v4398
    %v4400 = vsel %vm2903, %v4326, 0.0
    %v4401 = vadd.f32 %v4399, %v4400
    %v4402 = vsel %vm2903, %v4327, 0.0
    %v4403 = vadd.f32 %v4401, %v4402
    %v4404 = vsel %vm2903, %v4328, 0.0
    %v4405 = vsel %vm2903, %v4329, 0.0
    %v4406 = vadd.f32 %v4404, %v4405
    %v4407 = vsel %vm2903, %v4330, 0.0
    %v4408 = vadd.f32 %v4406, %v4407
    %v4409 = vsel %vm2903, %v4331, 0.0
    %v4410 = vadd.f32 %v4408, %v4409
    %v4411 = vsel %vm2903, %v4332, 0.0
    %v4412 = vsel %vm2903, %v4333, 0.0
    %v4413 = vadd.f32 %v4411, %v4412
    %v4414 = vsel %vm2903, %v4334, 0.0
    %v4415 = vadd.f32 %v4413, %v4414
    %v4416 = vsel %vm2903, %v4335, 0.0
    %v4417 = vadd.f32 %v4415, %v4416
    %v4418 = vsel %vm2903, %v4336, 0.0
    %v4419 = vsel %vm2903, %v4337, 0.0
    %v4420 = vadd.f32 %v4418, %v4419
    %v4421 = vsel %vm2903, %v4338, 0.0
    %v4422 = vadd.f32 %v4420, %v4421
    %v4423 = vsel %vm2903, %v4339, 0.0
    %v4424 = vadd.f32 %v4422, %v4423
    %v4425 = vsel %vm2903, %v4340, 0.0
    %v4426 = vsel %vm2903, %v4341, 0.0
    %v4427 = vadd.f32 %v4425, %v4426
    %v4428 = vsel %vm2903, %v4342, 0.0
    %v4429 = vadd.f32 %v4427, %v4428
    %v4430 = vsel %vm2903, %v4343, 0.0
    %v4431 = vadd.f32 %v4429, %v4430
    %v4432 = vsel %vm2903, %v4344, 0.0
    %v4433 = vsel %vm2903, %v4345, 0.0
    %v4434 = vadd.f32 %v4432, %v4433
    %v4435 = vsel %vm2903, %v4346, 0.0
    %v4436 = vadd.f32 %v4434, %v4435
    %v4437 = vsel %vm2903, %v4347, 0.0
    %v4438 = vadd.f32 %v4436, %v4437
    %v4439 = vsel %vm2903, %v4348, 0.0
    %v4440 = vsel %vm2903, %v4349, 0.0
    %v4441 = vadd.f32 %v4439, %v4440
    %v4442 = vsel %vm2903, %v4350, 0.0
    %v4443 = vadd.f32 %v4441, %v4442
    %v4444 = vsel %vm2903, %v4351, 0.0
    %v4445 = vadd.f32 %v4443, %v4444
    %v4446 = vsel %vm2903, %v4352, 0.0
    %v4447 = vsel %vm2903, %v4353, 0.0
    %v4448 = vadd.f32 %v4446, %v4447
    %v4449 = vsel %vm2903, %v4354, 0.0
    %v4450 = vadd.f32 %v4448, %v4449
    %v4451 = vsel %vm2903, %v4355, 0.0
    %v4452 = vadd.f32 %v4450, %v4451
    %v4453 = vsel %vm2903, %v4356, 0.0
    %v4454 = vsel %vm2903, %v4357, 0.0
    %v4455 = vadd.f32 %v4453, %v4454
    %v4456 = vsel %vm2903, %v4358, 0.0
    %v4457 = vadd.f32 %v4455, %v4456
    %v4458 = vsel %vm2903, %v4359, 0.0
    %v4459 = vadd.f32 %v4457, %v4458
    %v4460 = vsel %vm2903, %v4360, 0.0
    %v4461 = vsel %vm2903, %v4361, 0.0
    %v4462 = vadd.f32 %v4460, %v4461
    %v4463 = vsel %vm2903, %v4362, 0.0
    %v4464 = vadd.f32 %v4462, %v4463
    %v4465 = vsel %vm2903, %v4363, 0.0
    %v4466 = vadd.f32 %v4464, %v4465
    %v4467 = vsel %vm2903, %v4364, 0.0
    %v4468 = vsel %vm2903, %v4365, 0.0
    %v4469 = vadd.f32 %v4467, %v4468
    %v4470 = vsel %vm2903, %v4366, 0.0
    %v4471 = vadd.f32 %v4469, %v4470
    %v4472 = vsel %vm2903, %v4367, 0.0
    %v4473 = vadd.f32 %v4471, %v4472
    %v4474 = vsel %vm2903, %v4368, 0.0
    %v4475 = vsel %vm2903, %v4369, 0.0
    %v4476 = vadd.f32 %v4474, %v4475
    %v4477 = vsel %vm2903, %v4370, 0.0
    %v4478 = vadd.f32 %v4476, %v4477
    %v4479 = vsel %vm2903, %v4371, 0.0
    %v4480 = vadd.f32 %v4478, %v4479
    %v4481 = vsel %vm2903, %v4372, 0.0
    %v4482 = vsel %vm2903, %v4373, 0.0
    %v4483 = vadd.f32 %v4481, %v4482
    %v4484 = vsel %vm2903, %v4374, 0.0
    %v4485 = vadd.f32 %v4483, %v4484
    %v4486 = vsel %vm2903, %v4375, 0.0
    %v4487 = vadd.f32 %v4485, %v4486
    %v4488 = vcombine.low %v4382, %v4396
    %v4490 = vunpack.c.l.s4 1983009808
    %v4491 = vunpack.c.0.s8 %v4490
    %v4492 = vlaneseq
    %v4493 = vshrl.u32 %v4492, 7
    %v4494 = vsub.s32 %v4491, %v4493
    %v4495 = vrot.slane %v4488, %v4494
    %v4496 = vcombine.low %v4389, %v4403
    %v4498 = vunpack.c.l.s4 1983009808
    %v4499 = vunpack.c.0.s8 %v4498
    %v4500 = vlaneseq
    %v4501 = vshrl.u32 %v4500, 7
    %v4502 = vsub.s32 %v4499, %v4501
    %v4503 = vrot.slane %v4496, %v4502
    %v4504 = vcombine.low %v4410, %v4424
    %v4506 = vunpack.c.l.s4 1983009808
    %v4507 = vunpack.c.0.s8 %v4506
    %v4508 = vlaneseq
    %v4509 = vshrl.u32 %v4508, 7
    %v4510 = vsub.s32 %v4507, %v4509
    %v4511 = vrot.slane %v4504, %v4510
    %v4512 = vcombine.low %v4417, %v4431
    %v4514 = vunpack.c.l.s4 1983009808
    %v4515 = vunpack.c.0.s8 %v4514
    %v4516 = vlaneseq
    %v4517 = vshrl.u32 %v4516, 7
    %v4518 = vsub.s32 %v4515, %v4517
    %v4519 = vrot.slane %v4512, %v4518
    %v4520 = vcombine.low %v4495, %v4503
    %v4521 = vcombine.high %v4495, %v4503
    %v4523 = vunpack.c.l.s4 1934713408
    %v4524 = vunpack.c.0.s8 %v4523
    %v4525 = vlaneseq
    %v4526 = vshrl.u32 %v4525, 7
    %v4527 = vsub.s32 %v4524, %v4526
    %v4528 = vrot.slane %v4520, %v4527
    %v4530 = vunpack.c.l.s4 1934713408
    %v4531 = vunpack.c.0.s8 %v4530
    %v4532 = vlaneseq
    %v4533 = vshrl.u32 %v4532, 7
    %v4534 = vsub.s32 %v4531, %v4533
    %v4535 = vrot.slane %v4521, %v4534
    %v4536 = vcombine.low %v4511, %v4519
    %v4537 = vcombine.high %v4511, %v4519
    %v4539 = vunpack.c.l.s4 1934713408
    %v4540 = vunpack.c.0.s8 %v4539
    %v4541 = vlaneseq
    %v4542 = vshrl.u32 %v4541, 7
    %v4543 = vsub.s32 %v4540, %v4542
    %v4544 = vrot.slane %v4536, %v4543
    %v4546 = vunpack.c.l.s4 1934713408
    %v4547 = vunpack.c.0.s8 %v4546
    %v4548 = vlaneseq
    %v4549 = vshrl.u32 %v4548, 7
    %v4550 = vsub.s32 %v4547, %v4549
    %v4551 = vrot.slane %v4537, %v4550
    %v4552 = vcombine.low %v4528, %v4544
    %v4553 = vcombine.high %v4528, %v4544
    %v4554 = vcombine.low %v4535, %v4551
    %v4555 = vcombine.high %v4535, %v4551
    %v4556 = vcombine.low %v4438, %v4452
    %v4558 = vunpack.c.l.s4 1983009808
    %v4559 = vunpack.c.0.s8 %v4558
    %v4560 = vlaneseq
    %v4561 = vshrl.u32 %v4560, 7
    %v4562 = vsub.s32 %v4559, %v4561
    %v4563 = vrot.slane %v4556, %v4562
    %v4564 = vcombine.low %v4445, %v4459
    %v4566 = vunpack.c.l.s4 1983009808
    %v4567 = vunpack.c.0.s8 %v4566
    %v4568 = vlaneseq
    %v4569 = vshrl.u32 %v4568, 7
    %v4570 = vsub.s32 %v4567, %v4569
    %v4571 = vrot.slane %v4564, %v4570
    %v4572 = vcombine.low %v4466, %v4480
    %v4574 = vunpack.c.l.s4 1983009808
    %v4575 = vunpack.c.0.s8 %v4574
    %v4576 = vlaneseq
    %v4577 = vshrl.u32 %v4576, 7
    %v4578 = vsub.s32 %v4575, %v4577
    %v4579 = vrot.slane %v4572, %v4578
    %v4580 = vcombine.low %v4473, %v4487
    %v4582 = vunpack.c.l.s4 1983009808
    %v4583 = vunpack.c.0.s8 %v4582
    %v4584 = vlaneseq
    %v4585 = vshrl.u32 %v4584, 7
    %v4586 = vsub.s32 %v4583, %v4585
    %v4587 = vrot.slane %v4580, %v4586
    %v4588 = vcombine.low %v4563, %v4571
    %v4589 = vcombine.high %v4563, %v4571
    %v4591 = vunpack.c.l.s4 1934713408
    %v4592 = vunpack.c.0.s8 %v4591
    %v4593 = vlaneseq
    %v4594 = vshrl.u32 %v4593, 7
    %v4595 = vsub.s32 %v4592, %v4594
    %v4596 = vrot.slane %v4588, %v4595
    %v4598 = vunpack.c.l.s4 1934713408
    %v4599 = vunpack.c.0.s8 %v4598
    %v4600 = vlaneseq
    %v4601 = vshrl.u32 %v4600, 7
    %v4602 = vsub.s32 %v4599, %v4601
    %v4603 = vrot.slane %v4589, %v4602
    %v4604 = vcombine.low %v4579, %v4587
    %v4605 = vcombine.high %v4579, %v4587
    %v4607 = vunpack.c.l.s4 1934713408
    %v4608 = vunpack.c.0.s8 %v4607
    %v4609 = vlaneseq
    %v4610 = vshrl.u32 %v4609, 7
    %v4611 = vsub.s32 %v4608, %v4610
    %v4612 = vrot.slane %v4604, %v4611
    %v4614 = vunpack.c.l.s4 1934713408
    %v4615 = vunpack.c.0.s8 %v4614
    %v4616 = vlaneseq
    %v4617 = vshrl.u32 %v4616, 7
    %v4618 = vsub.s32 %v4615, %v4617
    %v4619 = vrot.slane %v4605, %v4618
    %v4620 = vcombine.low %v4596, %v4612
    %v4621 = vcombine.high %v4596, %v4612
    %v4622 = vcombine.low %v4603, %v4619
    %v4623 = vcombine.high %v4603, %v4619
    %4626 = vrot.lane.b32.xlu0 %v4553, 32
    %v4627 = vpop.permute.xlu0 %4626
    %4628 = vrot.lane.b32.xlu0 %v4621, 32
    %v4629 = vpop.permute.xlu0 %4628
    %4634 = vrot.lane.b32.xlu0 %v4554, 64
    %v4635 = vpop.permute.xlu0 %4634
    %4636 = vrot.lane.b32.xlu0 %v4622, 64
    %v4637 = vpop.permute.xlu0 %4636
    %4642 = vrot.lane.b32.xlu0 %v4555, 96
    %v4643 = vpop.permute.xlu0 %4642
    %4644 = vrot.lane.b32.xlu0 %v4623, 96
    %v4645 = vpop.permute.xlu0 %4644
    %vm4648 = vcmask 261120
    %v4649 = vsel %vm4648, %v4552, %v4627
    %v4650 = vsel %vm4648, %v4620, %v4629
    %vm4651 = vcmask 523264
    %v4652 = vsel %vm4651, %v4649, %v4635
    %v4653 = vsel %vm4651, %v4650, %v4637
    %vm4654 = vcmask 785408
    %v4655 = vsel %vm4654, %v4652, %v4643
    %v4656 = vsel %vm4654, %v4653, %v4645
    %v4657 = vld [vmem:[%s6] sm:$0xff]
    %v4658 = vld [vmem:[%s6 + $0x8] sm:$0xff]
    %v4659 = vld [vmem:[%s6 + $0x10] sm:$0xff]
    %v4660 = vld [vmem:[%s6 + $0x18] sm:$0xff]
    %v4661 = vld [vmem:[%s6 + $0x20] sm:$0xff]
    %v4662 = vld [vmem:[%s6 + $0x28] sm:$0xff]
    %v4663 = vld [vmem:[%s6 + $0x30] sm:$0xff]
    %v4664 = vld [vmem:[%s6 + $0x38] sm:$0xff]
    %v4665 = vld [vmem:[%s6 + $0x40] sm:$0xff]
    %v4666 = vld [vmem:[%s6 + $0x48] sm:$0xff]
    %v4667 = vld [vmem:[%s6 + $0x50] sm:$0xff]
    %v4668 = vld [vmem:[%s6 + $0x58] sm:$0xff]
    %v4669 = vld [vmem:[%s6 + $0x60] sm:$0xff]
    %v4670 = vld [vmem:[%s6 + $0x68] sm:$0xff]
    %v4671 = vld [vmem:[%s6 + $0x70] sm:$0xff]
    %v4672 = vld [vmem:[%s6 + $0x78] sm:$0xff]
    %v4673 = vld [vmem:[%s7] sm:$0x1]
    %v4675 = vlaneseq
    %v4676 = vshrl.u32 %v4675, 7
    %v4677 = vsub.s32 0, %v4676
    %v4678 = vrot.slane %v4673, %v4677
    %4680 = vmatprep.subr.mxu0 0.0
    %4681 = vmatpush1.msra.mxu0 %v4657
    %4682 = vmatprep.subr.mxu0 0.0
    %4683 = vmatpush1.msra.mxu0 %v4658
    %4684 = vmatprep.subr.mxu0 0.0
    %4685 = vmatpush1.msra.mxu0 %v4659
    %4686 = vmatprep.subr.mxu0 0.0
    %4687 = vmatpush1.msra.mxu0 %v4660
    %4688 = vmatprep.subr.mxu0 0.0
    %4689 = vmatpush1.msra.mxu0 %v4661
    %4690 = vmatprep.subr.mxu0 0.0
    %4691 = vmatpush1.msra.mxu0 %v4662
    %4692 = vmatprep.subr.mxu0 0.0
    %4693 = vmatpush1.msra.mxu0 %v4663
    %4694 = vmatprep.subr.mxu0 0.0
    %4695 = vmatpush1.msra.mxu0 %v4664
    %4696 = vmatprep.subr.mxu0 0.0
    %4697 = vmatpush1.msra.mxu0 %v4665
    %4698 = vmatprep.subr.mxu0 0.0
    %4699 = vmatpush1.msra.mxu0 %v4666
    %4700 = vmatprep.subr.mxu0 0.0
    %4701 = vmatpush1.msra.mxu0 %v4667
    %4702 = vmatprep.subr.mxu0 0.0
    %4703 = vmatpush1.msra.mxu0 %v4668
    %4704 = vmatprep.subr.mxu0 0.0
    %4705 = vmatpush1.msra.mxu0 %v4669
    %4706 = vmatprep.subr.mxu0 0.0
    %4707 = vmatpush1.msra.mxu0 %v4670
    %4708 = vmatprep.subr.mxu0 0.0
    %4709 = vmatpush1.msra.mxu0 %v4671
    %4710 = vmatprep.subr.mxu0 0.0
    %4711 = vmatpush1.msra.mxu0 %v4672
    %4712 = vmatprep.subr.mxu0 0.0
    %4713 = vmatpush1.msra.mxu0 0.0
    %4714 = vmatprep.subr.mxu0 0.0
    %4715 = vmatpush1.msra.mxu0 0.0
    %4716 = vmatprep.subr.mxu0 0.0
    %4717 = vmatpush1.msra.mxu0 0.0
    %4718 = vmatprep.subr.mxu0 0.0
    %4719 = vmatpush1.msra.mxu0 0.0
    %4720 = vmatprep.subr.mxu0 0.0
    %4721 = vmatpush1.msra.mxu0 0.0
    %4722 = vmatprep.subr.mxu0 0.0
    %4723 = vmatpush1.msra.mxu0 0.0
    %4724 = vmatprep.subr.mxu0 0.0
    %4725 = vmatpush1.msra.mxu0 0.0
    %4726 = vmatprep.subr.mxu0 0.0
    %4727 = vmatpush1.msra.mxu0 0.0
    %4728 = vmatprep.subr.mxu0 0.0
    %4729 = vmatpush1.msra.mxu0 0.0
    %4730 = vmatprep.subr.mxu0 0.0
    %4731 = vmatpush1.msra.mxu0 0.0
    %4732 = vmatprep.subr.mxu0 0.0
    %4733 = vmatpush1.msra.mxu0 0.0
    %4734 = vmatprep.subr.mxu0 0.0
    %4735 = vmatpush1.msra.mxu0 0.0
    %4736 = vmatprep.subr.mxu0 0.0
    %4737 = vmatpush1.msra.mxu0 0.0
    %4738 = vmatprep.subr.mxu0 0.0
    %4739 = vmatpush1.msra.mxu0 0.0
    %4740 = vmatprep.subr.mxu0 0.0
    %4741 = vmatpush1.msra.mxu0 0.0
    %4742 = vmatprep.subr.mxu0 0.0
    %4743 = vmatpush1.msra.mxu0 0.0
    %4744 = vmatprep.mubr.f32.mxu0 0.0
    %4745 = vmatmul.mubr.f32.gmra.mrb[0].mxu0 %v4655
    %v4746 = vpop.f32.mrb[0].mxu0
    %v4747 = vadd.f32 %v4678, %v4746
    %v4748 = vpop.f32.mrb[0].mxu0
    %4749 = vmatprep.mubr.f32.mxu0 0.0
    %4750 = vmatmul.mubr.f32.gmra.mrb[0].mxu0 %v4656
    %v4751 = vpop.f32.mrb[0].mxu0
    %v4752 = vadd.f32 %v4678, %v4751
    %v4753 = vpop.f32.mrb[0].mxu0
    %4754 = vdwg.mxu0
    %v4755 = vtanh.pop %v4747
    %v4756 = vtanh.pop %v4752
    %v4757 = vld [vmem:[%s8] sm:$0xff]
    %v4758 = vld [vmem:[%s8 + $0x8] sm:$0xff]
    %v4759 = vld [vmem:[%s8 + $0x10] sm:$0xff]
    %v4760 = vld [vmem:[%s8 + $0x18] sm:$0xff]
    %v4761 = vld [vmem:[%s9] sm:$0x1]
    %v4763 = vlaneseq
    %v4764 = vshrl.u32 %v4763, 7
    %v4765 = vsub.s32 0, %v4764
    %v4766 = vrot.slane %v4761, %v4765
    %v4769 = vsel %vm4648, %v4755, 0
    %v4772 = vsel %vm4648, %v4756, 0
    %4774 = vmatprep.subr.mxu0 0.0
    %4775 = vmatpush1.msra.mxu0 %v4757
    %4776 = vmatprep.subr.mxu0 0.0
    %4777 = vmatpush1.msra.mxu0 %v4758
    %4778 = vmatprep.subr.mxu0 0.0
    %4779 = vmatpush1.msra.mxu0 %v4759
    %4780 = vmatprep.subr.mxu0 0.0
    %4781 = vmatpush1.msra.mxu0 %v4760
    %4782 = vmatprep.subr.mxu0 0.0
    %4783 = vmatpush1.msra.mxu0 0.0
    %4784 = vmatprep.subr.mxu0 0.0
    %4785 = vmatpush1.msra.mxu0 0.0
    %4786 = vmatprep.subr.mxu0 0.0
    %4787 = vmatpush1.msra.mxu0 0.0
    %4788 = vmatprep.subr.mxu0 0.0
    %4789 = vmatpush1.msra.mxu0 0.0
    %4790 = vmatprep.subr.mxu0 0.0
    %4791 = vmatpush1.msra.mxu0 0.0
    %4792 = vmatprep.subr.mxu0 0.0
    %4793 = vmatpush1.msra.mxu0 0.0
    %4794 = vmatprep.subr.mxu0 0.0
    %4795 = vmatpush1.msra.mxu0 0.0
    %4796 = vmatprep.subr.mxu0 0.0
    %4797 = vmatpush1.msra.mxu0 0.0
    %4798 = vmatprep.subr.mxu0 0.0
    %4799 = vmatpush1.msra.mxu0 0.0
    %4800 = vmatprep.subr.mxu0 0.0
    %4801 = vmatpush1.msra.mxu0 0.0
    %4802 = vmatprep.subr.mxu0 0.0
    %4803 = vmatpush1.msra.mxu0 0.0
    %4804 = vmatprep.subr.mxu0 0.0
    %4805 = vmatpush1.msra.mxu0 0.0
    %4806 = vmatprep.subr.mxu0 0.0
    %4807 = vmatpush1.msra.mxu0 0.0
    %4808 = vmatprep.subr.mxu0 0.0
    %4809 = vmatpush1.msra.mxu0 0.0
    %4810 = vmatprep.subr.mxu0 0.0
    %4811 = vmatpush1.msra.mxu0 0.0
    %4812 = vmatprep.subr.mxu0 0.0
    %4813 = vmatpush1.msra.mxu0 0.0
    %4814 = vmatprep.subr.mxu0 0.0
    %4815 = vmatpush1.msra.mxu0 0.0
    %4816 = vmatprep.subr.mxu0 0.0
    %4817 = vmatpush1.msra.mxu0 0.0
    %4818 = vmatprep.subr.mxu0 0.0
    %4819 = vmatpush1.msra.mxu0 0.0
    %4820 = vmatprep.subr.mxu0 0.0
    %4821 = vmatpush1.msra.mxu0 0.0
    %4822 = vmatprep.subr.mxu0 0.0
    %4823 = vmatpush1.msra.mxu0 0.0
    %4824 = vmatprep.subr.mxu0 0.0
    %4825 = vmatpush1.msra.mxu0 0.0
    %4826 = vmatprep.subr.mxu0 0.0
    %4827 = vmatpush1.msra.mxu0 0.0
    %4828 = vmatprep.subr.mxu0 0.0
    %4829 = vmatpush1.msra.mxu0 0.0
    %4830 = vmatprep.subr.mxu0 0.0
    %4831 = vmatpush1.msra.mxu0 0.0
    %4832 = vmatprep.subr.mxu0 0.0
    %4833 = vmatpush1.msra.mxu0 0.0
    %4834 = vmatprep.subr.mxu0 0.0
    %4835 = vmatpush1.msra.mxu0 0.0
    %4836 = vmatprep.subr.mxu0 0.0
    %4837 = vmatpush1.msra.mxu0 0.0
    %4838 = vmatprep.mubr.f32.mxu0 0.0
    %4839 = vmatmul.mubr.f32.gmra.mrb[0].mxu0 %v4769
    %v4840 = vpop.f32.mrb[0].mxu0
    %v4841 = vadd.f32 %v4766, %v4840
    %v4842 = vpop.f32.mrb[0].mxu0
    %4843 = vmatprep.mubr.f32.mxu0 0.0
    %4844 = vmatmul.mubr.f32.gmra.mrb[0].mxu0 %v4772
    %v4845 = vpop.f32.mrb[0].mxu0
    %v4846 = vadd.f32 %v4766, %v4845
    %v4847 = vpop.f32.mrb[0].mxu0
    %4848 = vdwg.mxu0
    %v4849 = vtanh.pop %v4841
    %v4850 = vtanh.pop %v4846
    %v4851 = vld [vmem:[%s10] sm:$0x1]
    %v4853 = vlaneseq
    %v4854 = vshrl.u32 %v4853, 7
    %v4855 = vsub.s32 0, %v4854
    %v4856 = vrot.slane %v4851, %v4855
    %v4858 = vmul.f32 %v4849, %v4856
    %v4859 = vmul.f32 %v4850, %v4856
    %v4860 = vsel %vm4648, %v4858, 0.0
    %4861 = vadd.xlane.f32.xlu0 %v4860
    %v4862 = vpop.xlane.xlu0 %4861
    %v4863 = vsel %vm4648, %v4859, 0.0
    %4864 = vadd.xlane.f32.xlu0 %v4863
    %v4865 = vpop.xlane.xlu0 %4864
    %v4866 = vld [vmem:[#allocation2] sm:$0x1]
    %v4868 = vlaneseq
    %v4869 = vshrl.u32 %v4868, 7
    %v4870 = vsub.s32 0, %v4869
    %v4871 = vrot.slane %v4866, %v4870
    %4872 = vset.pattern.permute.xlu0 0
    %4873 = vperm.xlu0 %4872, %v4871
    %v4874 = vpop.permute.xlu0 %4873
    %v4876 = vadd.f32 %v4862, %v4874
    %v4877 = vadd.f32 %v4865, %v4874
    %v4880 = vlaneseq
    %v4881 = vand.u32 %v4880, 127
    %v4882 = vlaneseq
    %v4883 = vshrl.u32 %v4882, 7
    %v4884 = vsub.s32 %v4881, %v4883
    %v4885 = vrot.slane %v4876, %v4884
    %v4886 = vlaneseq
    %v4887 = vshrl.u32 %v4886, 7
    %v4888 = vsub.s32 %v4881, %v4887
    %v4889 = vrot.slane %v4877, %v4888
    %vm4890 = vcmask 1041409
    %v4891 = vsel %vm4890, %v4889, %v4885
    %vm4893 = vcmask 58368
    %4894 = vst.msk [vmem:[#allocation3] sm:$0x3] %vm4893, %v4891
    %v4895 = vsel %vm4893, %v4891, 0.0
    %4896 = vadd.xlane.f32.xlu0 %v4895
    %v4897 = vpop.xlane.xlu0 %4896
    %vm4898 = vcmask 1024
    %4899 = vst.msk [vmem:[%s13] sm:$0x3] %vm4898, %v4897
    // Predicated region
    $region50: #{dp_forward.1} parent=1 // pred_check
      _
    $region51: #{dp_forward.1} parent=1 // pred_check_branch
      %4901 = sbr.rel (0) target = $region53
    $region52: #{dp_forward.1} parent=1 // pred_region
      %s4903 = ssub.s32 32, 32
      %4904 = vsyncadd [#allocation4], %s4903
      %s4906 = sshll.u32 [#allocation3], 4
      %s4907 = int_to_ptr.vmem [resolvable:$true] %s4906
      %4909 = dma.vmem_to_hbm [thread:$0]  %s4907, 32, %s12, [#allocation4]
    $region53: #{dp_forward.1} parent=1 // pred_fallthru
      _
    // Predicated region
    $region54: #{dp_forward.1} parent=1 // pred_check
      _
    $region55: #{dp_forward.1} parent=1 // pred_check_branch
      %4911 = sbr.rel (0) target = $region57
    $region56: #{dp_forward.1} parent=1 // pred_region
      _
    $region57: #{dp_forward.1} parent=1 // pred_fallthru
      _
    // Predicated region
    $region58: #{dp_forward.1} parent=1 // pred_check
      _
    $region59: #{dp_forward.1} parent=1 // pred_check_branch
      %4913 = sbr.rel (0) target = $region61
    $region60: #{dp_forward.1} parent=1 // pred_region
      %4914 = dma.done [#allocation4], 32
    $region61: #{dp_forward.1} parent=1 // pred_fallthru
      _
    // Predicated region
    $region62: #{dp_forward.1} parent=1 // pred_check
      _
    $region63: #{dp_forward.1} parent=1 // pred_check_branch
      %4916 = sbr.rel (0) target = $region65
    $region64: #{dp_forward.1} parent=1 // pred_region
      _
    $region65: #{dp_forward.1} parent=1 // pred_fallthru
      _
    %4917 = vsyncpa [#allocation4], 1

</llo_original>
